<compile_context>
chip_gen: v7x
topology: tpu7x:2x2x1
jax: 0.10.0
libtpu: 0.0.40
codegen_flags: <defaults>
</compile_context>

<pallas_src>
import functools

import jax
import jax.numpy as jnp
from jax.experimental import pallas as pl
from jax.experimental.pallas import tpu as pltpu

LANE = 128
_TM, _TN, _TK = 256, 128, 128            # GEMM tiles (lane-dense, MXU friendly)
_VMEM_LIMIT = 32 * 1024 * 1024           # explicit scoped-VMEM budget (v7x-safe)


def _ceil_to(x, m):
    return -(-x // m) * m


def _pad2(x, rows, cols):
    return jnp.pad(x, ((0, rows - x.shape[0]), (0, cols - x.shape[1])))


def _cparams(sem):
    return pltpu.CompilerParams(dimension_semantics=sem,
                                vmem_limit_bytes=_VMEM_LIMIT)


# ----------------------------------------------------------------------------
# Kernel 1: generic tiled GEMM + bias (+ ReLU)   -- conv1 / strided-conv2 path
# ----------------------------------------------------------------------------
def _gemm_bias_act_kernel(x_ref, w_ref, b_ref, o_ref, acc_ref, *, relu):
    @pl.when(pl.program_id(2) == 0)
    def _():
        acc_ref[...] = jnp.zeros_like(acc_ref)

    acc_ref[...] += jnp.dot(x_ref[...], w_ref[...],
                            preferred_element_type=jnp.float32)

    @pl.when(pl.program_id(2) == pl.num_programs(2) - 1)
    def _():
        out = acc_ref[...] + b_ref[...]
        if relu:
            out = jnp.maximum(out, 0.0)
        o_ref[...] = out.astype(o_ref.dtype)


def matmul_bias_act(x, w, bias, *, relu, out_dtype):
    """act((x @ w) + bias) with bf16 MXU matmul and f32 accumulation."""
    M, K = x.shape
    N = w.shape[1]
    Mp, Kp, Np = _ceil_to(M, _TM), _ceil_to(K, _TK), _ceil_to(N, _TN)
    xp = _pad2(x.astype(jnp.bfloat16), Mp, Kp)
    wp = _pad2(w.astype(jnp.bfloat16), Kp, Np)
    bp = _pad2(bias.reshape(1, N).astype(jnp.float32), 1, Np)

    out = pl.pallas_call(
        functools.partial(_gemm_bias_act_kernel, relu=relu),
        out_shape=jax.ShapeDtypeStruct((Mp, Np), out_dtype),
        grid_spec=pltpu.PrefetchScalarGridSpec(
            num_scalar_prefetch=0,
            grid=(Mp // _TM, Np // _TN, Kp // _TK),
            in_specs=[pl.BlockSpec((_TM, _TK), lambda i, j, k: (i, k)),
                      pl.BlockSpec((_TK, _TN), lambda i, j, k: (k, j)),
                      pl.BlockSpec((1, _TN), lambda i, j, k: (0, j))],
            out_specs=pl.BlockSpec((_TM, _TN), lambda i, j, k: (i, j)),
            scratch_shapes=[pltpu.VMEM((_TM, _TN), jnp.float32)]),
        compiler_params=_cparams(("parallel", "parallel", "arbitrary")),
    )(xp, wp, bp)
    return out[:M, :N]


# ----------------------------------------------------------------------------
# Kernel 2: fused 3x3 conv (stride 1, pad 1) + folded BN + ReLU
#           (dy taps accumulated in-kernel; only a 3x W-expansion in HBM)
# ----------------------------------------------------------------------------
def _conv3x3_dy_kernel(x_ref, w_ref, b_ref, o_ref):
    # x_ref: (1, H+2, W, 3*Cp) bf16   w_ref: (3, 3*Cp, tf) bf16
    # b_ref: (1, tf) f32              o_ref: (1, H, W, tf)
    _, ho, wo, tf = o_ref.shape
    c3 = x_ref.shape[3]
    acc = jnp.zeros((ho * wo, tf), jnp.float32)
    for dy in range(3):                 # unrolled: 3 accumulated MXU matmuls
        win = x_ref[0, dy:dy + ho, :, :].reshape(ho * wo, c3)
        acc = acc + jnp.dot(win, w_ref[dy],
                            preferred_element_type=jnp.float32)
    out = jnp.maximum(acc + b_ref[...], 0.0)
    o_ref[...] = out.reshape(1, ho, wo, tf).astype(o_ref.dtype)


def conv3x3_bn_relu_s1(x_nhwc, w2, bias):
    """3x3 conv, stride 1, padding 1, folded-BN bias, ReLU.  Returns bf16."""
    N, H, W, C = x_nhwc.shape
    F = w2.shape[3]
    Cp, Fp = _ceil_to(C, LANE), _ceil_to(F, LANE)
    Hp = H + 2

    xpad = jnp.pad(x_nhwc.astype(jnp.bfloat16),
                   ((0, 0), (1, 1), (1, 1), (0, Cp - C)))
    # im2col along W only (3x, not 9x); the dy taps stay fused in the kernel.
    cols = jnp.concatenate([xpad[:, :, dx:dx + W, :] for dx in range(3)],
                           axis=-1)                       # (N, H+2, W, 3*Cp)
    wk = jnp.pad(w2.astype(jnp.bfloat16),
                 ((0, 0), (0, 0), (0, Cp - C), (0, Fp - F)))
    wk = wk.reshape(3, 3 * Cp, Fp)                        # per-dy, dx-major
    bk = _pad2(bias.reshape(1, F).astype(jnp.float32), 1, Fp)

    out = pl.pallas_call(
        _conv3x3_dy_kernel,
        out_shape=jax.ShapeDtypeStruct((N, H, W, Fp), jnp.bfloat16),
        grid_spec=pltpu.PrefetchScalarGridSpec(
            num_scalar_prefetch=0,
            grid=(N, Fp // _TN),
            in_specs=[
                pl.BlockSpec((1, Hp, W, 3 * Cp), lambda n, f: (n, 0, 0, 0)),
                pl.BlockSpec((3, 3 * Cp, _TN), lambda n, f: (0, 0, f)),
                pl.BlockSpec((1, _TN), lambda n, f: (0, f))],
            out_specs=pl.BlockSpec((1, H, W, _TN), lambda n, f: (n, 0, 0, f))),
        compiler_params=_cparams(("parallel", "parallel")),
    )(cols, wk, bk)
    return out[..., :F]


# ----------------------------------------------------------------------------
# Kernel 3: fused conv3 (1x1) + BN3 + (downsample conv+BN | identity residual)
#           + residual add + ReLU  (preact written only when requested)
# ----------------------------------------------------------------------------
def _conv3_ds_kernel(a_ref, w3_ref, x_ref, wd_ref, b_ref, *out_refs,
                     with_preact):
    pre = jnp.dot(a_ref[...], w3_ref[...], preferred_element_type=jnp.float32)
    pre = pre + jnp.dot(x_ref[...], wd_ref[...],
                        preferred_element_type=jnp.float32)
    pre = pre + b_ref[...]
    out_refs[0][...] = jnp.maximum(pre, 0.0).astype(out_refs[0].dtype)
    if with_preact:
        out_refs[1][...] = pre.astype(out_refs[1].dtype)


def _conv3_id_kernel(a_ref, w3_ref, r_ref, b_ref, *out_refs, with_preact):
    pre = jnp.dot(a_ref[...], w3_ref[...], preferred_element_type=jnp.float32)
    pre = pre + b_ref[...] + r_ref[...]
    out_refs[0][...] = jnp.maximum(pre, 0.0).astype(out_refs[0].dtype)
    if with_preact:
        out_refs[1][...] = pre.astype(out_refs[1].dtype)


def conv3_residual(a, w3, bias, *, x_res=None, wd=None, res=None,
                   with_preact=False):
    """out = relu(a@w3 + bias + (x_res@wd | res)); optionally also preact."""
    M, K1 = a.shape
    N = w3.shape[1]
    Mp, K1p, Np = _ceil_to(M, _TM), _ceil_to(K1, LANE), _ceil_to(N, LANE)
    ap = _pad2(a.astype(jnp.bfloat16), Mp, K1p)
    w3p = _pad2(w3.astype(jnp.bfloat16), K1p, Np)
    bp = _pad2(bias.reshape(1, N).astype(jnp.float32), 1, Np)

    grid = (Mp // _TM, Np // _TN)
    if with_preact:
        out_shape = (jax.ShapeDtypeStruct((Mp, Np), jnp.float32),
                     jax.ShapeDtypeStruct((Mp, Np), jnp.float32))
        out_specs = (pl.BlockSpec((_TM, _TN), lambda i, j: (i, j)),
                     pl.BlockSpec((_TM, _TN), lambda i, j: (i, j)))
    else:
        out_shape = jax.ShapeDtypeStruct((Mp, Np), jnp.float32)
        out_specs = pl.BlockSpec((_TM, _TN), lambda i, j: (i, j))

    a_spec = pl.BlockSpec((_TM, K1p), lambda i, j: (i, 0))
    w3_spec = pl.BlockSpec((K1p, _TN), lambda i, j: (0, j))
    b_spec = pl.BlockSpec((1, _TN), lambda i, j: (0, j))

    if wd is not None:
        K2 = x_res.shape[1]
        K2p = _ceil_to(K2, LANE)
        xp = _pad2(x_res.astype(jnp.bfloat16), Mp, K2p)
        wdp = _pad2(wd.astype(jnp.bfloat16), K2p, Np)
        outs = pl.pallas_call(
            functools.partial(_conv3_ds_kernel, with_preact=with_preact),
            out_shape=out_shape,
            grid_spec=pltpu.PrefetchScalarGridSpec(
                num_scalar_prefetch=0, grid=grid,
                in_specs=[a_spec, w3_spec,
                          pl.BlockSpec((_TM, K2p), lambda i, j: (i, 0)),
                          pl.BlockSpec((K2p, _TN), lambda i, j: (0, j)),
                          b_spec],
                out_specs=out_specs),
            compiler_params=_cparams(("parallel", "parallel")),
        )(ap, w3p, xp, wdp, bp)
    else:
        rp = _pad2(res.astype(jnp.float32), Mp, Np)
        outs = pl.pallas_call(
            functools.partial(_conv3_id_kernel, with_preact=with_preact),
            out_shape=out_shape,
            grid_spec=pltpu.PrefetchScalarGridSpec(
                num_scalar_prefetch=0, grid=grid,
                in_specs=[a_spec, w3_spec,
                          pl.BlockSpec((_TM, _TN), lambda i, j: (i, j)),
                          b_spec],
                out_specs=out_specs),
            compiler_params=_cparams(("parallel", "parallel")),
        )(ap, w3p, rp, bp)

    if with_preact:
        out, pre = outs
        return out[:M, :N], pre[:M, :N]
    return outs[:M, :N]


# ----------------------------------------------------------------------------
# JAX glue
# ----------------------------------------------------------------------------
def extract_patches_3x3(x_nhwc, stride):
    """Full im2col (only used for the stride>1 fallback and the reference)."""
    N, H, W, C = x_nhwc.shape
    xp = jnp.pad(x_nhwc, ((0, 0), (1, 1), (1, 1), (0, 0)))
    Ho = (H + 2 - 3) // stride + 1
    Wo = (W + 2 - 3) // stride + 1
    cols = []
    for dy in range(3):
        for dx in range(3):
            cols.append(xp[:, dy:dy + stride * (Ho - 1) + 1:stride,
                           dx:dx + stride * (Wo - 1) + 1:stride, :])
    return jnp.concatenate(cols, axis=-1), Ho, Wo


def make_params(key, in_planes, planes, stride):
    """Synthetic parameters with the BatchNorm scale pre-folded into weights."""
    exp = 4
    ks = jax.random.split(key, 8)

    def wgt(k, shape, fan_in):
        return jax.random.normal(k, shape, jnp.float32) / jnp.sqrt(fan_in)

    def bn(k, c):
        k1, k2, k3 = jax.random.split(k, 3)
        gamma = 1.0 + 0.1 * jax.random.normal(k1, (c,), jnp.float32)
        beta = 0.1 * jax.random.normal(k2, (c,), jnp.float32)
        mean = 0.1 * jax.random.normal(k3, (c,), jnp.float32)
        var = jnp.ones((c,), jnp.float32)
        scale = gamma / jnp.sqrt(var + 1e-5)
        bias = beta - mean * scale
        return scale, bias

    p = {}
    w1 = wgt(ks[0], (in_planes, planes), in_planes)
    s1, p["b1"] = bn(ks[1], planes)
    p["w1"] = w1 * s1
    w2 = wgt(ks[2], (3, 3, planes, planes), 9 * planes)
    s2, p["b2"] = bn(ks[3], planes)
    p["w2"] = w2 * s2
    w3 = wgt(ks[4], (planes, exp * planes), planes)
    s3, p["b3"] = bn(ks[5], exp * planes)
    p["w3"] = w3 * s3
    if stride != 1 or in_planes != exp * planes:
        wd = wgt(ks[6], (in_planes, exp * planes), in_planes)
        sd, p["bd"] = bn(ks[7], exp * planes)
        p["wd"] = wd * sd
        p["b3d"] = p["b3"] + p["bd"]          # combined epilogue bias
    return p


def bottleneck_forward(x_nchw, params, *, stride=1, is_last=False):
    """Pallas-backed forward of the Bottleneck block.  NCHW in / NCHW out."""
    N, Cin, H, W = x_nchw.shape
    P = params["w1"].shape[1]
    F = 4 * P
    x = jnp.transpose(x_nchw, (0, 2, 3, 1))                     # NHWC internal

    # conv1 (1x1) + bn1 + relu -------------------------------------------------
    o1 = matmul_bias_act(x.reshape(N * H * W, Cin), params["w1"], params["b1"],
                         relu=True, out_dtype=jnp.bfloat16)
    o1 = o1.reshape(N, H, W, P)

    # conv2 (3x3, pad=1) + bn2 + relu ------------------------------------------
    if stride == 1:
        o2 = conv3x3_bn_relu_s1(o1, params["w2"], params["b2"])
        Ho, Wo = H, W
    else:
        # TODO(synk): stride>1 3x3 conv falls back to im2col + tiled GEMM (the
        #             fully fused path above covers the common stride-1 case).
        patches, Ho, Wo = extract_patches_3x3(o1, stride)
        o2 = matmul_bias_act(patches.reshape(N * Ho * Wo, 9 * P),
                             params["w2"].reshape(9 * P, P), params["b2"],
                             relu=True, out_dtype=jnp.bfloat16)
        o2 = o2.reshape(N, Ho, Wo, P)

    # conv3 (1x1) + bn3 + shortcut + relu (fused, preact only if is_last) ------
    a2d = o2.reshape(N * Ho * Wo, P)
    if "wd" in params:
        xs = x[:, ::stride, ::stride, :].reshape(N * Ho * Wo, Cin)
        outs = conv3_residual(a2d, params["w3"], params["b3d"],
                              x_res=xs, wd=params["wd"], with_preact=is_last)
    else:
        res = x.reshape(N * Ho * Wo, Cin)           # identity: Cin == 4*planes
        outs = conv3_residual(a2d, params["w3"], params["b3"],
                              res=res, with_preact=is_last)

    if is_last:
        out2d, pre2d = outs
        out = jnp.transpose(out2d.reshape(N, Ho, Wo, F), (0, 3, 1, 2))
        pre = jnp.transpose(pre2d.reshape(N, Ho, Wo, F), (0, 3, 1, 2))
        return out, pre
    out = jnp.transpose(outs.reshape(N, Ho, Wo, F), (0, 3, 1, 2))
    return out


# ----------------------------------------------------------------------------
# Pure-JAX reference (same folded params and bf16 matmul numerics)
# ----------------------------------------------------------------------------
def bottleneck_reference(x_nchw, params, *, stride=1):
    N, Cin, H, W = x_nchw.shape
    P = params["w1"].shape[1]
    x = jnp.transpose(x_nchw, (0, 2, 3, 1))

    def mm(a, w):
        return jnp.dot(a.astype(jnp.bfloat16), w.astype(jnp.bfloat16),
                       preferred_element_type=jnp.float32)

    o1 = jnp.maximum(mm(x.reshape(-1, Cin), params["w1"]) + params["b1"], 0.0)
    o1 = o1.reshape(N, H, W, P).astype(jnp.bfloat16)
    patches, Ho, Wo = extract_patches_3x3(o1, stride)
    o2 = jnp.maximum(mm(patches.reshape(-1, 9 * P),
                        params["w2"].reshape(9 * P, P)) + params["b2"], 0.0)
    o2 = o2.astype(jnp.bfloat16)
    pre = mm(o2, params["w3"]) + params["b3"]
    if "wd" in params:
        xs = x[:, ::stride, ::stride, :].reshape(-1, Cin)
        pre = pre + mm(xs, params["wd"]) + params["bd"]
    else:
        pre = pre + x.reshape(-1, Cin)
    out = jnp.maximum(pre, 0.0)
    out = jnp.transpose(out.reshape(N, Ho, Wo, 4 * P), (0, 3, 1, 2))
    pre = jnp.transpose(pre.reshape(N, Ho, Wo, 4 * P), (0, 3, 1, 2))
    return out, pre


# ----------------------------------------------------------------------------
if __name__ == "__main__":
    key = jax.random.PRNGKey(0)
    kx, kp, kx2, kp2 = jax.random.split(key, 4)

    fwd = jax.jit(bottleneck_forward, static_argnames=("stride", "is_last"))
    TOL = dict(rtol=1e-2, atol=1e-2)

    # Case 1: downsample branch active, stride=1 (fused 3x3 + fused conv3/ds).
    in_planes, planes = 8, 4
    x = jax.random.normal(kx, (2, in_planes, 16, 16), jnp.float32)
    p1 = make_params(kp, in_planes, planes, stride=1)

    out, pre = fwd(x, p1, stride=1, is_last=True)
    out = jax.block_until_ready(out)
    pre = jax.block_until_ready(pre)
    out_ref, pre_ref = bottleneck_reference(x, p1, stride=1)
    assert out.shape == (2, 4 * planes, 16, 16), out.shape
    assert jnp.allclose(out, out_ref, **TOL)
    assert jnp.allclose(pre, pre_ref, **TOL)

    # Case 2: single-output (is_last=False) kernel variant.
    out_single = jax.block_until_ready(fwd(x, p1, stride=1, is_last=False))
    assert jnp.allclose(out_single, out_ref, **TOL)

    # Case 3: stride=2 (im2col fallback for the strided 3x3, downsample active).
    p2 = make_params(kp, in_planes, planes, stride=2)
    out2, pre2 = fwd(x, p2, stride=2, is_last=True)
    out2 = jax.block_until_ready(out2)
    out2_ref, pre2_ref = bottleneck_reference(x, p2, stride=2)
    assert out2.shape == (2, 4 * planes, 8, 8), out2.shape
    assert jnp.allclose(out2, out2_ref, **TOL)
    assert jnp.allclose(pre2, pre2_ref, **TOL)

    # Case 4: identity shortcut (in_planes == 4*planes, stride=1).
    x_id = jax.random.normal(kx2, (2, 4 * planes, 16, 16), jnp.float32)
    p_id = make_params(kp2, 4 * planes, planes, stride=1)
    out3, pre3 = fwd(x_id, p_id, stride=1, is_last=True)
    out3 = jax.block_until_ready(out3)
    out3_ref, pre3_ref = bottleneck_reference(x_id, p_id, stride=1)
    assert out3.shape == (2, 4 * planes, 16, 16), out3.shape
    assert jnp.allclose(out3, out3_ref, **TOL)
    assert jnp.allclose(pre3, pre3_ref, **TOL)

    print("KERNEL_OK")
</pallas_src>

<mosaic_0001>
module attributes {stable_mosaic.version = 11 : i64} {
  func.func @_gemm_bias_act_kernel(%arg0: i32, %arg1: i32, %arg2: i32, %arg3: memref<256x128xbf16, #tpu.memory_space<vmem>>, %arg4: memref<128x128xbf16, #tpu.memory_space<vmem>>, %arg5: memref<1x128xf32, #tpu.memory_space<vmem>>, %arg6: memref<256x128xbf16, #tpu.memory_space<vmem>>, %arg7: memref<256x128xf32, #tpu.memory_space<vmem>>) attributes {dimension_semantics = [#tpu.dimension_semantics<parallel>, #tpu.dimension_semantics<parallel>, #tpu.dimension_semantics<arbitrary>], iteration_bounds = array<i64: 2, 1, 1>, scalar_prefetch = 0 : i64, scratch_operands = 1 : i64, tpu.core_type = #tpu.core_type<tc>, window_params = [{transform_indices = @transform_0, window_bounds = array<i64: 256, 128>}, {transform_indices = @transform_1, window_bounds = array<i64: 128, 128>}, {transform_indices = @transform_2, window_bounds = array<i64: 1, 128>}, {transform_indices = @transform_3, window_bounds = array<i64: 256, 128>}]} {
    %c0_i32 = arith.constant 0 : i32
    %0 = arith.cmpi eq, %arg2, %c0_i32 : i32
    %1 = arith.extui %0 : i1 to i32
    %c0_i32_0 = arith.constant 0 : i32
    %2 = arith.cmpi ne, %1, %c0_i32_0 : i32
    scf.if %2 {
      %cst_10 = arith.constant 0.000000e+00 : f32
      %12 = vector.broadcast %cst_10 : f32 to vector<256x128xf32>
      %c0_11 = arith.constant 0 : index
      %c0_12 = arith.constant 0 : index
      %13 = vector.load %arg7[%c0_11, %c0_12] : memref<256x128xf32, #tpu.memory_space<vmem>>, vector<256x128xf32>
      tpu.vector_store %arg7[%c0_11, %c0_12], %12 {strides = array<i32>} : memref<256x128xf32, #tpu.memory_space<vmem>>, vector<256x128xf32>,
    } else {
    }
    %c0 = arith.constant 0 : index
    %c0_1 = arith.constant 0 : index
    %3 = vector.load %arg7[%c0, %c0_1] : memref<256x128xf32, #tpu.memory_space<vmem>>, vector<256x128xf32>
    %c0_2 = arith.constant 0 : index
    %c0_3 = arith.constant 0 : index
    %4 = vector.load %arg3[%c0_2, %c0_3] : memref<256x128xbf16, #tpu.memory_space<vmem>>, vector<256x128xbf16>
    %c0_4 = arith.constant 0 : index
    %c0_5 = arith.constant 0 : index
    %5 = vector.load %arg4[%c0_4, %c0_5] : memref<128x128xbf16, #tpu.memory_space<vmem>>, vector<128x128xbf16>
    %cst = arith.constant dense<0.000000e+00> : vector<256x128xf32>
    %6 = tpu.matmul %4, %5, %cst {dimension_numbers = #tpu.dot_dimension_numbers<[1], [0], [0], [1], [0, 0, 1, 1], [], []>} : vector<256x128xbf16>, vector<128x128xbf16>, vector<256x128xf32> -> vector<256x128xf32>
    %7 = arith.addf %3, %6 : vector<256x128xf32>
    %c0_6 = arith.constant 0 : index
    %c0_7 = arith.constant 0 : index
    %8 = vector.load %arg7[%c0_6, %c0_7] : memref<256x128xf32, #tpu.memory_space<vmem>>, vector<256x128xf32>
    tpu.vector_store %arg7[%c0_6, %c0_7], %7 {strides = array<i32>} : memref<256x128xf32, #tpu.memory_space<vmem>>, vector<256x128xf32>,
    %c0_i32_8 = arith.constant 0 : i32
    %9 = arith.cmpi eq, %arg2, %c0_i32_8 : i32
    %10 = arith.extui %9 : i1 to i32
    %c0_i32_9 = arith.constant 0 : i32
    %11 = arith.cmpi ne, %10, %c0_i32_9 : i32
    scf.if %11 {
      %c0_10 = arith.constant 0 : index
      %c0_11 = arith.constant 0 : index
      %12 = vector.load %arg7[%c0_10, %c0_11] : memref<256x128xf32, #tpu.memory_space<vmem>>, vector<256x128xf32>
      %c0_12 = arith.constant 0 : index
      %c0_13 = arith.constant 0 : index
      %13 = vector.load %arg5[%c0_12, %c0_13] : memref<1x128xf32, #tpu.memory_space<vmem>>, vector<1x128xf32>
      %14 = vector.broadcast %13 : vector<1x128xf32> to vector<256x128xf32>
      %15 = arith.addf %12, %14 : vector<256x128xf32>
      %cst_14 = arith.constant 0.000000e+00 : f32
      %16 = vector.broadcast %cst_14 : f32 to vector<256x128xf32>
      %17 = arith.maximumf %15, %16 : vector<256x128xf32>
      %18 = arith.truncf %17 : vector<256x128xf32> to vector<256x128xbf16>
      %c0_15 = arith.constant 0 : index
      %c0_16 = arith.constant 0 : index
      %19 = vector.load %arg6[%c0_15, %c0_16] : memref<256x128xbf16, #tpu.memory_space<vmem>>, vector<256x128xbf16>
      tpu.vector_store %arg6[%c0_15, %c0_16], %18 {strides = array<i32>} : memref<256x128xbf16, #tpu.memory_space<vmem>>, vector<256x128xbf16>,
    } else {
    }
    return
  }
  func.func @transform_0(%arg0: i32, %arg1: i32, %arg2: i32) -> (i32, i32) {
    %c0_i32 = arith.constant 0 : i32
    return %arg0, %arg2 : i32, i32
  }
  func.func @transform_1(%arg0: i32, %arg1: i32, %arg2: i32) -> (i32, i32) {
    %c0_i32 = arith.constant 0 : i32
    return %arg2, %arg1 : i32, i32
  }
  func.func @transform_2(%arg0: i32, %arg1: i32, %arg2: i32) -> (i32, i32) {
    %c0_i32 = arith.constant 0 : i32
    %c0_i32_0 = arith.constant 0 : i32
    return %c0_i32, %arg1 : i32, i32
  }
  func.func @transform_3(%arg0: i32, %arg1: i32, %arg2: i32) -> (i32, i32) {
    %c0_i32 = arith.constant 0 : i32
    return %arg0, %arg1 : i32, i32
  }
}

module attributes {stable_mosaic.version = 11 : i64} {
  func.func @_conv3x3_dy_kernel(%arg0: i32, %arg1: i32, %arg2: memref<1x18x16x384xbf16, #tpu.memory_space<vmem>>, %arg3: memref<3x384x128xbf16, #tpu.memory_space<vmem>>, %arg4: memref<1x128xf32, #tpu.memory_space<vmem>>, %arg5: memref<1x16x16x128xbf16, #tpu.memory_space<vmem>>) attributes {dimension_semantics = [#tpu.dimension_semantics<parallel>, #tpu.dimension_semantics<parallel>], iteration_bounds = array<i64: 2, 1>, scalar_prefetch = 0 : i64, scratch_operands = 0 : i64, tpu.core_type = #tpu.core_type<tc>, window_params = [{transform_indices = @transform_0, window_bounds = array<i64: 1, 18, 16, 384>}, {transform_indices = @transform_1, window_bounds = array<i64: 3, 384, 128>}, {transform_indices = @transform_2, window_bounds = array<i64: 1, 128>}, {transform_indices = @transform_3, window_bounds = array<i64: 1, 16, 16, 128>}]} {
    %cst = arith.constant 0.000000e+00 : f32
    %0 = vector.broadcast %cst : f32 to vector<256x128xf32>
    %c0 = arith.constant 0 : index
    %c0_0 = arith.constant 0 : index
    %c0_1 = arith.constant 0 : index
    %c0_2 = arith.constant 0 : index
    %1 = vector.load %arg2[%c0, %c0_0, %c0_1, %c0_2] : memref<1x18x16x384xbf16, #tpu.memory_space<vmem>>, vector<1x16x16x384xbf16>
    %2 = vector.shape_cast %1 : vector<1x16x16x384xbf16> to vector<16x16x384xbf16>
    %3 = vector.shape_cast %2 : vector<16x16x384xbf16> to vector<256x384xbf16>
    %c0_3 = arith.constant 0 : index
    %c0_4 = arith.constant 0 : index
    %c0_5 = arith.constant 0 : index
    %4 = vector.load %arg3[%c0_3, %c0_4, %c0_5] : memref<3x384x128xbf16, #tpu.memory_space<vmem>>, vector<1x384x128xbf16>
    %5 = vector.shape_cast %4 : vector<1x384x128xbf16> to vector<384x128xbf16>
    %cst_6 = arith.constant dense<0.000000e+00> : vector<256x128xf32>
    %6 = tpu.matmul %3, %5, %cst_6 {dimension_numbers = #tpu.dot_dimension_numbers<[1], [0], [0], [1], [0, 0, 1, 1], [], []>} : vector<256x384xbf16>, vector<384x128xbf16>, vector<256x128xf32> -> vector<256x128xf32>
    %7 = arith.addf %0, %6 : vector<256x128xf32>
    %c0_7 = arith.constant 0 : index
    %c1 = arith.constant 1 : index
    %c0_8 = arith.constant 0 : index
    %c0_9 = arith.constant 0 : index
    %8 = vector.load %arg2[%c0_7, %c1, %c0_8, %c0_9] : memref<1x18x16x384xbf16, #tpu.memory_space<vmem>>, vector<1x16x16x384xbf16>
    %9 = vector.shape_cast %8 : vector<1x16x16x384xbf16> to vector<16x16x384xbf16>
    %10 = vector.shape_cast %9 : vector<16x16x384xbf16> to vector<256x384xbf16>
    %c1_10 = arith.constant 1 : index
    %c0_11 = arith.constant 0 : index
    %c0_12 = arith.constant 0 : index
    %11 = vector.load %arg3[%c1_10, %c0_11, %c0_12] : memref<3x384x128xbf16, #tpu.memory_space<vmem>>, vector<1x384x128xbf16>
    %12 = vector.shape_cast %11 : vector<1x384x128xbf16> to vector<384x128xbf16>
    %cst_13 = arith.constant dense<0.000000e+00> : vector<256x128xf32>
    %13 = tpu.matmul %10, %12, %cst_13 {dimension_numbers = #tpu.dot_dimension_numbers<[1], [0], [0], [1], [0, 0, 1, 1], [], []>} : vector<256x384xbf16>, vector<384x128xbf16>, vector<256x128xf32> -> vector<256x128xf32>
    %14 = arith.addf %7, %13 : vector<256x128xf32>
    %c0_14 = arith.constant 0 : index
    %c2 = arith.constant 2 : index
    %c0_15 = arith.constant 0 : index
    %c0_16 = arith.constant 0 : index
    %15 = vector.load %arg2[%c0_14, %c2, %c0_15, %c0_16] : memref<1x18x16x384xbf16, #tpu.memory_space<vmem>>, vector<1x16x16x384xbf16>
    %16 = vector.shape_cast %15 : vector<1x16x16x384xbf16> to vector<16x16x384xbf16>
    %17 = vector.shape_cast %16 : vector<16x16x384xbf16> to vector<256x384xbf16>
    %c2_17 = arith.constant 2 : index
    %c0_18 = arith.constant 0 : index
    %c0_19 = arith.constant 0 : index
    %18 = vector.load %arg3[%c2_17, %c0_18, %c0_19] : memref<3x384x128xbf16, #tpu.memory_space<vmem>>, vector<1x384x128xbf16>
    %19 = vector.shape_cast %18 : vector<1x384x128xbf16> to vector<384x128xbf16>
    %cst_20 = arith.constant dense<0.000000e+00> : vector<256x128xf32>
    %20 = tpu.matmul %17, %19, %cst_20 {dimension_numbers = #tpu.dot_dimension_numbers<[1], [0], [0], [1], [0, 0, 1, 1], [], []>} : vector<256x384xbf16>, vector<384x128xbf16>, vector<256x128xf32> -> vector<256x128xf32>
    %21 = arith.addf %14, %20 : vector<256x128xf32>
    %c0_21 = arith.constant 0 : index
    %c0_22 = arith.constant 0 : index
    %22 = vector.load %arg4[%c0_21, %c0_22] : memref<1x128xf32, #tpu.memory_space<vmem>>, vector<1x128xf32>
    %23 = vector.broadcast %22 : vector<1x128xf32> to vector<256x128xf32>
    %24 = arith.addf %21, %23 : vector<256x128xf32>
    %cst_23 = arith.constant 0.000000e+00 : f32
    %25 = vector.broadcast %cst_23 : f32 to vector<256x128xf32>
    %26 = arith.maximumf %24, %25 : vector<256x128xf32>
    %27 = vector.shape_cast %26 : vector<256x128xf32> to vector<1x16x16x128xf32>
    %28 = arith.truncf %27 : vector<1x16x16x128xf32> to vector<1x16x16x128xbf16>
    %c0_24 = arith.constant 0 : index
    %c0_25 = arith.constant 0 : index
    %c0_26 = arith.constant 0 : index
    %c0_27 = arith.constant 0 : index
    %29 = vector.load %arg5[%c0_24, %c0_25, %c0_26, %c0_27] : memref<1x16x16x128xbf16, #tpu.memory_space<vmem>>, vector<1x16x16x128xbf16>
    tpu.vector_store %arg5[%c0_24, %c0_25, %c0_26, %c0_27], %28 {strides = array<i32>} : memref<1x16x16x128xbf16, #tpu.memory_space<vmem>>, vector<1x16x16x128xbf16>,
    return
  }
  func.func @transform_0(%arg0: i32, %arg1: i32) -> (i32, i32, i32, i32) {
    %c0_i32 = arith.constant 0 : i32
    %c0_i32_0 = arith.constant 0 : i32
    %c0_i32_1 = arith.constant 0 : i32
    %c0_i32_2 = arith.constant 0 : i32
    return %arg0, %c0_i32, %c0_i32_0, %c0_i32_1 : i32, i32, i32, i32
  }
  func.func @transform_1(%arg0: i32, %arg1: i32) -> (i32, i32, i32) {
    %c0_i32 = arith.constant 0 : i32
    %c0_i32_0 = arith.constant 0 : i32
    %c0_i32_1 = arith.constant 0 : i32
    return %c0_i32, %c0_i32_0, %arg1 : i32, i32, i32
  }
  func.func @transform_2(%arg0: i32, %arg1: i32) -> (i32, i32) {
    %c0_i32 = arith.constant 0 : i32
    %c0_i32_0 = arith.constant 0 : i32
    return %c0_i32, %arg1 : i32, i32
  }
  func.func @transform_3(%arg0: i32, %arg1: i32) -> (i32, i32, i32, i32) {
    %c0_i32 = arith.constant 0 : i32
    %c0_i32_0 = arith.constant 0 : i32
    %c0_i32_1 = arith.constant 0 : i32
    return %arg0, %c0_i32, %c0_i32_0, %arg1 : i32, i32, i32, i32
  }
}

module attributes {stable_mosaic.version = 11 : i64} {
  func.func @_conv3_ds_kernel(%arg0: i32, %arg1: i32, %arg2: memref<256x128xbf16, #tpu.memory_space<vmem>>, %arg3: memref<128x128xbf16, #tpu.memory_space<vmem>>, %arg4: memref<256x128xbf16, #tpu.memory_space<vmem>>, %arg5: memref<128x128xbf16, #tpu.memory_space<vmem>>, %arg6: memref<1x128xf32, #tpu.memory_space<vmem>>, %arg7: memref<256x128xf32, #tpu.memory_space<vmem>>, %arg8: memref<256x128xf32, #tpu.memory_space<vmem>>) attributes {dimension_semantics = [#tpu.dimension_semantics<parallel>, #tpu.dimension_semantics<parallel>], iteration_bounds = array<i64: 2, 1>, scalar_prefetch = 0 : i64, scratch_operands = 0 : i64, tpu.core_type = #tpu.core_type<tc>, window_params = [{transform_indices = @transform_0, window_bounds = array<i64: 256, 128>}, {transform_indices = @transform_1, window_bounds = array<i64: 128, 128>}, {transform_indices = @transform_2, window_bounds = array<i64: 256, 128>}, {transform_indices = @transform_3, window_bounds = array<i64: 128, 128>}, {transform_indices = @transform_4, window_bounds = array<i64: 1, 128>}, {transform_indices = @transform_5, window_bounds = array<i64: 256, 128>}, {transform_indices = @transform_6, window_bounds = array<i64: 256, 128>}]} {
    %c0 = arith.constant 0 : index
    %c0_0 = arith.constant 0 : index
    %0 = vector.load %arg2[%c0, %c0_0] : memref<256x128xbf16, #tpu.memory_space<vmem>>, vector<256x128xbf16>
    %c0_1 = arith.constant 0 : index
    %c0_2 = arith.constant 0 : index
    %1 = vector.load %arg3[%c0_1, %c0_2] : memref<128x128xbf16, #tpu.memory_space<vmem>>, vector<128x128xbf16>
    %cst = arith.constant dense<0.000000e+00> : vector<256x128xf32>
    %2 = tpu.matmul %0, %1, %cst {dimension_numbers = #tpu.dot_dimension_numbers<[1], [0], [0], [1], [0, 0, 1, 1], [], []>} : vector<256x128xbf16>, vector<128x128xbf16>, vector<256x128xf32> -> vector<256x128xf32>
    %c0_3 = arith.constant 0 : index
    %c0_4 = arith.constant 0 : index
    %3 = vector.load %arg4[%c0_3, %c0_4] : memref<256x128xbf16, #tpu.memory_space<vmem>>, vector<256x128xbf16>
    %c0_5 = arith.constant 0 : index
    %c0_6 = arith.constant 0 : index
    %4 = vector.load %arg5[%c0_5, %c0_6] : memref<128x128xbf16, #tpu.memory_space<vmem>>, vector<128x128xbf16>
    %cst_7 = arith.constant dense<0.000000e+00> : vector<256x128xf32>
    %5 = tpu.matmul %3, %4, %cst_7 {dimension_numbers = #tpu.dot_dimension_numbers<[1], [0], [0], [1], [0, 0, 1, 1], [], []>} : vector<256x128xbf16>, vector<128x128xbf16>, vector<256x128xf32> -> vector<256x128xf32>
    %6 = arith.addf %2, %5 : vector<256x128xf32>
    %c0_8 = arith.constant 0 : index
    %c0_9 = arith.constant 0 : index
    %7 = vector.load %arg6[%c0_8, %c0_9] : memref<1x128xf32, #tpu.memory_space<vmem>>, vector<1x128xf32>
    %8 = vector.broadcast %7 : vector<1x128xf32> to vector<256x128xf32>
    %9 = arith.addf %6, %8 : vector<256x128xf32>
    %cst_10 = arith.constant 0.000000e+00 : f32
    %10 = vector.broadcast %cst_10 : f32 to vector<256x128xf32>
    %11 = arith.maximumf %9, %10 : vector<256x128xf32>
    %c0_11 = arith.constant 0 : index
    %c0_12 = arith.constant 0 : index
    %12 = vector.load %arg7[%c0_11, %c0_12] : memref<256x128xf32, #tpu.memory_space<vmem>>, vector<256x128xf32>
    tpu.vector_store %arg7[%c0_11, %c0_12], %11 {strides = array<i32>} : memref<256x128xf32, #tpu.memory_space<vmem>>, vector<256x128xf32>,
    %c0_13 = arith.constant 0 : index
    %c0_14 = arith.constant 0 : index
    %13 = vector.load %arg8[%c0_13, %c0_14] : memref<256x128xf32, #tpu.memory_space<vmem>>, vector<256x128xf32>
    tpu.vector_store %arg8[%c0_13, %c0_14], %9 {strides = array<i32>} : memref<256x128xf32, #tpu.memory_space<vmem>>, vector<256x128xf32>,
    return
  }
  func.func @transform_0(%arg0: i32, %arg1: i32) -> (i32, i32) {
    %c0_i32 = arith.constant 0 : i32
    %c0_i32_0 = arith.constant 0 : i32
    return %arg0, %c0_i32 : i32, i32
  }
  func.func @transform_1(%arg0: i32, %arg1: i32) -> (i32, i32) {
    %c0_i32 = arith.constant 0 : i32
    %c0_i32_0 = arith.constant 0 : i32
    return %c0_i32, %arg1 : i32, i32
  }
  func.func @transform_2(%arg0: i32, %arg1: i32) -> (i32, i32) {
    %c0_i32 = arith.constant 0 : i32
    %c0_i32_0 = arith.constant 0 : i32
    return %arg0, %c0_i32 : i32, i32
  }
  func.func @transform_3(%arg0: i32, %arg1: i32) -> (i32, i32) {
    %c0_i32 = arith.constant 0 : i32
    %c0_i32_0 = arith.constant 0 : i32
    return %c0_i32, %arg1 : i32, i32
  }
  func.func @transform_4(%arg0: i32, %arg1: i32) -> (i32, i32) {
    %c0_i32 = arith.constant 0 : i32
    %c0_i32_0 = arith.constant 0 : i32
    return %c0_i32, %arg1 : i32, i32
  }
  func.func @transform_5(%arg0: i32, %arg1: i32) -> (i32, i32) {
    %c0_i32 = arith.constant 0 : i32
    return %arg0, %arg1 : i32, i32
  }
  func.func @transform_6(%arg0: i32, %arg1: i32) -> (i32, i32) {
    %c0_i32 = arith.constant 0 : i32
    return %arg0, %arg1 : i32, i32
  }
}

</mosaic_0001>

<llo_original>
// kernel: bottleneck_forward.3
$region0: #{bottleneck_forward.3}
  #allocation0 [shape = 'u32[]', space=smem, size = 0x4, offset = 0x4, fixed_abs, tag = 'smem constant byte address 0x4 - core index']
  #allocation1 [shape = 'u32[144,128]{1,0:T(1,128)}', space=vmem, size = 0x12000, scoped, tag = 'internal scratch']
  #allocation2 [shape = 'f32[256,128]{1,0:T(8,128)}', space=vmem, size = 0x20000, scoped, tag = 'scratch operand']
  %s0 = inlined_call_operand.vmem [shape: bf16[512,128], index: 0, kind: input, shape index: {}]
  %s1 = inlined_call_operand.vmem [shape: bf16[128,128], index: 1, kind: input, shape index: {}]
  %s2 = inlined_call_operand.vmem [shape: f32[1,128], index: 2, kind: input, shape index: {}]
  %s3 = inlined_call_operand.vmem [shape: bf16[512,128], index: 3, kind: output, shape index: {}]
  %s4 = sld [smem:[#allocation0]]
  $region53: #{bottleneck_forward.3} parent=0
    _
  %s6 = ssub.s32 1, %s4
  %s7 = scalar_select 0, %s6, %s4
  loop: start=0, step=1, limit=4
  $region2: #{bottleneck_forward.3} parent=0 // loop_pre_header
    _
  $region3: #{bottleneck_forward.3} parent=0 // loop_header
    %s9 = sphi 0, %s13
    %p10 = scmp.ge.s32.totalorder %s9, 4
    %s16 = sphi 0, %s35
    %s17 = sphi 0, %s31
    %s18 = sphi 0, %s27
    %s19 = sphi 0, %s16
    %s20 = sphi 0, %s17
    %s21 = sphi 0, %s18
    %s22 = sphi 0, %s19
    %s23 = sphi 0, %s20
    %s24 = sphi 0, %s21
    %s40 = sphi 0, %s42
    %s43 = sphi 0, %s40
    %s44 = sphi 0, %s43
    %s60 = sphi 0, %s44
    %s68 = sphi 0, %s70
    %s71 = sphi 0, %s68
    %s72 = sphi 0, %s71
    %s88 = sphi 0, %s72
    %s94 = sphi 0, %s96
    %s97 = sphi 0, %s94
    %s98 = sphi 0, %s97
    %s114 = sphi 0, %s98
    %s122 = sphi 0, %s124
    %s125 = sphi 0, %s122
    %s126 = sphi 0, %s125
    %s142 = sphi 0, %s126
  $region4: #{bottleneck_forward.3} parent=0 // loop_header_branch
    %12 = sbr.rel (%p10) target = $region8
  $region5: #{bottleneck_forward.3} parent=0 // loop_body
    %s14 = ssub.s32 %s9, 1
    %s15 = ssub.s32 %s9, 2
    %s25 = sadd.s32 1, %s18
    %p26 = scmp.ge.s32.totalorder %s25, 1
    %s27 = scalar_select %p26, 0, %s25
    %s28 = sadd.s32 1, %s17
    %s29 = scalar_select %p26, %s28, %s17
    %p30 = scmp.ge.s32.totalorder %s29, 1
    %s31 = scalar_select %p30, 0, %s29
    %s32 = sadd.s32 1, %s16
    %s33 = scalar_select %p30, %s32, %s16
    %p34 = scmp.ge.s32.totalorder %s33, 2
    %s35 = scalar_select %p34, 0, %s33
    %s36 = ssub.s32 %s16, %s35
    %s37 = ssub.s32 %s18, %s27
    %s38 = sor.u32 %s36, %s37
    %p39 = scmp.eq.s32.totalorder %s38, 0
    %s41 = sadd.s32 %s40, 1
    %s42 = scalar_select %p39, %s40, %s41
    %p45 = pneg %p39
    %p46 = scmp.eq.s32.totalorder %s9, 1
    %p47 = por %p45, %p46
    %p48 = scmp.ne.s32.totalorder %s40, %s43
    %p49 = scmp.eq.s32.totalorder %s9, 0
    %p50 = por %p48, %p49
    %p51 = scmp.ne.s32.totalorder %s40, %s43
    %p52 = scmp.eq.s32.totalorder %s14, 1
    %p53 = por %p51, %p52
    %p54 = scmp.ne.s32.totalorder %s43, %s44
    %p55 = scmp.eq.s32.totalorder %s14, 0
    %p56 = por %p54, %p55
    %p57 = scmp.ne.s32.totalorder %s43, %s44
    %p58 = scmp.eq.s32.totalorder %s15, 1
    %p59 = por %p57, %p58
    %p61 = scmp.ne.s32.totalorder %s44, %s60
    %p62 = scmp.eq.s32.totalorder %s15, 0
    %p63 = por %p61, %p62
    %s64 = ssub.s32 %s18, %s27
    %s65 = ssub.s32 %s17, %s31
    %s66 = sor.u32 %s64, %s65
    %p67 = scmp.eq.s32.totalorder %s66, 0
    %s69 = sadd.s32 %s68, 1
    %s70 = scalar_select %p67, %s68, %s69
    %p73 = pneg %p67
    %p74 = scmp.eq.s32.totalorder %s9, 1
    %p75 = por %p73, %p74
    %p76 = scmp.ne.s32.totalorder %s68, %s71
    %p77 = scmp.eq.s32.totalorder %s9, 0
    %p78 = por %p76, %p77
    %p79 = scmp.ne.s32.totalorder %s68, %s71
    %p80 = scmp.eq.s32.totalorder %s14, 1
    %p81 = por %p79, %p80
    %p82 = scmp.ne.s32.totalorder %s71, %s72
    %p83 = scmp.eq.s32.totalorder %s14, 0
    %p84 = por %p82, %p83
    %p85 = scmp.ne.s32.totalorder %s71, %s72
    %p86 = scmp.eq.s32.totalorder %s15, 1
    %p87 = por %p85, %p86
    %p89 = scmp.ne.s32.totalorder %s72, %s88
    %p90 = scmp.eq.s32.totalorder %s15, 0
    %p91 = por %p89, %p90
    %s92 = ssub.s32 %s17, %s31
    %p93 = scmp.eq.s32.totalorder %s92, 0
    %s95 = sadd.s32 %s94, 1
    %s96 = scalar_select %p93, %s94, %s95
    %p99 = pneg %p93
    %p100 = scmp.eq.s32.totalorder %s9, 1
    %p101 = por %p99, %p100
    %p102 = scmp.ne.s32.totalorder %s94, %s97
    %p103 = scmp.eq.s32.totalorder %s9, 0
    %p104 = por %p102, %p103
    %p105 = scmp.ne.s32.totalorder %s94, %s97
    %p106 = scmp.eq.s32.totalorder %s14, 1
    %p107 = por %p105, %p106
    %p108 = scmp.ne.s32.totalorder %s97, %s98
    %p109 = scmp.eq.s32.totalorder %s14, 0
    %p110 = por %p108, %p109
    %p111 = scmp.ne.s32.totalorder %s97, %s98
    %p112 = scmp.eq.s32.totalorder %s15, 1
    %p113 = por %p111, %p112
    %p115 = scmp.ne.s32.totalorder %s98, %s114
    %p116 = scmp.eq.s32.totalorder %s15, 0
    %p117 = por %p115, %p116
    %s118 = ssub.s32 %s16, %s35
    %s119 = ssub.s32 %s17, %s31
    %s120 = sor.u32 %s118, %s119
    %p121 = scmp.eq.s32.totalorder %s120, 0
    %s123 = sadd.s32 %s122, 1
    %s124 = scalar_select %p121, %s122, %s123
    %p127 = pneg %p121
    %p128 = scmp.eq.s32.totalorder %s9, 1
    %p129 = por %p127, %p128
    %p130 = scmp.ne.s32.totalorder %s122, %s125
    %p131 = scmp.eq.s32.totalorder %s9, 0
    %p132 = por %p130, %p131
    %p133 = scmp.ne.s32.totalorder %s122, %s125
    %p134 = scmp.eq.s32.totalorder %s14, 1
    %p135 = por %p133, %p134
    %p136 = scmp.ne.s32.totalorder %s125, %s126
    %p137 = scmp.eq.s32.totalorder %s14, 0
    %p138 = por %p136, %p137
    %p139 = scmp.ne.s32.totalorder %s125, %s126
    %p140 = scmp.eq.s32.totalorder %s15, 1
    %p141 = por %p139, %p140
    %p143 = scmp.ne.s32.totalorder %s126, %s142
    %p144 = scmp.eq.s32.totalorder %s15, 0
    %p145 = por %p143, %p144
    %p146 = scmp.le.s32.totalorder 1, %s9
    %p147 = scmp.lt.s32.totalorder %s9, 3
    %p148 = pnand %p146, %p147
    %p149 = pneg %p148
    // Predicated region
    $region9: #{bottleneck_forward.3} parent=5 // pred_check
      _
    $region10: #{bottleneck_forward.3} parent=5 // pred_check_branch
      %151 = sbr.rel (%p148) target = $region12
    $region11: #{bottleneck_forward.3} parent=5 // pred_region
      %s152 = ssub.s32 %s9, 1
      // Predicated region
      $region13: #{bottleneck_forward.3} parent=11 // pred_check
        %p153 = pneg %p84
      $region14: #{bottleneck_forward.3} parent=11 // pred_check_branch
        %155 = sbr.rel (%p153) target = $region16
      $region15: #{bottleneck_forward.3} parent=11 // pred_region
        %s156 = smul.u32 16, %s21
        %p157 = scmp.lt.s32.totalorder %s156, 15
        %s158 = scalar_select %p157, %s156, 15
        %p159 = scmp.lt.s32.totalorder %s20, 0
        %s160 = scalar_select %p159, %s20, 0
        %s161 = sadd.s32 %s160, %s158
        %s162 = smul.addr %s161, 4
        %s163 = scalar_lea.vmem %s1, %s162
        %s164 = smul.u32 16, %s21
      $region16: #{bottleneck_forward.3} parent=11 // pred_fallthru
        _
      // Predicated region
      $region17: #{bottleneck_forward.3} parent=11 // pred_check
        %p165 = pneg %p110
      $region18: #{bottleneck_forward.3} parent=11 // pred_check_branch
        %167 = sbr.rel (%p165) target = $region20
      $region19: #{bottleneck_forward.3} parent=11 // pred_region
        %p168 = scmp.lt.s32.totalorder %s20, 0
        %s169 = scalar_select %p168, %s20, 0
        %s170 = scalar_lea.vmem %s2, %s169
      $region20: #{bottleneck_forward.3} parent=11 // pred_fallthru
        _
    $region12: #{bottleneck_forward.3} parent=5 // pred_fallthru
      _
    %p171 = scmp.lt.s32.totalorder %s9, 2
    // Predicated region
    $region21: #{bottleneck_forward.3} parent=5 // pred_check
      %p172 = pneg %p171
    $region22: #{bottleneck_forward.3} parent=5 // pred_check_branch
      %174 = sbr.rel (%p172) target = $region24
    $region23: #{bottleneck_forward.3} parent=5 // pred_region
      // Predicated region
      $region25: #{bottleneck_forward.3} parent=23 // pred_check
        %p175 = pneg %p50
      $region26: #{bottleneck_forward.3} parent=23 // pred_check_branch
        %177 = sbr.rel (%p175) target = $region28
      $region27: #{bottleneck_forward.3} parent=23 // pred_region
        %s178 = smul.u32 32, %s16
        %p179 = scmp.lt.s32.totalorder %s178, 63
        %s180 = scalar_select %p179, %s178, 63
        %p181 = scmp.lt.s32.totalorder %s18, 0
        %s182 = scalar_select %p181, %s18, 0
        %s183 = sadd.s32 %s182, %s180
        %s184 = smul.addr %s183, 4
        %s185 = scalar_lea.vmem %s0, %s184
        %s186 = smul.u32 32, %s16
      $region28: #{bottleneck_forward.3} parent=23 // pred_fallthru
        _
    $region24: #{bottleneck_forward.3} parent=5 // pred_fallthru
      _
    %p187 = scmp.le.s32.totalorder 1, %s9
    %p188 = scmp.lt.s32.totalorder %s9, 3
    %p189 = pnand %p187, %p188
    %p190 = pneg %p189
    // Predicated region
    $region29: #{bottleneck_forward.3} parent=5 // pred_check
      _
    $region30: #{bottleneck_forward.3} parent=5 // pred_check_branch
      %192 = sbr.rel (%p189) target = $region32
    $region31: #{bottleneck_forward.3} parent=5 // pred_region
      %s193 = ssub.s32 %s9, 1
      %s194 = smul.u32 32, %s19
      %p195 = scmp.lt.s32.totalorder %s194, 63
      %s196 = scalar_select %p195, %s194, 63
      %p197 = scmp.lt.s32.totalorder %s21, 0
      %s198 = scalar_select %p197, %s21, 0
      %s199 = sadd.s32 %s198, %s196
      %s200 = smul.addr %s199, 4
      %s201 = scalar_lea.vmem %s0, %s200
      %p202 = pneg %p56
      %p203 = pneg %p53
      %s204 = smul.u32 16, %s21
      %p205 = scmp.lt.s32.totalorder %s204, 15
      %s206 = scalar_select %p205, %s204, 15
      %p207 = scmp.lt.s32.totalorder %s20, 0
      %s208 = scalar_select %p207, %s20, 0
      %s209 = sadd.s32 %s208, %s206
      %s210 = smul.addr %s209, 4
      %s211 = scalar_lea.vmem %s1, %s210
      %p212 = pneg %p84
      %p213 = pneg %p81
      %p214 = scmp.lt.s32.totalorder %s20, 0
      %s215 = scalar_select %p214, %s20, 0
      %s216 = scalar_lea.vmem %s2, %s215
      %p217 = pneg %p110
      %p218 = pneg %p107
      %p219 = pneg %p138
      %p220 = pneg %p135
      %s221 = smul.u32 32, %s19
      %p222 = scmp.lt.s32.totalorder %s221, 63
      %s223 = scalar_select %p222, %s221, 63
      %p224 = scmp.lt.s32.totalorder %s20, 0
      %s225 = scalar_select %p224, %s20, 0
      %s226 = sadd.s32 %s225, %s223
      %s227 = smul.addr %s226, 4
      %s228 = scalar_lea.vmem %s3, %s227
      %s229 = smul.u32 32, %s19
      %p230 = scmp.lt.s32.totalorder %s229, 63
      %s231 = scalar_select %p230, %s229, 63
      %p232 = scmp.lt.s32.totalorder %s21, 0
      %s233 = scalar_select %p232, %s21, 0
      %s234 = sadd.s32 %s233, %s231
      %s235 = smul.addr %s234, 4
      %s236 = scalar_lea.vmem %s0, %s235
      %s237 = smul.u32 32, %s19
      %s238 = smul.u32 16, %s21
      %p239 = scmp.lt.s32.totalorder %s238, 15
      %s240 = scalar_select %p239, %s238, 15
      %p241 = scmp.lt.s32.totalorder %s20, 0
      %s242 = scalar_select %p241, %s20, 0
      %s243 = sadd.s32 %s242, %s240
      %s244 = smul.addr %s243, 4
      %s245 = scalar_lea.vmem %s1, %s244
      %s246 = smul.u32 16, %s21
      %p247 = scmp.lt.s32.totalorder %s20, 0
      %s248 = scalar_select %p247, %s20, 0
      %s249 = scalar_lea.vmem %s2, %s248
      %s250 = smul.u32 32, %s19
      %p251 = scmp.lt.s32.totalorder %s250, 63
      %s252 = scalar_select %p251, %s250, 63
      %p253 = scmp.lt.s32.totalorder %s20, 0
      %s254 = scalar_select %p253, %s20, 0
      %s255 = sadd.s32 %s254, %s252
      %s256 = smul.addr %s255, 4
      %s257 = scalar_lea.vmem %s3, %s256
      %s258 = smul.u32 32, %s19
      %p260 = scmp.eq.s32.totalorder %s21, 0
      // Predicated region
      $region33: #{bottleneck_forward.3} parent=31 // pred_check
        %p261 = pneg %p260
      $region34: #{bottleneck_forward.3} parent=31 // pred_check_branch
        %263 = sbr.rel (%p261) target = $region36
      $region35: #{bottleneck_forward.3} parent=31 // pred_region
        %264 = vst [vmem:[#allocation2] sm:$0xff] 0.0
        %265 = vst [vmem:[#allocation2 + $0x8] sm:$0xff] 0.0
        %266 = vst [vmem:[#allocation2 + $0x10] sm:$0xff] 0.0
        %267 = vst [vmem:[#allocation2 + $0x18] sm:$0xff] 0.0
        %268 = vst [vmem:[#allocation2 + $0x20] sm:$0xff] 0.0
        %269 = vst [vmem:[#allocation2 + $0x28] sm:$0xff] 0.0
        %270 = vst [vmem:[#allocation2 + $0x30] sm:$0xff] 0.0
        %271 = vst [vmem:[#allocation2 + $0x38] sm:$0xff] 0.0
        %272 = vst [vmem:[#allocation2 + $0x40] sm:$0xff] 0.0
        %273 = vst [vmem:[#allocation2 + $0x48] sm:$0xff] 0.0
        %274 = vst [vmem:[#allocation2 + $0x50] sm:$0xff] 0.0
        %275 = vst [vmem:[#allocation2 + $0x58] sm:$0xff] 0.0
        %276 = vst [vmem:[#allocation2 + $0x60] sm:$0xff] 0.0
        %277 = vst [vmem:[#allocation2 + $0x68] sm:$0xff] 0.0
        %278 = vst [vmem:[#allocation2 + $0x70] sm:$0xff] 0.0
        %279 = vst [vmem:[#allocation2 + $0x78] sm:$0xff] 0.0
        %280 = vst [vmem:[#allocation2 + $0x80] sm:$0xff] 0.0
        %281 = vst [vmem:[#allocation2 + $0x88] sm:$0xff] 0.0
        %282 = vst [vmem:[#allocation2 + $0x90] sm:$0xff] 0.0
        %283 = vst [vmem:[#allocation2 + $0x98] sm:$0xff] 0.0
        %284 = vst [vmem:[#allocation2 + $0xa0] sm:$0xff] 0.0
        %285 = vst [vmem:[#allocation2 + $0xa8] sm:$0xff] 0.0
        %286 = vst [vmem:[#allocation2 + $0xb0] sm:$0xff] 0.0
        %287 = vst [vmem:[#allocation2 + $0xb8] sm:$0xff] 0.0
        %288 = vst [vmem:[#allocation2 + $0xc0] sm:$0xff] 0.0
        %289 = vst [vmem:[#allocation2 + $0xc8] sm:$0xff] 0.0
        %290 = vst [vmem:[#allocation2 + $0xd0] sm:$0xff] 0.0
        %291 = vst [vmem:[#allocation2 + $0xd8] sm:$0xff] 0.0
        %292 = vst [vmem:[#allocation2 + $0xe0] sm:$0xff] 0.0
        %293 = vst [vmem:[#allocation2 + $0xe8] sm:$0xff] 0.0
        %294 = vst [vmem:[#allocation2 + $0xf0] sm:$0xff] 0.0
        %295 = vst [vmem:[#allocation2 + $0xf8] sm:$0xff] 0.0
      $region36: #{bottleneck_forward.3} parent=31 // pred_fallthru
        _
      %v296 = vld [vmem:[#allocation2] sm:$0xff]
      %v297 = vld [vmem:[#allocation2 + $0x8] sm:$0xff]
      %v298 = vld [vmem:[#allocation2 + $0x10] sm:$0xff]
      %v299 = vld [vmem:[#allocation2 + $0x18] sm:$0xff]
      %v300 = vld [vmem:[#allocation2 + $0x20] sm:$0xff]
      %v301 = vld [vmem:[#allocation2 + $0x28] sm:$0xff]
      %v302 = vld [vmem:[#allocation2 + $0x30] sm:$0xff]
      %v303 = vld [vmem:[#allocation2 + $0x38] sm:$0xff]
      %v304 = vld [vmem:[#allocation2 + $0x40] sm:$0xff]
      %v305 = vld [vmem:[#allocation2 + $0x48] sm:$0xff]
      %v306 = vld [vmem:[#allocation2 + $0x50] sm:$0xff]
      %v307 = vld [vmem:[#allocation2 + $0x58] sm:$0xff]
      %v308 = vld [vmem:[#allocation2 + $0x60] sm:$0xff]
      %v309 = vld [vmem:[#allocation2 + $0x68] sm:$0xff]
      %v310 = vld [vmem:[#allocation2 + $0x70] sm:$0xff]
      %v311 = vld [vmem:[#allocation2 + $0x78] sm:$0xff]
      %v312 = vld [vmem:[#allocation2 + $0x80] sm:$0xff]
      %v313 = vld [vmem:[#allocation2 + $0x88] sm:$0xff]
      %v314 = vld [vmem:[#allocation2 + $0x90] sm:$0xff]
      %v315 = vld [vmem:[#allocation2 + $0x98] sm:$0xff]
      %v316 = vld [vmem:[#allocation2 + $0xa0] sm:$0xff]
      %v317 = vld [vmem:[#allocation2 + $0xa8] sm:$0xff]
      %v318 = vld [vmem:[#allocation2 + $0xb0] sm:$0xff]
      %v319 = vld [vmem:[#allocation2 + $0xb8] sm:$0xff]
      %v320 = vld [vmem:[#allocation2 + $0xc0] sm:$0xff]
      %v321 = vld [vmem:[#allocation2 + $0xc8] sm:$0xff]
      %v322 = vld [vmem:[#allocation2 + $0xd0] sm:$0xff]
      %v323 = vld [vmem:[#allocation2 + $0xd8] sm:$0xff]
      %v324 = vld [vmem:[#allocation2 + $0xe0] sm:$0xff]
      %v325 = vld [vmem:[#allocation2 + $0xe8] sm:$0xff]
      %v326 = vld [vmem:[#allocation2 + $0xf0] sm:$0xff]
      %v327 = vld [vmem:[#allocation2 + $0xf8] sm:$0xff]
      %v328 = vld [vmem:[%s236] sm:$0xf]
      %v329 = vld [vmem:[%s236 + $0x4] sm:$0xf]
      %v330 = vld [vmem:[%s236 + $0x8] sm:$0xf]
      %v331 = vld [vmem:[%s236 + $0xc] sm:$0xf]
      %v332 = vld [vmem:[%s236 + $0x10] sm:$0xf]
      %v333 = vld [vmem:[%s236 + $0x14] sm:$0xf]
      %v334 = vld [vmem:[%s236 + $0x18] sm:$0xf]
      %v335 = vld [vmem:[%s236 + $0x1c] sm:$0xf]
      %v336 = vld [vmem:[%s236 + $0x20] sm:$0xf]
      %v337 = vld [vmem:[%s236 + $0x24] sm:$0xf]
      %v338 = vld [vmem:[%s236 + $0x28] sm:$0xf]
      %v339 = vld [vmem:[%s236 + $0x2c] sm:$0xf]
      %v340 = vld [vmem:[%s236 + $0x30] sm:$0xf]
      %v341 = vld [vmem:[%s236 + $0x34] sm:$0xf]
      %v342 = vld [vmem:[%s236 + $0x38] sm:$0xf]
      %v343 = vld [vmem:[%s236 + $0x3c] sm:$0xf]
      %v344 = vld [vmem:[%s236 + $0x40] sm:$0xf]
      %v345 = vld [vmem:[%s236 + $0x44] sm:$0xf]
      %v346 = vld [vmem:[%s236 + $0x48] sm:$0xf]
      %v347 = vld [vmem:[%s236 + $0x4c] sm:$0xf]
      %v348 = vld [vmem:[%s236 + $0x50] sm:$0xf]
      %v349 = vld [vmem:[%s236 + $0x54] sm:$0xf]
      %v350 = vld [vmem:[%s236 + $0x58] sm:$0xf]
      %v351 = vld [vmem:[%s236 + $0x5c] sm:$0xf]
      %v352 = vld [vmem:[%s236 + $0x60] sm:$0xf]
      %v353 = vld [vmem:[%s236 + $0x64] sm:$0xf]
      %v354 = vld [vmem:[%s236 + $0x68] sm:$0xf]
      %v355 = vld [vmem:[%s236 + $0x6c] sm:$0xf]
      %v356 = vld [vmem:[%s236 + $0x70] sm:$0xf]
      %v357 = vld [vmem:[%s236 + $0x74] sm:$0xf]
      %v358 = vld [vmem:[%s236 + $0x78] sm:$0xf]
      %v359 = vld [vmem:[%s236 + $0x7c] sm:$0xf]
      %v360 = vld [vmem:[%s245] sm:$0xf]
      %v361 = vld [vmem:[%s245 + $0x4] sm:$0xf]
      %v362 = vld [vmem:[%s245 + $0x8] sm:$0xf]
      %v363 = vld [vmem:[%s245 + $0xc] sm:$0xf]
      %v364 = vld [vmem:[%s245 + $0x10] sm:$0xf]
      %v365 = vld [vmem:[%s245 + $0x14] sm:$0xf]
      %v366 = vld [vmem:[%s245 + $0x18] sm:$0xf]
      %v367 = vld [vmem:[%s245 + $0x1c] sm:$0xf]
      %v368 = vld [vmem:[%s245 + $0x20] sm:$0xf]
      %v369 = vld [vmem:[%s245 + $0x24] sm:$0xf]
      %v370 = vld [vmem:[%s245 + $0x28] sm:$0xf]
      %v371 = vld [vmem:[%s245 + $0x2c] sm:$0xf]
      %v372 = vld [vmem:[%s245 + $0x30] sm:$0xf]
      %v373 = vld [vmem:[%s245 + $0x34] sm:$0xf]
      %v374 = vld [vmem:[%s245 + $0x38] sm:$0xf]
      %v375 = vld [vmem:[%s245 + $0x3c] sm:$0xf]
      %v408 = vunpack.c.l.b16 %v328
      %v409 = vunpack.c.l.b16 %v329
      %v410 = vunpack.c.l.b16 %v330
      %v411 = vunpack.c.l.b16 %v331
      %v412 = vunpack.c.l.b16 %v332
      %v413 = vunpack.c.l.b16 %v333
      %v414 = vunpack.c.l.b16 %v334
      %v415 = vunpack.c.l.b16 %v335
      %v416 = vunpack.c.l.b16 %v336
      %v417 = vunpack.c.l.b16 %v337
      %v418 = vunpack.c.l.b16 %v338
      %v419 = vunpack.c.l.b16 %v339
      %v420 = vunpack.c.l.b16 %v340
      %v421 = vunpack.c.l.b16 %v341
      %v422 = vunpack.c.l.b16 %v342
      %v423 = vunpack.c.l.b16 %v343
      %v424 = vunpack.c.l.b16 %v344
      %v425 = vunpack.c.l.b16 %v345
      %v426 = vunpack.c.l.b16 %v346
      %v427 = vunpack.c.l.b16 %v347
      %v428 = vunpack.c.l.b16 %v348
      %v429 = vunpack.c.l.b16 %v349
      %v430 = vunpack.c.l.b16 %v350
      %v431 = vunpack.c.l.b16 %v351
      %v432 = vunpack.c.l.b16 %v352
      %v433 = vunpack.c.l.b16 %v353
      %v434 = vunpack.c.l.b16 %v354
      %v435 = vunpack.c.l.b16 %v355
      %v436 = vunpack.c.l.b16 %v356
      %v437 = vunpack.c.l.b16 %v357
      %v438 = vunpack.c.l.b16 %v358
      %v439 = vunpack.c.l.b16 %v359
      %v440 = vpack.c.b16 %v409, %v408
      %v441 = vpack.c.b16 %v411, %v410
      %v442 = vpack.c.b16 %v413, %v412
      %v443 = vpack.c.b16 %v415, %v414
      %v444 = vpack.c.b16 %v417, %v416
      %v445 = vpack.c.b16 %v419, %v418
      %v446 = vpack.c.b16 %v421, %v420
      %v447 = vpack.c.b16 %v423, %v422
      %v448 = vpack.c.b16 %v425, %v424
      %v449 = vpack.c.b16 %v427, %v426
      %v450 = vpack.c.b16 %v429, %v428
      %v451 = vpack.c.b16 %v431, %v430
      %v452 = vpack.c.b16 %v433, %v432
      %v453 = vpack.c.b16 %v435, %v434
      %v454 = vpack.c.b16 %v437, %v436
      %v455 = vpack.c.b16 %v439, %v438
      %v488 = vunpack.c.l.b16 %v360
      %v489 = vunpack.c.l.b16 %v361
      %v490 = vunpack.c.l.b16 %v362
      %v491 = vunpack.c.l.b16 %v363
      %v492 = vunpack.c.l.b16 %v364
      %v493 = vunpack.c.l.b16 %v365
      %v494 = vunpack.c.l.b16 %v366
      %v495 = vunpack.c.l.b16 %v367
      %v496 = vunpack.c.l.b16 %v368
      %v497 = vunpack.c.l.b16 %v369
      %v498 = vunpack.c.l.b16 %v370
      %v499 = vunpack.c.l.b16 %v371
      %v500 = vunpack.c.l.b16 %v372
      %v501 = vunpack.c.l.b16 %v373
      %v502 = vunpack.c.l.b16 %v374
      %v503 = vunpack.c.l.b16 %v375
      %v504 = vpack.c.b16 %v489, %v488
      %v505 = vpack.c.b16 %v491, %v490
      %v506 = vpack.c.b16 %v493, %v492
      %v507 = vpack.c.b16 %v495, %v494
      %v508 = vpack.c.b16 %v497, %v496
      %v509 = vpack.c.b16 %v499, %v498
      %v510 = vpack.c.b16 %v501, %v500
      %v511 = vpack.c.b16 %v503, %v502
      %520 = vmatprep.subr.bf16.mxu0 0
      %521 = vmatpush1.bf16.msra.mxu0 %v504
      %522 = vmatprep.subr.bf16.mxu0 0
      %523 = vmatpush1.bf16.msra.mxu0 %v505
      %524 = vmatprep.subr.bf16.mxu0 0
      %525 = vmatpush1.bf16.msra.mxu0 %v506
      %526 = vmatprep.subr.bf16.mxu0 0
      %527 = vmatpush1.bf16.msra.mxu0 %v507
      %528 = vmatprep.subr.bf16.mxu0 0
      %529 = vmatpush1.bf16.msra.mxu0 %v508
      %530 = vmatprep.subr.bf16.mxu0 0
      %531 = vmatpush1.bf16.msra.mxu0 %v509
      %532 = vmatprep.subr.bf16.mxu0 0
      %533 = vmatpush1.bf16.msra.mxu0 %v510
      %534 = vmatprep.subr.bf16.mxu0 0
      %535 = vmatpush1.bf16.msra.mxu0 %v511
      %536 = vmatprep.subr.bf16.mxu0 0
      %537 = vmatpush1.bf16.msra.mxu0 0
      %538 = vmatprep.subr.bf16.mxu0 0
      %539 = vmatpush1.bf16.msra.mxu0 0
      %540 = vmatprep.subr.bf16.mxu0 0
      %541 = vmatpush1.bf16.msra.mxu0 0
      %542 = vmatprep.subr.bf16.mxu0 0
      %543 = vmatpush1.bf16.msra.mxu0 0
      %544 = vmatprep.subr.bf16.mxu0 0
      %545 = vmatpush1.bf16.msra.mxu0 0
      %546 = vmatprep.subr.bf16.mxu0 0
      %547 = vmatpush1.bf16.msra.mxu0 0
      %548 = vmatprep.subr.bf16.mxu0 0
      %549 = vmatpush1.bf16.msra.mxu0 0
      %550 = vmatprep.subr.bf16.mxu0 0
      %551 = vmatpush1.bf16.msra.mxu0 0
      %552 = vmatprep.mubr.bf16.mxu0 0
      %553 = vmatmul.mubr.bf16.gmra.mrb[0].mxu0 %v440
      %v554 = vpop.f32.mrb[0].mxu0
      %v555 = vadd.f32 0.0, %v554
      %v556 = vpop.f32.mrb[0].mxu0
      %v557 = vpop.f32.mrb[0].mxu0
      %v558 = vadd.f32 0.0, %v557
      %v559 = vpop.f32.mrb[0].mxu0
      %560 = vmatprep.mubr.bf16.mxu0 0
      %561 = vmatmul.mubr.bf16.gmra.mrb[0].mxu0 %v441
      %v562 = vpop.f32.mrb[0].mxu0
      %v563 = vadd.f32 0.0, %v562
      %v564 = vpop.f32.mrb[0].mxu0
      %v565 = vpop.f32.mrb[0].mxu0
      %v566 = vadd.f32 0.0, %v565
      %v567 = vpop.f32.mrb[0].mxu0
      %568 = vmatprep.mubr.bf16.mxu0 0
      %569 = vmatmul.mubr.bf16.gmra.mrb[0].mxu0 %v442
      %v570 = vpop.f32.mrb[0].mxu0
      %v571 = vadd.f32 0.0, %v570
      %v572 = vpop.f32.mrb[0].mxu0
      %v573 = vpop.f32.mrb[0].mxu0
      %v574 = vadd.f32 0.0, %v573
      %v575 = vpop.f32.mrb[0].mxu0
      %576 = vmatprep.mubr.bf16.mxu0 0
      %577 = vmatmul.mubr.bf16.gmra.mrb[0].mxu0 %v443
      %v578 = vpop.f32.mrb[0].mxu0
      %v579 = vadd.f32 0.0, %v578
      %v580 = vpop.f32.mrb[0].mxu0
      %v581 = vpop.f32.mrb[0].mxu0
      %v582 = vadd.f32 0.0, %v581
      %v583 = vpop.f32.mrb[0].mxu0
      %584 = vmatprep.mubr.bf16.mxu0 0
      %585 = vmatmul.mubr.bf16.gmra.mrb[0].mxu0 %v444
      %v586 = vpop.f32.mrb[0].mxu0
      %v587 = vadd.f32 0.0, %v586
      %v588 = vpop.f32.mrb[0].mxu0
      %v589 = vpop.f32.mrb[0].mxu0
      %v590 = vadd.f32 0.0, %v589
      %v591 = vpop.f32.mrb[0].mxu0
      %592 = vmatprep.mubr.bf16.mxu0 0
      %593 = vmatmul.mubr.bf16.gmra.mrb[0].mxu0 %v445
      %v594 = vpop.f32.mrb[0].mxu0
      %v595 = vadd.f32 0.0, %v594
      %v596 = vpop.f32.mrb[0].mxu0
      %v597 = vpop.f32.mrb[0].mxu0
      %v598 = vadd.f32 0.0, %v597
      %v599 = vpop.f32.mrb[0].mxu0
      %600 = vmatprep.mubr.bf16.mxu0 0
      %601 = vmatmul.mubr.bf16.gmra.mrb[0].mxu0 %v446
      %v602 = vpop.f32.mrb[0].mxu0
      %v603 = vadd.f32 0.0, %v602
      %v604 = vpop.f32.mrb[0].mxu0
      %v605 = vpop.f32.mrb[0].mxu0
      %v606 = vadd.f32 0.0, %v605
      %v607 = vpop.f32.mrb[0].mxu0
      %608 = vmatprep.mubr.bf16.mxu0 0
      %609 = vmatmul.mubr.bf16.gmra.mrb[0].mxu0 %v447
      %v610 = vpop.f32.mrb[0].mxu0
      %v611 = vadd.f32 0.0, %v610
      %v612 = vpop.f32.mrb[0].mxu0
      %v613 = vpop.f32.mrb[0].mxu0
      %v614 = vadd.f32 0.0, %v613
      %v615 = vpop.f32.mrb[0].mxu0
      %616 = vmatprep.mubr.bf16.mxu0 0
      %617 = vmatmul.mubr.bf16.gmra.mrb[0].mxu0 %v448
      %v618 = vpop.f32.mrb[0].mxu0
      %v619 = vadd.f32 0.0, %v618
      %v620 = vpop.f32.mrb[0].mxu0
      %v621 = vpop.f32.mrb[0].mxu0
      %v622 = vadd.f32 0.0, %v621
      %v623 = vpop.f32.mrb[0].mxu0
      %624 = vmatprep.mubr.bf16.mxu0 0
      %625 = vmatmul.mubr.bf16.gmra.mrb[0].mxu0 %v449
      %v626 = vpop.f32.mrb[0].mxu0
      %v627 = vadd.f32 0.0, %v626
      %v628 = vpop.f32.mrb[0].mxu0
      %v629 = vpop.f32.mrb[0].mxu0
      %v630 = vadd.f32 0.0, %v629
      %v631 = vpop.f32.mrb[0].mxu0
      %632 = vmatprep.mubr.bf16.mxu0 0
      %633 = vmatmul.mubr.bf16.gmra.mrb[0].mxu0 %v450
      %v634 = vpop.f32.mrb[0].mxu0
      %v635 = vadd.f32 0.0, %v634
      %v636 = vpop.f32.mrb[0].mxu0
      %v637 = vpop.f32.mrb[0].mxu0
      %v638 = vadd.f32 0.0, %v637
      %v639 = vpop.f32.mrb[0].mxu0
      %640 = vmatprep.mubr.bf16.mxu0 0
      %641 = vmatmul.mubr.bf16.gmra.mrb[0].mxu0 %v451
      %v642 = vpop.f32.mrb[0].mxu0
      %v643 = vadd.f32 0.0, %v642
      %v644 = vpop.f32.mrb[0].mxu0
      %v645 = vpop.f32.mrb[0].mxu0
      %v646 = vadd.f32 0.0, %v645
      %v647 = vpop.f32.mrb[0].mxu0
      %648 = vmatprep.mubr.bf16.mxu0 0
      %649 = vmatmul.mubr.bf16.gmra.mrb[0].mxu0 %v452
      %v650 = vpop.f32.mrb[0].mxu0
      %v651 = vadd.f32 0.0, %v650
      %v652 = vpop.f32.mrb[0].mxu0
      %v653 = vpop.f32.mrb[0].mxu0
      %v654 = vadd.f32 0.0, %v653
      %v655 = vpop.f32.mrb[0].mxu0
      %656 = vmatprep.mubr.bf16.mxu0 0
      %657 = vmatmul.mubr.bf16.gmra.mrb[0].mxu0 %v453
      %v658 = vpop.f32.mrb[0].mxu0
      %v659 = vadd.f32 0.0, %v658
      %v660 = vpop.f32.mrb[0].mxu0
      %v661 = vpop.f32.mrb[0].mxu0
      %v662 = vadd.f32 0.0, %v661
      %v663 = vpop.f32.mrb[0].mxu0
      %664 = vmatprep.mubr.bf16.mxu0 0
      %665 = vmatmul.mubr.bf16.gmra.mrb[0].mxu0 %v454
      %v666 = vpop.f32.mrb[0].mxu0
      %v667 = vadd.f32 0.0, %v666
      %v668 = vpop.f32.mrb[0].mxu0
      %v669 = vpop.f32.mrb[0].mxu0
      %v670 = vadd.f32 0.0, %v669
      %v671 = vpop.f32.mrb[0].mxu0
      %672 = vmatprep.mubr.bf16.mxu0 0
      %673 = vmatmul.mubr.bf16.gmra.mrb[0].mxu0 %v455
      %v674 = vpop.f32.mrb[0].mxu0
      %v675 = vadd.f32 0.0, %v674
      %v676 = vpop.f32.mrb[0].mxu0
      %v677 = vpop.f32.mrb[0].mxu0
      %v678 = vadd.f32 0.0, %v677
      %v679 = vpop.f32.mrb[0].mxu0
      %680 = vdwg.mxu0
      %v681 = vadd.f32 %v296, %v555
      %v682 = vadd.f32 %v297, %v558
      %v683 = vadd.f32 %v298, %v563
      %v684 = vadd.f32 %v299, %v566
      %v685 = vadd.f32 %v300, %v571
      %v686 = vadd.f32 %v301, %v574
      %v687 = vadd.f32 %v302, %v579
      %v688 = vadd.f32 %v303, %v582
      %v689 = vadd.f32 %v304, %v587
      %v690 = vadd.f32 %v305, %v590
      %v691 = vadd.f32 %v306, %v595
      %v692 = vadd.f32 %v307, %v598
      %v693 = vadd.f32 %v308, %v603
      %v694 = vadd.f32 %v309, %v606
      %v695 = vadd.f32 %v310, %v611
      %v696 = vadd.f32 %v311, %v614
      %v697 = vadd.f32 %v312, %v619
      %v698 = vadd.f32 %v313, %v622
      %v699 = vadd.f32 %v314, %v627
      %v700 = vadd.f32 %v315, %v630
      %v701 = vadd.f32 %v316, %v635
      %v702 = vadd.f32 %v317, %v638
      %v703 = vadd.f32 %v318, %v643
      %v704 = vadd.f32 %v319, %v646
      %v705 = vadd.f32 %v320, %v651
      %v706 = vadd.f32 %v321, %v654
      %v707 = vadd.f32 %v322, %v659
      %v708 = vadd.f32 %v323, %v662
      %v709 = vadd.f32 %v324, %v667
      %v710 = vadd.f32 %v325, %v670
      %v711 = vadd.f32 %v326, %v675
      %v712 = vadd.f32 %v327, %v678
      %713 = vst [vmem:[#allocation2] sm:$0xff] %v681
      %714 = vst [vmem:[#allocation2 + $0x8] sm:$0xff] %v682
      %715 = vst [vmem:[#allocation2 + $0x10] sm:$0xff] %v683
      %716 = vst [vmem:[#allocation2 + $0x18] sm:$0xff] %v684
      %717 = vst [vmem:[#allocation2 + $0x20] sm:$0xff] %v685
      %718 = vst [vmem:[#allocation2 + $0x28] sm:$0xff] %v686
      %719 = vst [vmem:[#allocation2 + $0x30] sm:$0xff] %v687
      %720 = vst [vmem:[#allocation2 + $0x38] sm:$0xff] %v688
      %721 = vst [vmem:[#allocation2 + $0x40] sm:$0xff] %v689
      %722 = vst [vmem:[#allocation2 + $0x48] sm:$0xff] %v690
      %723 = vst [vmem:[#allocation2 + $0x50] sm:$0xff] %v691
      %724 = vst [vmem:[#allocation2 + $0x58] sm:$0xff] %v692
      %725 = vst [vmem:[#allocation2 + $0x60] sm:$0xff] %v693
      %726 = vst [vmem:[#allocation2 + $0x68] sm:$0xff] %v694
      %727 = vst [vmem:[#allocation2 + $0x70] sm:$0xff] %v695
      %728 = vst [vmem:[#allocation2 + $0x78] sm:$0xff] %v696
      %729 = vst [vmem:[#allocation2 + $0x80] sm:$0xff] %v697
      %730 = vst [vmem:[#allocation2 + $0x88] sm:$0xff] %v698
      %731 = vst [vmem:[#allocation2 + $0x90] sm:$0xff] %v699
      %732 = vst [vmem:[#allocation2 + $0x98] sm:$0xff] %v700
      %733 = vst [vmem:[#allocation2 + $0xa0] sm:$0xff] %v701
      %734 = vst [vmem:[#allocation2 + $0xa8] sm:$0xff] %v702
      %735 = vst [vmem:[#allocation2 + $0xb0] sm:$0xff] %v703
      %736 = vst [vmem:[#allocation2 + $0xb8] sm:$0xff] %v704
      %737 = vst [vmem:[#allocation2 + $0xc0] sm:$0xff] %v705
      %738 = vst [vmem:[#allocation2 + $0xc8] sm:$0xff] %v706
      %739 = vst [vmem:[#allocation2 + $0xd0] sm:$0xff] %v707
      %740 = vst [vmem:[#allocation2 + $0xd8] sm:$0xff] %v708
      %741 = vst [vmem:[#allocation2 + $0xe0] sm:$0xff] %v709
      %742 = vst [vmem:[#allocation2 + $0xe8] sm:$0xff] %v710
      %743 = vst [vmem:[#allocation2 + $0xf0] sm:$0xff] %v711
      %744 = vst [vmem:[#allocation2 + $0xf8] sm:$0xff] %v712
      // Predicated region
      $region37: #{bottleneck_forward.3} parent=31 // pred_check
        %p745 = pneg %p260
      $region38: #{bottleneck_forward.3} parent=31 // pred_check_branch
        %747 = sbr.rel (%p745) target = $region40
      $region39: #{bottleneck_forward.3} parent=31 // pred_region
        %v748 = vld [vmem:[#allocation2] sm:$0xff]
        %v749 = vld [vmem:[#allocation2 + $0x8] sm:$0xff]
        %v750 = vld [vmem:[#allocation2 + $0x10] sm:$0xff]
        %v751 = vld [vmem:[#allocation2 + $0x18] sm:$0xff]
        %v752 = vld [vmem:[#allocation2 + $0x20] sm:$0xff]
        %v753 = vld [vmem:[#allocation2 + $0x28] sm:$0xff]
        %v754 = vld [vmem:[#allocation2 + $0x30] sm:$0xff]
        %v755 = vld [vmem:[#allocation2 + $0x38] sm:$0xff]
        %v756 = vld [vmem:[#allocation2 + $0x40] sm:$0xff]
        %v757 = vld [vmem:[#allocation2 + $0x48] sm:$0xff]
        %v758 = vld [vmem:[#allocation2 + $0x50] sm:$0xff]
        %v759 = vld [vmem:[#allocation2 + $0x58] sm:$0xff]
        %v760 = vld [vmem:[#allocation2 + $0x60] sm:$0xff]
        %v761 = vld [vmem:[#allocation2 + $0x68] sm:$0xff]
        %v762 = vld [vmem:[#allocation2 + $0x70] sm:$0xff]
        %v763 = vld [vmem:[#allocation2 + $0x78] sm:$0xff]
        %v764 = vld [vmem:[#allocation2 + $0x80] sm:$0xff]
        %v765 = vld [vmem:[#allocation2 + $0x88] sm:$0xff]
        %v766 = vld [vmem:[#allocation2 + $0x90] sm:$0xff]
        %v767 = vld [vmem:[#allocation2 + $0x98] sm:$0xff]
        %v768 = vld [vmem:[#allocation2 + $0xa0] sm:$0xff]
        %v769 = vld [vmem:[#allocation2 + $0xa8] sm:$0xff]
        %v770 = vld [vmem:[#allocation2 + $0xb0] sm:$0xff]
        %v771 = vld [vmem:[#allocation2 + $0xb8] sm:$0xff]
        %v772 = vld [vmem:[#allocation2 + $0xc0] sm:$0xff]
        %v773 = vld [vmem:[#allocation2 + $0xc8] sm:$0xff]
        %v774 = vld [vmem:[#allocation2 + $0xd0] sm:$0xff]
        %v775 = vld [vmem:[#allocation2 + $0xd8] sm:$0xff]
        %v776 = vld [vmem:[#allocation2 + $0xe0] sm:$0xff]
        %v777 = vld [vmem:[#allocation2 + $0xe8] sm:$0xff]
        %v778 = vld [vmem:[#allocation2 + $0xf0] sm:$0xff]
        %v779 = vld [vmem:[#allocation2 + $0xf8] sm:$0xff]
        %v780 = vld [vmem:[%s249] sm:$0x1]
        %v782 = vlaneseq
        %v783 = vshrl.u32 %v782, 7
        %v784 = vsub.s32 0, %v783
        %v785 = vrot.slane %v780, %v784
        %v787 = vadd.f32 %v748, %v785
        %v788 = vadd.f32 %v749, %v785
        %v789 = vadd.f32 %v750, %v785
        %v790 = vadd.f32 %v751, %v785
        %v791 = vadd.f32 %v752, %v785
        %v792 = vadd.f32 %v753, %v785
        %v793 = vadd.f32 %v754, %v785
        %v794 = vadd.f32 %v755, %v785
        %v795 = vadd.f32 %v756, %v785
        %v796 = vadd.f32 %v757, %v785
        %v797 = vadd.f32 %v758, %v785
        %v798 = vadd.f32 %v759, %v785
        %v799 = vadd.f32 %v760, %v785
        %v800 = vadd.f32 %v761, %v785
        %v801 = vadd.f32 %v762, %v785
        %v802 = vadd.f32 %v763, %v785
        %v803 = vadd.f32 %v764, %v785
        %v804 = vadd.f32 %v765, %v785
        %v805 = vadd.f32 %v766, %v785
        %v806 = vadd.f32 %v767, %v785
        %v807 = vadd.f32 %v768, %v785
        %v808 = vadd.f32 %v769, %v785
        %v809 = vadd.f32 %v770, %v785
        %v810 = vadd.f32 %v771, %v785
        %v811 = vadd.f32 %v772, %v785
        %v812 = vadd.f32 %v773, %v785
        %v813 = vadd.f32 %v774, %v785
        %v814 = vadd.f32 %v775, %v785
        %v815 = vadd.f32 %v776, %v785
        %v816 = vadd.f32 %v777, %v785
        %v817 = vadd.f32 %v778, %v785
        %v818 = vadd.f32 %v779, %v785
        %v819 = vmax.f32 %v787, 0.0
        %v820 = vmax.f32 %v788, 0.0
        %v821 = vmax.f32 %v789, 0.0
        %v822 = vmax.f32 %v790, 0.0
        %v823 = vmax.f32 %v791, 0.0
        %v824 = vmax.f32 %v792, 0.0
        %v825 = vmax.f32 %v793, 0.0
        %v826 = vmax.f32 %v794, 0.0
        %v827 = vmax.f32 %v795, 0.0
        %v828 = vmax.f32 %v796, 0.0
        %v829 = vmax.f32 %v797, 0.0
        %v830 = vmax.f32 %v798, 0.0
        %v831 = vmax.f32 %v799, 0.0
        %v832 = vmax.f32 %v800, 0.0
        %v833 = vmax.f32 %v801, 0.0
        %v834 = vmax.f32 %v802, 0.0
        %v835 = vmax.f32 %v803, 0.0
        %v836 = vmax.f32 %v804, 0.0
        %v837 = vmax.f32 %v805, 0.0
        %v838 = vmax.f32 %v806, 0.0
        %v839 = vmax.f32 %v807, 0.0
        %v840 = vmax.f32 %v808, 0.0
        %v841 = vmax.f32 %v809, 0.0
        %v842 = vmax.f32 %v810, 0.0
        %v843 = vmax.f32 %v811, 0.0
        %v844 = vmax.f32 %v812, 0.0
        %v845 = vmax.f32 %v813, 0.0
        %v846 = vmax.f32 %v814, 0.0
        %v847 = vmax.f32 %v815, 0.0
        %v848 = vmax.f32 %v816, 0.0
        %v849 = vmax.f32 %v817, 0.0
        %v850 = vmax.f32 %v818, 0.0
        %v851 = vpack.c.bf16 %v820, %v819
        %v852 = vpack.c.bf16 %v822, %v821
        %v853 = vpack.c.bf16 %v824, %v823
        %v854 = vpack.c.bf16 %v826, %v825
        %v855 = vpack.c.bf16 %v828, %v827
        %v856 = vpack.c.bf16 %v830, %v829
        %v857 = vpack.c.bf16 %v832, %v831
        %v858 = vpack.c.bf16 %v834, %v833
        %v859 = vpack.c.bf16 %v836, %v835
        %v860 = vpack.c.bf16 %v838, %v837
        %v861 = vpack.c.bf16 %v840, %v839
        %v862 = vpack.c.bf16 %v842, %v841
        %v863 = vpack.c.bf16 %v844, %v843
        %v864 = vpack.c.bf16 %v846, %v845
        %v865 = vpack.c.bf16 %v848, %v847
        %v866 = vpack.c.bf16 %v850, %v849
        %v883 = vunpack.c.l.b16 %v851
        %v884 = vunpack.c.h.b16 %v851
        %v885 = vunpack.c.l.b16 %v852
        %v886 = vunpack.c.h.b16 %v852
        %v887 = vunpack.c.l.b16 %v853
        %v888 = vunpack.c.h.b16 %v853
        %v889 = vunpack.c.l.b16 %v854
        %v890 = vunpack.c.h.b16 %v854
        %v891 = vunpack.c.l.b16 %v855
        %v892 = vunpack.c.h.b16 %v855
        %v893 = vunpack.c.l.b16 %v856
        %v894 = vunpack.c.h.b16 %v856
        %v895 = vunpack.c.l.b16 %v857
        %v896 = vunpack.c.h.b16 %v857
        %v897 = vunpack.c.l.b16 %v858
        %v898 = vunpack.c.h.b16 %v858
        %v899 = vunpack.c.l.b16 %v859
        %v900 = vunpack.c.h.b16 %v859
        %v901 = vunpack.c.l.b16 %v860
        %v902 = vunpack.c.h.b16 %v860
        %v903 = vunpack.c.l.b16 %v861
        %v904 = vunpack.c.h.b16 %v861
        %v905 = vunpack.c.l.b16 %v862
        %v906 = vunpack.c.h.b16 %v862
        %v907 = vunpack.c.l.b16 %v863
        %v908 = vunpack.c.h.b16 %v863
        %v909 = vunpack.c.l.b16 %v864
        %v910 = vunpack.c.h.b16 %v864
        %v911 = vunpack.c.l.b16 %v865
        %v912 = vunpack.c.h.b16 %v865
        %v913 = vunpack.c.l.b16 %v866
        %v914 = vunpack.c.h.b16 %v866
        %v915 = vpack.c.b16 %v883, %v883
        %v916 = vpack.c.b16 %v884, %v884
        %v917 = vpack.c.b16 %v885, %v885
        %v918 = vpack.c.b16 %v886, %v886
        %v919 = vpack.c.b16 %v887, %v887
        %v920 = vpack.c.b16 %v888, %v888
        %v921 = vpack.c.b16 %v889, %v889
        %v922 = vpack.c.b16 %v890, %v890
        %v923 = vpack.c.b16 %v891, %v891
        %v924 = vpack.c.b16 %v892, %v892
        %v925 = vpack.c.b16 %v893, %v893
        %v926 = vpack.c.b16 %v894, %v894
        %v927 = vpack.c.b16 %v895, %v895
        %v928 = vpack.c.b16 %v896, %v896
        %v929 = vpack.c.b16 %v897, %v897
        %v930 = vpack.c.b16 %v898, %v898
        %v931 = vpack.c.b16 %v899, %v899
        %v932 = vpack.c.b16 %v900, %v900
        %v933 = vpack.c.b16 %v901, %v901
        %v934 = vpack.c.b16 %v902, %v902
        %v935 = vpack.c.b16 %v903, %v903
        %v936 = vpack.c.b16 %v904, %v904
        %v937 = vpack.c.b16 %v905, %v905
        %v938 = vpack.c.b16 %v906, %v906
        %v939 = vpack.c.b16 %v907, %v907
        %v940 = vpack.c.b16 %v908, %v908
        %v941 = vpack.c.b16 %v909, %v909
        %v942 = vpack.c.b16 %v910, %v910
        %v943 = vpack.c.b16 %v911, %v911
        %v944 = vpack.c.b16 %v912, %v912
        %v945 = vpack.c.b16 %v913, %v913
        %v946 = vpack.c.b16 %v914, %v914
        %979 = vst [vmem:[%s257] sm:$0xf] %v915
        %980 = vst [vmem:[%s257 + $0x4] sm:$0xf] %v916
        %981 = vst [vmem:[%s257 + $0x8] sm:$0xf] %v917
        %982 = vst [vmem:[%s257 + $0xc] sm:$0xf] %v918
        %983 = vst [vmem:[%s257 + $0x10] sm:$0xf] %v919
        %984 = vst [vmem:[%s257 + $0x14] sm:$0xf] %v920
        %985 = vst [vmem:[%s257 + $0x18] sm:$0xf] %v921
        %986 = vst [vmem:[%s257 + $0x1c] sm:$0xf] %v922
        %987 = vst [vmem:[%s257 + $0x20] sm:$0xf] %v923
        %988 = vst [vmem:[%s257 + $0x24] sm:$0xf] %v924
        %989 = vst [vmem:[%s257 + $0x28] sm:$0xf] %v925
        %990 = vst [vmem:[%s257 + $0x2c] sm:$0xf] %v926
        %991 = vst [vmem:[%s257 + $0x30] sm:$0xf] %v927
        %992 = vst [vmem:[%s257 + $0x34] sm:$0xf] %v928
        %993 = vst [vmem:[%s257 + $0x38] sm:$0xf] %v929
        %994 = vst [vmem:[%s257 + $0x3c] sm:$0xf] %v930
        %995 = vst [vmem:[%s257 + $0x40] sm:$0xf] %v931
        %996 = vst [vmem:[%s257 + $0x44] sm:$0xf] %v932
        %997 = vst [vmem:[%s257 + $0x48] sm:$0xf] %v933
        %998 = vst [vmem:[%s257 + $0x4c] sm:$0xf] %v934
        %999 = vst [vmem:[%s257 + $0x50] sm:$0xf] %v935
        %1000 = vst [vmem:[%s257 + $0x54] sm:$0xf] %v936
        %1001 = vst [vmem:[%s257 + $0x58] sm:$0xf] %v937
        %1002 = vst [vmem:[%s257 + $0x5c] sm:$0xf] %v938
        %1003 = vst [vmem:[%s257 + $0x60] sm:$0xf] %v939
        %1004 = vst [vmem:[%s257 + $0x64] sm:$0xf] %v940
        %1005 = vst [vmem:[%s257 + $0x68] sm:$0xf] %v941
        %1006 = vst [vmem:[%s257 + $0x6c] sm:$0xf] %v942
        %1007 = vst [vmem:[%s257 + $0x70] sm:$0xf] %v943
        %1008 = vst [vmem:[%s257 + $0x74] sm:$0xf] %v944
        %1009 = vst [vmem:[%s257 + $0x78] sm:$0xf] %v945
        %1010 = vst [vmem:[%s257 + $0x7c] sm:$0xf] %v946
      $region40: #{bottleneck_forward.3} parent=31 // pred_fallthru
        _
      %s1011 = smul.u32 32, %s19
      %p1012 = scmp.lt.s32.totalorder %s1011, 63
      %s1013 = scalar_select %p1012, %s1011, 63
      %p1014 = scmp.lt.s32.totalorder %s20, 0
      %s1015 = scalar_select %p1014, %s20, 0
      %s1016 = sadd.s32 %s1015, %s1013
      %s1017 = smul.addr %s1016, 4
      %s1018 = scalar_lea.vmem %s3, %s1017
      // Predicated region
      $region41: #{bottleneck_forward.3} parent=31 // pred_check
        %p1019 = pneg %p135
      $region42: #{bottleneck_forward.3} parent=31 // pred_check_branch
        %1021 = sbr.rel (%p1019) target = $region44
      $region43: #{bottleneck_forward.3} parent=31 // pred_region
        %s1022 = smul.u32 32, %s19
      $region44: #{bottleneck_forward.3} parent=31 // pred_fallthru
        _
    $region32: #{bottleneck_forward.3} parent=5 // pred_fallthru
      _
    %p1023 = scmp.le.s32.totalorder 2, %s9
    // Predicated region
    $region45: #{bottleneck_forward.3} parent=5 // pred_check
      %p1024 = pneg %p1023
    $region46: #{bottleneck_forward.3} parent=5 // pred_check_branch
      %1026 = sbr.rel (%p1024) target = $region48
    $region47: #{bottleneck_forward.3} parent=5 // pred_region
      %s1027 = ssub.s32 %s9, 2
      // Predicated region
      $region49: #{bottleneck_forward.3} parent=47 // pred_check
        %p1028 = pneg %p141
      $region50: #{bottleneck_forward.3} parent=47 // pred_check_branch
        %1030 = sbr.rel (%p1028) target = $region52
      $region51: #{bottleneck_forward.3} parent=47 // pred_region
        %s1031 = smul.u32 32, %s22
        %p1032 = scmp.lt.s32.totalorder %s1031, 63
        %s1033 = scalar_select %p1032, %s1031, 63
        %p1034 = scmp.lt.s32.totalorder %s23, 0
        %s1035 = scalar_select %p1034, %s23, 0
        %s1036 = sadd.s32 %s1035, %s1033
        %s1037 = smul.addr %s1036, 4
        %s1038 = scalar_lea.vmem %s3, %s1037
      $region52: #{bottleneck_forward.3} parent=47 // pred_fallthru
        _
    $region48: #{bottleneck_forward.3} parent=5 // pred_fallthru
      _
  $region6: #{bottleneck_forward.3} parent=0 // loop_footer
    %s13 = sadd.s32 1, %s9
  $region7: #{bottleneck_forward.3} parent=0 // loop_footer_branch
    %8 = sbr.rel target = $region3
  $region8: #{bottleneck_forward.3} parent=0 // loop_exit
    _

// kernel: bottleneck_forward.5
$region0: #{bottleneck_forward.5}
  #allocation0 [shape = 'u32[]', space=smem, size = 0x4, offset = 0x4, fixed_abs, tag = 'smem constant byte address 0x4 - core index']
  #allocation1 [shape = 'u32[144,128]{1,0:T(1,128)}', space=vmem, size = 0x12000, scoped, tag = 'internal scratch']
  %s0 = inlined_call_operand.vmem [shape: bf16[512,128], index: 0, kind: input, shape index: {}]
  %s1 = inlined_call_operand.vmem [shape: bf16[128,128], index: 1, kind: input, shape index: {}]
  %s2 = inlined_call_operand.vmem [shape: bf16[512,128], index: 2, kind: input, shape index: {}]
  %s3 = inlined_call_operand.vmem [shape: bf16[128,128], index: 3, kind: input, shape index: {}]
  %s4 = inlined_call_operand.vmem [shape: f32[1,128], index: 4, kind: input, shape index: {}]
  %s5 = inlined_call_operand.vmem [shape: f32[512,128], index: 5, kind: output, shape index: {0}]
  %s6 = inlined_call_operand.vmem [shape: f32[512,128], index: 6, kind: output, shape index: {1}]
  %7 = xla_tuple %s5, %s6
  %s8 = sld [smem:[#allocation0]]
  $region61: #{bottleneck_forward.5} parent=0
    _
  %s10 = ssub.s32 1, %s8
  %s11 = scalar_select 0, %s10, %s8
  loop: start=0, step=1, limit=4
  $region2: #{bottleneck_forward.5} parent=0 // loop_pre_header
    _
  $region3: #{bottleneck_forward.5} parent=0 // loop_header
    %s13 = sphi 0, %s17
    %p14 = scmp.ge.s32.totalorder %s13, 4
    %s20 = sphi 0, %s32
    %s21 = sphi 0, %s28
    %s22 = sphi 0, %s20
    %s23 = sphi 0, %s21
    %s24 = sphi 0, %s22
    %s25 = sphi 0, %s23
    %s35 = sphi 0, %s37
    %s38 = sphi 0, %s35
    %s39 = sphi 0, %s38
    %s55 = sphi 0, %s39
    %s61 = sphi 0, %s63
    %s64 = sphi 0, %s61
    %s65 = sphi 0, %s64
    %s81 = sphi 0, %s65
    %s87 = sphi 0, %s89
    %s90 = sphi 0, %s87
    %s91 = sphi 0, %s90
    %s107 = sphi 0, %s91
    %s113 = sphi 0, %s115
    %s116 = sphi 0, %s113
    %s117 = sphi 0, %s116
    %s133 = sphi 0, %s117
    %s139 = sphi 0, %s141
    %s142 = sphi 0, %s139
    %s143 = sphi 0, %s142
    %s159 = sphi 0, %s143
    %s167 = sphi 0, %s169
    %s170 = sphi 0, %s167
    %s171 = sphi 0, %s170
    %s187 = sphi 0, %s171
    %s195 = sphi 0, %s197
    %s198 = sphi 0, %s195
    %s199 = sphi 0, %s198
    %s215 = sphi 0, %s199
  $region4: #{bottleneck_forward.5} parent=0 // loop_header_branch
    %16 = sbr.rel (%p14) target = $region8
  $region5: #{bottleneck_forward.5} parent=0 // loop_body
    %s18 = ssub.s32 %s13, 1
    %s19 = ssub.s32 %s13, 2
    %s26 = sadd.s32 1, %s21
    %p27 = scmp.ge.s32.totalorder %s26, 1
    %s28 = scalar_select %p27, 0, %s26
    %s29 = sadd.s32 1, %s20
    %s30 = scalar_select %p27, %s29, %s20
    %p31 = scmp.ge.s32.totalorder %s30, 2
    %s32 = scalar_select %p31, 0, %s30
    %s33 = ssub.s32 %s20, %s32
    %p34 = scmp.eq.s32.totalorder %s33, 0
    %s36 = sadd.s32 %s35, 1
    %s37 = scalar_select %p34, %s35, %s36
    %p40 = pneg %p34
    %p41 = scmp.eq.s32.totalorder %s13, 1
    %p42 = por %p40, %p41
    %p43 = scmp.ne.s32.totalorder %s35, %s38
    %p44 = scmp.eq.s32.totalorder %s13, 0
    %p45 = por %p43, %p44
    %p46 = scmp.ne.s32.totalorder %s35, %s38
    %p47 = scmp.eq.s32.totalorder %s18, 1
    %p48 = por %p46, %p47
    %p49 = scmp.ne.s32.totalorder %s38, %s39
    %p50 = scmp.eq.s32.totalorder %s18, 0
    %p51 = por %p49, %p50
    %p52 = scmp.ne.s32.totalorder %s38, %s39
    %p53 = scmp.eq.s32.totalorder %s19, 1
    %p54 = por %p52, %p53
    %p56 = scmp.ne.s32.totalorder %s39, %s55
    %p57 = scmp.eq.s32.totalorder %s19, 0
    %p58 = por %p56, %p57
    %s59 = ssub.s32 %s21, %s28
    %p60 = scmp.eq.s32.totalorder %s59, 0
    %s62 = sadd.s32 %s61, 1
    %s63 = scalar_select %p60, %s61, %s62
    %p66 = pneg %p60
    %p67 = scmp.eq.s32.totalorder %s13, 1
    %p68 = por %p66, %p67
    %p69 = scmp.ne.s32.totalorder %s61, %s64
    %p70 = scmp.eq.s32.totalorder %s13, 0
    %p71 = por %p69, %p70
    %p72 = scmp.ne.s32.totalorder %s61, %s64
    %p73 = scmp.eq.s32.totalorder %s18, 1
    %p74 = por %p72, %p73
    %p75 = scmp.ne.s32.totalorder %s64, %s65
    %p76 = scmp.eq.s32.totalorder %s18, 0
    %p77 = por %p75, %p76
    %p78 = scmp.ne.s32.totalorder %s64, %s65
    %p79 = scmp.eq.s32.totalorder %s19, 1
    %p80 = por %p78, %p79
    %p82 = scmp.ne.s32.totalorder %s65, %s81
    %p83 = scmp.eq.s32.totalorder %s19, 0
    %p84 = por %p82, %p83
    %s85 = ssub.s32 %s20, %s32
    %p86 = scmp.eq.s32.totalorder %s85, 0
    %s88 = sadd.s32 %s87, 1
    %s89 = scalar_select %p86, %s87, %s88
    %p92 = pneg %p86
    %p93 = scmp.eq.s32.totalorder %s13, 1
    %p94 = por %p92, %p93
    %p95 = scmp.ne.s32.totalorder %s87, %s90
    %p96 = scmp.eq.s32.totalorder %s13, 0
    %p97 = por %p95, %p96
    %p98 = scmp.ne.s32.totalorder %s87, %s90
    %p99 = scmp.eq.s32.totalorder %s18, 1
    %p100 = por %p98, %p99
    %p101 = scmp.ne.s32.totalorder %s90, %s91
    %p102 = scmp.eq.s32.totalorder %s18, 0
    %p103 = por %p101, %p102
    %p104 = scmp.ne.s32.totalorder %s90, %s91
    %p105 = scmp.eq.s32.totalorder %s19, 1
    %p106 = por %p104, %p105
    %p108 = scmp.ne.s32.totalorder %s91, %s107
    %p109 = scmp.eq.s32.totalorder %s19, 0
    %p110 = por %p108, %p109
    %s111 = ssub.s32 %s21, %s28
    %p112 = scmp.eq.s32.totalorder %s111, 0
    %s114 = sadd.s32 %s113, 1
    %s115 = scalar_select %p112, %s113, %s114
    %p118 = pneg %p112
    %p119 = scmp.eq.s32.totalorder %s13, 1
    %p120 = por %p118, %p119
    %p121 = scmp.ne.s32.totalorder %s113, %s116
    %p122 = scmp.eq.s32.totalorder %s13, 0
    %p123 = por %p121, %p122
    %p124 = scmp.ne.s32.totalorder %s113, %s116
    %p125 = scmp.eq.s32.totalorder %s18, 1
    %p126 = por %p124, %p125
    %p127 = scmp.ne.s32.totalorder %s116, %s117
    %p128 = scmp.eq.s32.totalorder %s18, 0
    %p129 = por %p127, %p128
    %p130 = scmp.ne.s32.totalorder %s116, %s117
    %p131 = scmp.eq.s32.totalorder %s19, 1
    %p132 = por %p130, %p131
    %p134 = scmp.ne.s32.totalorder %s117, %s133
    %p135 = scmp.eq.s32.totalorder %s19, 0
    %p136 = por %p134, %p135
    %s137 = ssub.s32 %s21, %s28
    %p138 = scmp.eq.s32.totalorder %s137, 0
    %s140 = sadd.s32 %s139, 1
    %s141 = scalar_select %p138, %s139, %s140
    %p144 = pneg %p138
    %p145 = scmp.eq.s32.totalorder %s13, 1
    %p146 = por %p144, %p145
    %p147 = scmp.ne.s32.totalorder %s139, %s142
    %p148 = scmp.eq.s32.totalorder %s13, 0
    %p149 = por %p147, %p148
    %p150 = scmp.ne.s32.totalorder %s139, %s142
    %p151 = scmp.eq.s32.totalorder %s18, 1
    %p152 = por %p150, %p151
    %p153 = scmp.ne.s32.totalorder %s142, %s143
    %p154 = scmp.eq.s32.totalorder %s18, 0
    %p155 = por %p153, %p154
    %p156 = scmp.ne.s32.totalorder %s142, %s143
    %p157 = scmp.eq.s32.totalorder %s19, 1
    %p158 = por %p156, %p157
    %p160 = scmp.ne.s32.totalorder %s143, %s159
    %p161 = scmp.eq.s32.totalorder %s19, 0
    %p162 = por %p160, %p161
    %s163 = ssub.s32 %s20, %s32
    %s164 = ssub.s32 %s21, %s28
    %s165 = sor.u32 %s163, %s164
    %p166 = scmp.eq.s32.totalorder %s165, 0
    %s168 = sadd.s32 %s167, 1
    %s169 = scalar_select %p166, %s167, %s168
    %p172 = pneg %p166
    %p173 = scmp.eq.s32.totalorder %s13, 1
    %p174 = por %p172, %p173
    %p175 = scmp.ne.s32.totalorder %s167, %s170
    %p176 = scmp.eq.s32.totalorder %s13, 0
    %p177 = por %p175, %p176
    %p178 = scmp.ne.s32.totalorder %s167, %s170
    %p179 = scmp.eq.s32.totalorder %s18, 1
    %p180 = por %p178, %p179
    %p181 = scmp.ne.s32.totalorder %s170, %s171
    %p182 = scmp.eq.s32.totalorder %s18, 0
    %p183 = por %p181, %p182
    %p184 = scmp.ne.s32.totalorder %s170, %s171
    %p185 = scmp.eq.s32.totalorder %s19, 1
    %p186 = por %p184, %p185
    %p188 = scmp.ne.s32.totalorder %s171, %s187
    %p189 = scmp.eq.s32.totalorder %s19, 0
    %p190 = por %p188, %p189
    %s191 = ssub.s32 %s20, %s32
    %s192 = ssub.s32 %s21, %s28
    %s193 = sor.u32 %s191, %s192
    %p194 = scmp.eq.s32.totalorder %s193, 0
    %s196 = sadd.s32 %s195, 1
    %s197 = scalar_select %p194, %s195, %s196
    %p200 = pneg %p194
    %p201 = scmp.eq.s32.totalorder %s13, 1
    %p202 = por %p200, %p201
    %p203 = scmp.ne.s32.totalorder %s195, %s198
    %p204 = scmp.eq.s32.totalorder %s13, 0
    %p205 = por %p203, %p204
    %p206 = scmp.ne.s32.totalorder %s195, %s198
    %p207 = scmp.eq.s32.totalorder %s18, 1
    %p208 = por %p206, %p207
    %p209 = scmp.ne.s32.totalorder %s198, %s199
    %p210 = scmp.eq.s32.totalorder %s18, 0
    %p211 = por %p209, %p210
    %p212 = scmp.ne.s32.totalorder %s198, %s199
    %p213 = scmp.eq.s32.totalorder %s19, 1
    %p214 = por %p212, %p213
    %p216 = scmp.ne.s32.totalorder %s199, %s215
    %p217 = scmp.eq.s32.totalorder %s19, 0
    %p218 = por %p216, %p217
    %p219 = scmp.le.s32.totalorder 1, %s13
    %p220 = scmp.lt.s32.totalorder %s13, 3
    %p221 = pnand %p219, %p220
    %p222 = pneg %p221
    // Predicated region
    $region9: #{bottleneck_forward.5} parent=5 // pred_check
      _
    $region10: #{bottleneck_forward.5} parent=5 // pred_check_branch
      %224 = sbr.rel (%p221) target = $region12
    $region11: #{bottleneck_forward.5} parent=5 // pred_region
      %s225 = ssub.s32 %s13, 1
      // Predicated region
      $region13: #{bottleneck_forward.5} parent=11 // pred_check
        %p226 = pneg %p77
      $region14: #{bottleneck_forward.5} parent=11 // pred_check_branch
        %228 = sbr.rel (%p226) target = $region16
      $region15: #{bottleneck_forward.5} parent=11 // pred_region
        %p229 = scmp.lt.s32.totalorder %s23, 0
        %s230 = scalar_select %p229, %s23, 0
        %s231 = smul.addr %s230, 4
        %s232 = scalar_lea.vmem %s1, %s231
      $region16: #{bottleneck_forward.5} parent=11 // pred_fallthru
        _
      // Predicated region
      $region17: #{bottleneck_forward.5} parent=11 // pred_check
        %p233 = pneg %p129
      $region18: #{bottleneck_forward.5} parent=11 // pred_check_branch
        %235 = sbr.rel (%p233) target = $region20
      $region19: #{bottleneck_forward.5} parent=11 // pred_region
        %p236 = scmp.lt.s32.totalorder %s23, 0
        %s237 = scalar_select %p236, %s23, 0
        %s238 = smul.addr %s237, 4
        %s239 = scalar_lea.vmem %s3, %s238
      $region20: #{bottleneck_forward.5} parent=11 // pred_fallthru
        _
      // Predicated region
      $region21: #{bottleneck_forward.5} parent=11 // pred_check
        %p240 = pneg %p155
      $region22: #{bottleneck_forward.5} parent=11 // pred_check_branch
        %242 = sbr.rel (%p240) target = $region24
      $region23: #{bottleneck_forward.5} parent=11 // pred_region
        %p243 = scmp.lt.s32.totalorder %s23, 0
        %s244 = scalar_select %p243, %s23, 0
        %s245 = scalar_lea.vmem %s4, %s244
      $region24: #{bottleneck_forward.5} parent=11 // pred_fallthru
        _
    $region12: #{bottleneck_forward.5} parent=5 // pred_fallthru
      _
    %p246 = scmp.lt.s32.totalorder %s13, 2
    // Predicated region
    $region25: #{bottleneck_forward.5} parent=5 // pred_check
      %p247 = pneg %p246
    $region26: #{bottleneck_forward.5} parent=5 // pred_check_branch
      %249 = sbr.rel (%p247) target = $region28
    $region27: #{bottleneck_forward.5} parent=5 // pred_region
      // Predicated region
      $region29: #{bottleneck_forward.5} parent=27 // pred_check
        %p250 = pneg %p45
      $region30: #{bottleneck_forward.5} parent=27 // pred_check_branch
        %252 = sbr.rel (%p250) target = $region32
      $region31: #{bottleneck_forward.5} parent=27 // pred_region
        %s253 = smul.u32 32, %s20
        %p254 = scmp.lt.s32.totalorder %s253, 63
        %s255 = scalar_select %p254, %s253, 63
        %s256 = smul.addr %s255, 4
        %s257 = scalar_lea.vmem %s0, %s256
        %s258 = smul.u32 32, %s20
      $region32: #{bottleneck_forward.5} parent=27 // pred_fallthru
        _
      // Predicated region
      $region33: #{bottleneck_forward.5} parent=27 // pred_check
        %p259 = pneg %p97
      $region34: #{bottleneck_forward.5} parent=27 // pred_check_branch
        %261 = sbr.rel (%p259) target = $region36
      $region35: #{bottleneck_forward.5} parent=27 // pred_region
        %s262 = smul.u32 32, %s20
        %p263 = scmp.lt.s32.totalorder %s262, 63
        %s264 = scalar_select %p263, %s262, 63
        %s265 = smul.addr %s264, 4
        %s266 = scalar_lea.vmem %s2, %s265
        %s267 = smul.u32 32, %s20
      $region36: #{bottleneck_forward.5} parent=27 // pred_fallthru
        _
    $region28: #{bottleneck_forward.5} parent=5 // pred_fallthru
      _
    %p268 = scmp.le.s32.totalorder 1, %s13
    %p269 = scmp.lt.s32.totalorder %s13, 3
    %p270 = pnand %p268, %p269
    %p271 = pneg %p270
    // Predicated region
    $region37: #{bottleneck_forward.5} parent=5 // pred_check
      _
    $region38: #{bottleneck_forward.5} parent=5 // pred_check_branch
      %273 = sbr.rel (%p270) target = $region40
    $region39: #{bottleneck_forward.5} parent=5 // pred_region
      %s274 = ssub.s32 %s13, 1
      %s275 = smul.u32 32, %s22
      %p276 = scmp.lt.s32.totalorder %s275, 63
      %s277 = scalar_select %p276, %s275, 63
      %s278 = smul.addr %s277, 4
      %s279 = scalar_lea.vmem %s0, %s278
      %p280 = pneg %p51
      %p281 = pneg %p48
      %p282 = scmp.lt.s32.totalorder %s23, 0
      %s283 = scalar_select %p282, %s23, 0
      %s284 = smul.addr %s283, 4
      %s285 = scalar_lea.vmem %s1, %s284
      %p286 = pneg %p77
      %p287 = pneg %p74
      %s288 = smul.u32 32, %s22
      %p289 = scmp.lt.s32.totalorder %s288, 63
      %s290 = scalar_select %p289, %s288, 63
      %s291 = smul.addr %s290, 4
      %s292 = scalar_lea.vmem %s2, %s291
      %p293 = pneg %p103
      %p294 = pneg %p100
      %p295 = scmp.lt.s32.totalorder %s23, 0
      %s296 = scalar_select %p295, %s23, 0
      %s297 = smul.addr %s296, 4
      %s298 = scalar_lea.vmem %s3, %s297
      %p299 = pneg %p129
      %p300 = pneg %p126
      %p301 = scmp.lt.s32.totalorder %s23, 0
      %s302 = scalar_select %p301, %s23, 0
      %s303 = scalar_lea.vmem %s4, %s302
      %p304 = pneg %p155
      %p305 = pneg %p152
      %p306 = pneg %p183
      %p307 = pneg %p180
      %s308 = smul.u32 32, %s22
      %p309 = scmp.lt.s32.totalorder %s308, 63
      %s310 = scalar_select %p309, %s308, 63
      %p311 = scmp.lt.s32.totalorder %s23, 0
      %s312 = scalar_select %p311, %s23, 0
      %s313 = sadd.s32 %s312, %s310
      %s314 = smul.addr %s313, 8
      %s315 = scalar_lea.vmem %s5, %s314
      %p316 = pneg %p211
      %p317 = pneg %p208
      %s318 = smul.u32 32, %s22
      %p319 = scmp.lt.s32.totalorder %s318, 63
      %s320 = scalar_select %p319, %s318, 63
      %p321 = scmp.lt.s32.totalorder %s23, 0
      %s322 = scalar_select %p321, %s23, 0
      %s323 = sadd.s32 %s322, %s320
      %s324 = smul.addr %s323, 8
      %s325 = scalar_lea.vmem %s6, %s324
      %s326 = smul.u32 32, %s22
      %p327 = scmp.lt.s32.totalorder %s326, 63
      %s328 = scalar_select %p327, %s326, 63
      %s329 = smul.addr %s328, 4
      %s330 = scalar_lea.vmem %s0, %s329
      %s331 = smul.u32 32, %s22
      %p332 = scmp.lt.s32.totalorder %s23, 0
      %s333 = scalar_select %p332, %s23, 0
      %s334 = smul.addr %s333, 4
      %s335 = scalar_lea.vmem %s1, %s334
      %s336 = smul.u32 32, %s22
      %p337 = scmp.lt.s32.totalorder %s336, 63
      %s338 = scalar_select %p337, %s336, 63
      %s339 = smul.addr %s338, 4
      %s340 = scalar_lea.vmem %s2, %s339
      %s341 = smul.u32 32, %s22
      %p342 = scmp.lt.s32.totalorder %s23, 0
      %s343 = scalar_select %p342, %s23, 0
      %s344 = smul.addr %s343, 4
      %s345 = scalar_lea.vmem %s3, %s344
      %p346 = scmp.lt.s32.totalorder %s23, 0
      %s347 = scalar_select %p346, %s23, 0
      %s348 = scalar_lea.vmem %s4, %s347
      %s349 = smul.u32 32, %s22
      %p350 = scmp.lt.s32.totalorder %s349, 63
      %s351 = scalar_select %p350, %s349, 63
      %p352 = scmp.lt.s32.totalorder %s23, 0
      %s353 = scalar_select %p352, %s23, 0
      %s354 = sadd.s32 %s353, %s351
      %s355 = smul.addr %s354, 8
      %s356 = scalar_lea.vmem %s5, %s355
      %s357 = smul.u32 32, %s22
      %s358 = smul.u32 32, %s22
      %p359 = scmp.lt.s32.totalorder %s358, 63
      %s360 = scalar_select %p359, %s358, 63
      %p361 = scmp.lt.s32.totalorder %s23, 0
      %s362 = scalar_select %p361, %s23, 0
      %s363 = sadd.s32 %s362, %s360
      %s364 = smul.addr %s363, 8
      %s365 = scalar_lea.vmem %s6, %s364
      %s366 = smul.u32 32, %s22
      %v368 = vld [vmem:[%s330] sm:$0xf]
      %v369 = vld [vmem:[%s330 + $0x4] sm:$0xf]
      %v370 = vld [vmem:[%s330 + $0x8] sm:$0xf]
      %v371 = vld [vmem:[%s330 + $0xc] sm:$0xf]
      %v372 = vld [vmem:[%s330 + $0x10] sm:$0xf]
      %v373 = vld [vmem:[%s330 + $0x14] sm:$0xf]
      %v374 = vld [vmem:[%s330 + $0x18] sm:$0xf]
      %v375 = vld [vmem:[%s330 + $0x1c] sm:$0xf]
      %v376 = vld [vmem:[%s330 + $0x20] sm:$0xf]
      %v377 = vld [vmem:[%s330 + $0x24] sm:$0xf]
      %v378 = vld [vmem:[%s330 + $0x28] sm:$0xf]
      %v379 = vld [vmem:[%s330 + $0x2c] sm:$0xf]
      %v380 = vld [vmem:[%s330 + $0x30] sm:$0xf]
      %v381 = vld [vmem:[%s330 + $0x34] sm:$0xf]
      %v382 = vld [vmem:[%s330 + $0x38] sm:$0xf]
      %v383 = vld [vmem:[%s330 + $0x3c] sm:$0xf]
      %v384 = vld [vmem:[%s330 + $0x40] sm:$0xf]
      %v385 = vld [vmem:[%s330 + $0x44] sm:$0xf]
      %v386 = vld [vmem:[%s330 + $0x48] sm:$0xf]
      %v387 = vld [vmem:[%s330 + $0x4c] sm:$0xf]
      %v388 = vld [vmem:[%s330 + $0x50] sm:$0xf]
      %v389 = vld [vmem:[%s330 + $0x54] sm:$0xf]
      %v390 = vld [vmem:[%s330 + $0x58] sm:$0xf]
      %v391 = vld [vmem:[%s330 + $0x5c] sm:$0xf]
      %v392 = vld [vmem:[%s330 + $0x60] sm:$0xf]
      %v393 = vld [vmem:[%s330 + $0x64] sm:$0xf]
      %v394 = vld [vmem:[%s330 + $0x68] sm:$0xf]
      %v395 = vld [vmem:[%s330 + $0x6c] sm:$0xf]
      %v396 = vld [vmem:[%s330 + $0x70] sm:$0xf]
      %v397 = vld [vmem:[%s330 + $0x74] sm:$0xf]
      %v398 = vld [vmem:[%s330 + $0x78] sm:$0xf]
      %v399 = vld [vmem:[%s330 + $0x7c] sm:$0xf]
      %v400 = vld [vmem:[%s335] sm:$0xf]
      %v401 = vld [vmem:[%s335 + $0x4] sm:$0xf]
      %v402 = vld [vmem:[%s335 + $0x8] sm:$0xf]
      %v403 = vld [vmem:[%s335 + $0xc] sm:$0xf]
      %v404 = vld [vmem:[%s335 + $0x10] sm:$0xf]
      %v405 = vld [vmem:[%s335 + $0x14] sm:$0xf]
      %v406 = vld [vmem:[%s335 + $0x18] sm:$0xf]
      %v407 = vld [vmem:[%s335 + $0x1c] sm:$0xf]
      %v408 = vld [vmem:[%s335 + $0x20] sm:$0xf]
      %v409 = vld [vmem:[%s335 + $0x24] sm:$0xf]
      %v410 = vld [vmem:[%s335 + $0x28] sm:$0xf]
      %v411 = vld [vmem:[%s335 + $0x2c] sm:$0xf]
      %v412 = vld [vmem:[%s335 + $0x30] sm:$0xf]
      %v413 = vld [vmem:[%s335 + $0x34] sm:$0xf]
      %v414 = vld [vmem:[%s335 + $0x38] sm:$0xf]
      %v415 = vld [vmem:[%s335 + $0x3c] sm:$0xf]
      %v416 = vld [vmem:[%s340] sm:$0xf]
      %v417 = vld [vmem:[%s340 + $0x4] sm:$0xf]
      %v418 = vld [vmem:[%s340 + $0x8] sm:$0xf]
      %v419 = vld [vmem:[%s340 + $0xc] sm:$0xf]
      %v420 = vld [vmem:[%s340 + $0x10] sm:$0xf]
      %v421 = vld [vmem:[%s340 + $0x14] sm:$0xf]
      %v422 = vld [vmem:[%s340 + $0x18] sm:$0xf]
      %v423 = vld [vmem:[%s340 + $0x1c] sm:$0xf]
      %v424 = vld [vmem:[%s340 + $0x20] sm:$0xf]
      %v425 = vld [vmem:[%s340 + $0x24] sm:$0xf]
      %v426 = vld [vmem:[%s340 + $0x28] sm:$0xf]
      %v427 = vld [vmem:[%s340 + $0x2c] sm:$0xf]
      %v428 = vld [vmem:[%s340 + $0x30] sm:$0xf]
      %v429 = vld [vmem:[%s340 + $0x34] sm:$0xf]
      %v430 = vld [vmem:[%s340 + $0x38] sm:$0xf]
      %v431 = vld [vmem:[%s340 + $0x3c] sm:$0xf]
      %v432 = vld [vmem:[%s340 + $0x40] sm:$0xf]
      %v433 = vld [vmem:[%s340 + $0x44] sm:$0xf]
      %v434 = vld [vmem:[%s340 + $0x48] sm:$0xf]
      %v435 = vld [vmem:[%s340 + $0x4c] sm:$0xf]
      %v436 = vld [vmem:[%s340 + $0x50] sm:$0xf]
      %v437 = vld [vmem:[%s340 + $0x54] sm:$0xf]
      %v438 = vld [vmem:[%s340 + $0x58] sm:$0xf]
      %v439 = vld [vmem:[%s340 + $0x5c] sm:$0xf]
      %v440 = vld [vmem:[%s340 + $0x60] sm:$0xf]
      %v441 = vld [vmem:[%s340 + $0x64] sm:$0xf]
      %v442 = vld [vmem:[%s340 + $0x68] sm:$0xf]
      %v443 = vld [vmem:[%s340 + $0x6c] sm:$0xf]
      %v444 = vld [vmem:[%s340 + $0x70] sm:$0xf]
      %v445 = vld [vmem:[%s340 + $0x74] sm:$0xf]
      %v446 = vld [vmem:[%s340 + $0x78] sm:$0xf]
      %v447 = vld [vmem:[%s340 + $0x7c] sm:$0xf]
      %v448 = vld [vmem:[%s345] sm:$0xf]
      %v449 = vld [vmem:[%s345 + $0x4] sm:$0xf]
      %v450 = vld [vmem:[%s345 + $0x8] sm:$0xf]
      %v451 = vld [vmem:[%s345 + $0xc] sm:$0xf]
      %v452 = vld [vmem:[%s345 + $0x10] sm:$0xf]
      %v453 = vld [vmem:[%s345 + $0x14] sm:$0xf]
      %v454 = vld [vmem:[%s345 + $0x18] sm:$0xf]
      %v455 = vld [vmem:[%s345 + $0x1c] sm:$0xf]
      %v456 = vld [vmem:[%s345 + $0x20] sm:$0xf]
      %v457 = vld [vmem:[%s345 + $0x24] sm:$0xf]
      %v458 = vld [vmem:[%s345 + $0x28] sm:$0xf]
      %v459 = vld [vmem:[%s345 + $0x2c] sm:$0xf]
      %v460 = vld [vmem:[%s345 + $0x30] sm:$0xf]
      %v461 = vld [vmem:[%s345 + $0x34] sm:$0xf]
      %v462 = vld [vmem:[%s345 + $0x38] sm:$0xf]
      %v463 = vld [vmem:[%s345 + $0x3c] sm:$0xf]
      %v496 = vunpack.c.l.b16 %v416
      %v497 = vunpack.c.l.b16 %v417
      %v498 = vunpack.c.l.b16 %v418
      %v499 = vunpack.c.l.b16 %v419
      %v500 = vunpack.c.l.b16 %v420
      %v501 = vunpack.c.l.b16 %v421
      %v502 = vunpack.c.l.b16 %v422
      %v503 = vunpack.c.l.b16 %v423
      %v504 = vunpack.c.l.b16 %v424
      %v505 = vunpack.c.l.b16 %v425
      %v506 = vunpack.c.l.b16 %v426
      %v507 = vunpack.c.l.b16 %v427
      %v508 = vunpack.c.l.b16 %v428
      %v509 = vunpack.c.l.b16 %v429
      %v510 = vunpack.c.l.b16 %v430
      %v511 = vunpack.c.l.b16 %v431
      %v512 = vunpack.c.l.b16 %v432
      %v513 = vunpack.c.l.b16 %v433
      %v514 = vunpack.c.l.b16 %v434
      %v515 = vunpack.c.l.b16 %v435
      %v516 = vunpack.c.l.b16 %v436
      %v517 = vunpack.c.l.b16 %v437
      %v518 = vunpack.c.l.b16 %v438
      %v519 = vunpack.c.l.b16 %v439
      %v520 = vunpack.c.l.b16 %v440
      %v521 = vunpack.c.l.b16 %v441
      %v522 = vunpack.c.l.b16 %v442
      %v523 = vunpack.c.l.b16 %v443
      %v524 = vunpack.c.l.b16 %v444
      %v525 = vunpack.c.l.b16 %v445
      %v526 = vunpack.c.l.b16 %v446
      %v527 = vunpack.c.l.b16 %v447
      %v528 = vpack.c.b16 %v497, %v496
      %v529 = vpack.c.b16 %v499, %v498
      %v530 = vpack.c.b16 %v501, %v500
      %v531 = vpack.c.b16 %v503, %v502
      %v532 = vpack.c.b16 %v505, %v504
      %v533 = vpack.c.b16 %v507, %v506
      %v534 = vpack.c.b16 %v509, %v508
      %v535 = vpack.c.b16 %v511, %v510
      %v536 = vpack.c.b16 %v513, %v512
      %v537 = vpack.c.b16 %v515, %v514
      %v538 = vpack.c.b16 %v517, %v516
      %v539 = vpack.c.b16 %v519, %v518
      %v540 = vpack.c.b16 %v521, %v520
      %v541 = vpack.c.b16 %v523, %v522
      %v542 = vpack.c.b16 %v525, %v524
      %v543 = vpack.c.b16 %v527, %v526
      %v576 = vunpack.c.l.b16 %v448
      %v577 = vunpack.c.l.b16 %v449
      %v578 = vunpack.c.l.b16 %v450
      %v579 = vunpack.c.l.b16 %v451
      %v580 = vunpack.c.l.b16 %v452
      %v581 = vunpack.c.l.b16 %v453
      %v582 = vunpack.c.l.b16 %v454
      %v583 = vunpack.c.l.b16 %v455
      %v584 = vunpack.c.l.b16 %v456
      %v585 = vunpack.c.l.b16 %v457
      %v586 = vunpack.c.l.b16 %v458
      %v587 = vunpack.c.l.b16 %v459
      %v588 = vunpack.c.l.b16 %v460
      %v589 = vunpack.c.l.b16 %v461
      %v590 = vunpack.c.l.b16 %v462
      %v591 = vunpack.c.l.b16 %v463
      %v592 = vpack.c.b16 %v577, %v576
      %v593 = vpack.c.b16 %v579, %v578
      %v594 = vpack.c.b16 %v581, %v580
      %v595 = vpack.c.b16 %v583, %v582
      %v596 = vpack.c.b16 %v585, %v584
      %v597 = vpack.c.b16 %v587, %v586
      %v598 = vpack.c.b16 %v589, %v588
      %v599 = vpack.c.b16 %v591, %v590
      %608 = vmatprep.subr.bf16.mxu0 0
      %609 = vmatpush1.bf16.msra.mxu0 %v592
      %610 = vmatprep.subr.bf16.mxu0 0
      %611 = vmatpush1.bf16.msra.mxu0 %v593
      %612 = vmatprep.subr.bf16.mxu0 0
      %613 = vmatpush1.bf16.msra.mxu0 %v594
      %614 = vmatprep.subr.bf16.mxu0 0
      %615 = vmatpush1.bf16.msra.mxu0 %v595
      %616 = vmatprep.subr.bf16.mxu0 0
      %617 = vmatpush1.bf16.msra.mxu0 %v596
      %618 = vmatprep.subr.bf16.mxu0 0
      %619 = vmatpush1.bf16.msra.mxu0 %v597
      %620 = vmatprep.subr.bf16.mxu0 0
      %621 = vmatpush1.bf16.msra.mxu0 %v598
      %622 = vmatprep.subr.bf16.mxu0 0
      %623 = vmatpush1.bf16.msra.mxu0 %v599
      %624 = vmatprep.subr.bf16.mxu0 0
      %625 = vmatpush1.bf16.msra.mxu0 0
      %626 = vmatprep.subr.bf16.mxu0 0
      %627 = vmatpush1.bf16.msra.mxu0 0
      %628 = vmatprep.subr.bf16.mxu0 0
      %629 = vmatpush1.bf16.msra.mxu0 0
      %630 = vmatprep.subr.bf16.mxu0 0
      %631 = vmatpush1.bf16.msra.mxu0 0
      %632 = vmatprep.subr.bf16.mxu0 0
      %633 = vmatpush1.bf16.msra.mxu0 0
      %634 = vmatprep.subr.bf16.mxu0 0
      %635 = vmatpush1.bf16.msra.mxu0 0
      %636 = vmatprep.subr.bf16.mxu0 0
      %637 = vmatpush1.bf16.msra.mxu0 0
      %638 = vmatprep.subr.bf16.mxu0 0
      %639 = vmatpush1.bf16.msra.mxu0 0
      %640 = vmatprep.mubr.bf16.mxu0 0
      %641 = vmatmul.mubr.bf16.gmra.mrb[0].mxu0 %v528
      %v642 = vpop.f32.mrb[0].mxu0
      %v643 = vadd.f32 0.0, %v642
      %v644 = vpop.f32.mrb[0].mxu0
      %v645 = vpop.f32.mrb[0].mxu0
      %v646 = vadd.f32 0.0, %v645
      %v647 = vpop.f32.mrb[0].mxu0
      %648 = vmatprep.mubr.bf16.mxu0 0
      %649 = vmatmul.mubr.bf16.gmra.mrb[0].mxu0 %v529
      %v650 = vpop.f32.mrb[0].mxu0
      %v651 = vadd.f32 0.0, %v650
      %v652 = vpop.f32.mrb[0].mxu0
      %v653 = vpop.f32.mrb[0].mxu0
      %v654 = vadd.f32 0.0, %v653
      %v655 = vpop.f32.mrb[0].mxu0
      %656 = vmatprep.mubr.bf16.mxu0 0
      %657 = vmatmul.mubr.bf16.gmra.mrb[0].mxu0 %v530
      %v658 = vpop.f32.mrb[0].mxu0
      %v659 = vadd.f32 0.0, %v658
      %v660 = vpop.f32.mrb[0].mxu0
      %v661 = vpop.f32.mrb[0].mxu0
      %v662 = vadd.f32 0.0, %v661
      %v663 = vpop.f32.mrb[0].mxu0
      %664 = vmatprep.mubr.bf16.mxu0 0
      %665 = vmatmul.mubr.bf16.gmra.mrb[0].mxu0 %v531
      %v666 = vpop.f32.mrb[0].mxu0
      %v667 = vadd.f32 0.0, %v666
      %v668 = vpop.f32.mrb[0].mxu0
      %v669 = vpop.f32.mrb[0].mxu0
      %v670 = vadd.f32 0.0, %v669
      %v671 = vpop.f32.mrb[0].mxu0
      %672 = vmatprep.mubr.bf16.mxu0 0
      %673 = vmatmul.mubr.bf16.gmra.mrb[0].mxu0 %v532
      %v674 = vpop.f32.mrb[0].mxu0
      %v675 = vadd.f32 0.0, %v674
      %v676 = vpop.f32.mrb[0].mxu0
      %v677 = vpop.f32.mrb[0].mxu0
      %v678 = vadd.f32 0.0, %v677
      %v679 = vpop.f32.mrb[0].mxu0
      %680 = vmatprep.mubr.bf16.mxu0 0
      %681 = vmatmul.mubr.bf16.gmra.mrb[0].mxu0 %v533
      %v682 = vpop.f32.mrb[0].mxu0
      %v683 = vadd.f32 0.0, %v682
      %v684 = vpop.f32.mrb[0].mxu0
      %v685 = vpop.f32.mrb[0].mxu0
      %v686 = vadd.f32 0.0, %v685
      %v687 = vpop.f32.mrb[0].mxu0
      %688 = vmatprep.mubr.bf16.mxu0 0
      %689 = vmatmul.mubr.bf16.gmra.mrb[0].mxu0 %v534
      %v690 = vpop.f32.mrb[0].mxu0
      %v691 = vadd.f32 0.0, %v690
      %v692 = vpop.f32.mrb[0].mxu0
      %v693 = vpop.f32.mrb[0].mxu0
      %v694 = vadd.f32 0.0, %v693
      %v695 = vpop.f32.mrb[0].mxu0
      %696 = vmatprep.mubr.bf16.mxu0 0
      %697 = vmatmul.mubr.bf16.gmra.mrb[0].mxu0 %v535
      %v698 = vpop.f32.mrb[0].mxu0
      %v699 = vadd.f32 0.0, %v698
      %v700 = vpop.f32.mrb[0].mxu0
      %v701 = vpop.f32.mrb[0].mxu0
      %v702 = vadd.f32 0.0, %v701
      %v703 = vpop.f32.mrb[0].mxu0
      %704 = vmatprep.mubr.bf16.mxu0 0
      %705 = vmatmul.mubr.bf16.gmra.mrb[0].mxu0 %v536
      %v706 = vpop.f32.mrb[0].mxu0
      %v707 = vadd.f32 0.0, %v706
      %v708 = vpop.f32.mrb[0].mxu0
      %v709 = vpop.f32.mrb[0].mxu0
      %v710 = vadd.f32 0.0, %v709
      %v711 = vpop.f32.mrb[0].mxu0
      %712 = vmatprep.mubr.bf16.mxu0 0
      %713 = vmatmul.mubr.bf16.gmra.mrb[0].mxu0 %v537
      %v714 = vpop.f32.mrb[0].mxu0
      %v715 = vadd.f32 0.0, %v714
      %v716 = vpop.f32.mrb[0].mxu0
      %v717 = vpop.f32.mrb[0].mxu0
      %v718 = vadd.f32 0.0, %v717
      %v719 = vpop.f32.mrb[0].mxu0
      %720 = vmatprep.mubr.bf16.mxu0 0
      %721 = vmatmul.mubr.bf16.gmra.mrb[0].mxu0 %v538
      %v722 = vpop.f32.mrb[0].mxu0
      %v723 = vadd.f32 0.0, %v722
      %v724 = vpop.f32.mrb[0].mxu0
      %v725 = vpop.f32.mrb[0].mxu0
      %v726 = vadd.f32 0.0, %v725
      %v727 = vpop.f32.mrb[0].mxu0
      %728 = vmatprep.mubr.bf16.mxu0 0
      %729 = vmatmul.mubr.bf16.gmra.mrb[0].mxu0 %v539
      %v730 = vpop.f32.mrb[0].mxu0
      %v731 = vadd.f32 0.0, %v730
      %v732 = vpop.f32.mrb[0].mxu0
      %v733 = vpop.f32.mrb[0].mxu0
      %v734 = vadd.f32 0.0, %v733
      %v735 = vpop.f32.mrb[0].mxu0
      %736 = vmatprep.mubr.bf16.mxu0 0
      %737 = vmatmul.mubr.bf16.gmra.mrb[0].mxu0 %v540
      %v738 = vpop.f32.mrb[0].mxu0
      %v739 = vadd.f32 0.0, %v738
      %v740 = vpop.f32.mrb[0].mxu0
      %v741 = vpop.f32.mrb[0].mxu0
      %v742 = vadd.f32 0.0, %v741
      %v743 = vpop.f32.mrb[0].mxu0
      %744 = vmatprep.mubr.bf16.mxu0 0
      %745 = vmatmul.mubr.bf16.gmra.mrb[0].mxu0 %v541
      %v746 = vpop.f32.mrb[0].mxu0
      %v747 = vadd.f32 0.0, %v746
      %v748 = vpop.f32.mrb[0].mxu0
      %v749 = vpop.f32.mrb[0].mxu0
      %v750 = vadd.f32 0.0, %v749
      %v751 = vpop.f32.mrb[0].mxu0
      %752 = vmatprep.mubr.bf16.mxu0 0
      %753 = vmatmul.mubr.bf16.gmra.mrb[0].mxu0 %v542
      %v754 = vpop.f32.mrb[0].mxu0
      %v755 = vadd.f32 0.0, %v754
      %v756 = vpop.f32.mrb[0].mxu0
      %v757 = vpop.f32.mrb[0].mxu0
      %v758 = vadd.f32 0.0, %v757
      %v759 = vpop.f32.mrb[0].mxu0
      %760 = vmatprep.mubr.bf16.mxu0 0
      %761 = vmatmul.mubr.bf16.gmra.mrb[0].mxu0 %v543
      %v762 = vpop.f32.mrb[0].mxu0
      %v763 = vadd.f32 0.0, %v762
      %v764 = vpop.f32.mrb[0].mxu0
      %v765 = vpop.f32.mrb[0].mxu0
      %v766 = vadd.f32 0.0, %v765
      %v767 = vpop.f32.mrb[0].mxu0
      %768 = vdwg.mxu0
      %v801 = vunpack.c.l.b16 %v368
      %v802 = vunpack.c.l.b16 %v369
      %v803 = vunpack.c.l.b16 %v370
      %v804 = vunpack.c.l.b16 %v371
      %v805 = vunpack.c.l.b16 %v372
      %v806 = vunpack.c.l.b16 %v373
      %v807 = vunpack.c.l.b16 %v374
      %v808 = vunpack.c.l.b16 %v375
      %v809 = vunpack.c.l.b16 %v376
      %v810 = vunpack.c.l.b16 %v377
      %v811 = vunpack.c.l.b16 %v378
      %v812 = vunpack.c.l.b16 %v379
      %v813 = vunpack.c.l.b16 %v380
      %v814 = vunpack.c.l.b16 %v381
      %v815 = vunpack.c.l.b16 %v382
      %v816 = vunpack.c.l.b16 %v383
      %v817 = vunpack.c.l.b16 %v384
      %v818 = vunpack.c.l.b16 %v385
      %v819 = vunpack.c.l.b16 %v386
      %v820 = vunpack.c.l.b16 %v387
      %v821 = vunpack.c.l.b16 %v388
      %v822 = vunpack.c.l.b16 %v389
      %v823 = vunpack.c.l.b16 %v390
      %v824 = vunpack.c.l.b16 %v391
      %v825 = vunpack.c.l.b16 %v392
      %v826 = vunpack.c.l.b16 %v393
      %v827 = vunpack.c.l.b16 %v394
      %v828 = vunpack.c.l.b16 %v395
      %v829 = vunpack.c.l.b16 %v396
      %v830 = vunpack.c.l.b16 %v397
      %v831 = vunpack.c.l.b16 %v398
      %v832 = vunpack.c.l.b16 %v399
      %v833 = vpack.c.b16 %v802, %v801
      %v834 = vpack.c.b16 %v804, %v803
      %v835 = vpack.c.b16 %v806, %v805
      %v836 = vpack.c.b16 %v808, %v807
      %v837 = vpack.c.b16 %v810, %v809
      %v838 = vpack.c.b16 %v812, %v811
      %v839 = vpack.c.b16 %v814, %v813
      %v840 = vpack.c.b16 %v816, %v815
      %v841 = vpack.c.b16 %v818, %v817
      %v842 = vpack.c.b16 %v820, %v819
      %v843 = vpack.c.b16 %v822, %v821
      %v844 = vpack.c.b16 %v824, %v823
      %v845 = vpack.c.b16 %v826, %v825
      %v846 = vpack.c.b16 %v828, %v827
      %v847 = vpack.c.b16 %v830, %v829
      %v848 = vpack.c.b16 %v832, %v831
      %v881 = vunpack.c.l.b16 %v400
      %v882 = vunpack.c.l.b16 %v401
      %v883 = vunpack.c.l.b16 %v402
      %v884 = vunpack.c.l.b16 %v403
      %v885 = vunpack.c.l.b16 %v404
      %v886 = vunpack.c.l.b16 %v405
      %v887 = vunpack.c.l.b16 %v406
      %v888 = vunpack.c.l.b16 %v407
      %v889 = vunpack.c.l.b16 %v408
      %v890 = vunpack.c.l.b16 %v409
      %v891 = vunpack.c.l.b16 %v410
      %v892 = vunpack.c.l.b16 %v411
      %v893 = vunpack.c.l.b16 %v412
      %v894 = vunpack.c.l.b16 %v413
      %v895 = vunpack.c.l.b16 %v414
      %v896 = vunpack.c.l.b16 %v415
      %v897 = vpack.c.b16 %v882, %v881
      %v898 = vpack.c.b16 %v884, %v883
      %v899 = vpack.c.b16 %v886, %v885
      %v900 = vpack.c.b16 %v888, %v887
      %v901 = vpack.c.b16 %v890, %v889
      %v902 = vpack.c.b16 %v892, %v891
      %v903 = vpack.c.b16 %v894, %v893
      %v904 = vpack.c.b16 %v896, %v895
      %913 = vmatprep.subr.bf16.mxu0 0
      %914 = vmatpush1.bf16.msra.mxu0 %v897
      %915 = vmatprep.subr.bf16.mxu0 0
      %916 = vmatpush1.bf16.msra.mxu0 %v898
      %917 = vmatprep.subr.bf16.mxu0 0
      %918 = vmatpush1.bf16.msra.mxu0 %v899
      %919 = vmatprep.subr.bf16.mxu0 0
      %920 = vmatpush1.bf16.msra.mxu0 %v900
      %921 = vmatprep.subr.bf16.mxu0 0
      %922 = vmatpush1.bf16.msra.mxu0 %v901
      %923 = vmatprep.subr.bf16.mxu0 0
      %924 = vmatpush1.bf16.msra.mxu0 %v902
      %925 = vmatprep.subr.bf16.mxu0 0
      %926 = vmatpush1.bf16.msra.mxu0 %v903
      %927 = vmatprep.subr.bf16.mxu0 0
      %928 = vmatpush1.bf16.msra.mxu0 %v904
      %929 = vmatprep.subr.bf16.mxu0 0
      %930 = vmatpush1.bf16.msra.mxu0 0
      %931 = vmatprep.subr.bf16.mxu0 0
      %932 = vmatpush1.bf16.msra.mxu0 0
      %933 = vmatprep.subr.bf16.mxu0 0
      %934 = vmatpush1.bf16.msra.mxu0 0
      %935 = vmatprep.subr.bf16.mxu0 0
      %936 = vmatpush1.bf16.msra.mxu0 0
      %937 = vmatprep.subr.bf16.mxu0 0
      %938 = vmatpush1.bf16.msra.mxu0 0
      %939 = vmatprep.subr.bf16.mxu0 0
      %940 = vmatpush1.bf16.msra.mxu0 0
      %941 = vmatprep.subr.bf16.mxu0 0
      %942 = vmatpush1.bf16.msra.mxu0 0
      %943 = vmatprep.subr.bf16.mxu0 0
      %944 = vmatpush1.bf16.msra.mxu0 0
      %945 = vmatprep.mubr.bf16.mxu0 0
      %946 = vmatmul.mubr.bf16.gmra.mrb[0].mxu0 %v833
      %v947 = vpop.f32.mrb[0].mxu0
      %v948 = vadd.f32 %v643, %v947
      %v949 = vpop.f32.mrb[0].mxu0
      %v950 = vpop.f32.mrb[0].mxu0
      %v951 = vadd.f32 %v646, %v950
      %v952 = vpop.f32.mrb[0].mxu0
      %953 = vmatprep.mubr.bf16.mxu0 0
      %954 = vmatmul.mubr.bf16.gmra.mrb[0].mxu0 %v834
      %v955 = vpop.f32.mrb[0].mxu0
      %v956 = vadd.f32 %v651, %v955
      %v957 = vpop.f32.mrb[0].mxu0
      %v958 = vpop.f32.mrb[0].mxu0
      %v959 = vadd.f32 %v654, %v958
      %v960 = vpop.f32.mrb[0].mxu0
      %961 = vmatprep.mubr.bf16.mxu0 0
      %962 = vmatmul.mubr.bf16.gmra.mrb[0].mxu0 %v835
      %v963 = vpop.f32.mrb[0].mxu0
      %v964 = vadd.f32 %v659, %v963
      %v965 = vpop.f32.mrb[0].mxu0
      %v966 = vpop.f32.mrb[0].mxu0
      %v967 = vadd.f32 %v662, %v966
      %v968 = vpop.f32.mrb[0].mxu0
      %969 = vmatprep.mubr.bf16.mxu0 0
      %970 = vmatmul.mubr.bf16.gmra.mrb[0].mxu0 %v836
      %v971 = vpop.f32.mrb[0].mxu0
      %v972 = vadd.f32 %v667, %v971
      %v973 = vpop.f32.mrb[0].mxu0
      %v974 = vpop.f32.mrb[0].mxu0
      %v975 = vadd.f32 %v670, %v974
      %v976 = vpop.f32.mrb[0].mxu0
      %977 = vmatprep.mubr.bf16.mxu0 0
      %978 = vmatmul.mubr.bf16.gmra.mrb[0].mxu0 %v837
      %v979 = vpop.f32.mrb[0].mxu0
      %v980 = vadd.f32 %v675, %v979
      %v981 = vpop.f32.mrb[0].mxu0
      %v982 = vpop.f32.mrb[0].mxu0
      %v983 = vadd.f32 %v678, %v982
      %v984 = vpop.f32.mrb[0].mxu0
      %985 = vmatprep.mubr.bf16.mxu0 0
      %986 = vmatmul.mubr.bf16.gmra.mrb[0].mxu0 %v838
      %v987 = vpop.f32.mrb[0].mxu0
      %v988 = vadd.f32 %v683, %v987
      %v989 = vpop.f32.mrb[0].mxu0
      %v990 = vpop.f32.mrb[0].mxu0
      %v991 = vadd.f32 %v686, %v990
      %v992 = vpop.f32.mrb[0].mxu0
      %993 = vmatprep.mubr.bf16.mxu0 0
      %994 = vmatmul.mubr.bf16.gmra.mrb[0].mxu0 %v839
      %v995 = vpop.f32.mrb[0].mxu0
      %v996 = vadd.f32 %v691, %v995
      %v997 = vpop.f32.mrb[0].mxu0
      %v998 = vpop.f32.mrb[0].mxu0
      %v999 = vadd.f32 %v694, %v998
      %v1000 = vpop.f32.mrb[0].mxu0
      %1001 = vmatprep.mubr.bf16.mxu0 0
      %1002 = vmatmul.mubr.bf16.gmra.mrb[0].mxu0 %v840
      %v1003 = vpop.f32.mrb[0].mxu0
      %v1004 = vadd.f32 %v699, %v1003
      %v1005 = vpop.f32.mrb[0].mxu0
      %v1006 = vpop.f32.mrb[0].mxu0
      %v1007 = vadd.f32 %v702, %v1006
      %v1008 = vpop.f32.mrb[0].mxu0
      %1009 = vmatprep.mubr.bf16.mxu0 0
      %1010 = vmatmul.mubr.bf16.gmra.mrb[0].mxu0 %v841
      %v1011 = vpop.f32.mrb[0].mxu0
      %v1012 = vadd.f32 %v707, %v1011
      %v1013 = vpop.f32.mrb[0].mxu0
      %v1014 = vpop.f32.mrb[0].mxu0
      %v1015 = vadd.f32 %v710, %v1014
      %v1016 = vpop.f32.mrb[0].mxu0
      %1017 = vmatprep.mubr.bf16.mxu0 0
      %1018 = vmatmul.mubr.bf16.gmra.mrb[0].mxu0 %v842
      %v1019 = vpop.f32.mrb[0].mxu0
      %v1020 = vadd.f32 %v715, %v1019
      %v1021 = vpop.f32.mrb[0].mxu0
      %v1022 = vpop.f32.mrb[0].mxu0
      %v1023 = vadd.f32 %v718, %v1022
      %v1024 = vpop.f32.mrb[0].mxu0
      %1025 = vmatprep.mubr.bf16.mxu0 0
      %1026 = vmatmul.mubr.bf16.gmra.mrb[0].mxu0 %v843
      %v1027 = vpop.f32.mrb[0].mxu0
      %v1028 = vadd.f32 %v723, %v1027
      %v1029 = vpop.f32.mrb[0].mxu0
      %v1030 = vpop.f32.mrb[0].mxu0
      %v1031 = vadd.f32 %v726, %v1030
      %v1032 = vpop.f32.mrb[0].mxu0
      %1033 = vmatprep.mubr.bf16.mxu0 0
      %1034 = vmatmul.mubr.bf16.gmra.mrb[0].mxu0 %v844
      %v1035 = vpop.f32.mrb[0].mxu0
      %v1036 = vadd.f32 %v731, %v1035
      %v1037 = vpop.f32.mrb[0].mxu0
      %v1038 = vpop.f32.mrb[0].mxu0
      %v1039 = vadd.f32 %v734, %v1038
      %v1040 = vpop.f32.mrb[0].mxu0
      %1041 = vmatprep.mubr.bf16.mxu0 0
      %1042 = vmatmul.mubr.bf16.gmra.mrb[0].mxu0 %v845
      %v1043 = vpop.f32.mrb[0].mxu0
      %v1044 = vadd.f32 %v739, %v1043
      %v1045 = vpop.f32.mrb[0].mxu0
      %v1046 = vpop.f32.mrb[0].mxu0
      %v1047 = vadd.f32 %v742, %v1046
      %v1048 = vpop.f32.mrb[0].mxu0
      %1049 = vmatprep.mubr.bf16.mxu0 0
      %1050 = vmatmul.mubr.bf16.gmra.mrb[0].mxu0 %v846
      %v1051 = vpop.f32.mrb[0].mxu0
      %v1052 = vadd.f32 %v747, %v1051
      %v1053 = vpop.f32.mrb[0].mxu0
      %v1054 = vpop.f32.mrb[0].mxu0
      %v1055 = vadd.f32 %v750, %v1054
      %v1056 = vpop.f32.mrb[0].mxu0
      %1057 = vmatprep.mubr.bf16.mxu0 0
      %1058 = vmatmul.mubr.bf16.gmra.mrb[0].mxu0 %v847
      %v1059 = vpop.f32.mrb[0].mxu0
      %v1060 = vadd.f32 %v755, %v1059
      %v1061 = vpop.f32.mrb[0].mxu0
      %v1062 = vpop.f32.mrb[0].mxu0
      %v1063 = vadd.f32 %v758, %v1062
      %v1064 = vpop.f32.mrb[0].mxu0
      %1065 = vmatprep.mubr.bf16.mxu0 0
      %1066 = vmatmul.mubr.bf16.gmra.mrb[0].mxu0 %v848
      %v1067 = vpop.f32.mrb[0].mxu0
      %v1068 = vadd.f32 %v763, %v1067
      %v1069 = vpop.f32.mrb[0].mxu0
      %v1070 = vpop.f32.mrb[0].mxu0
      %v1071 = vadd.f32 %v766, %v1070
      %v1072 = vpop.f32.mrb[0].mxu0
      %1073 = vdwg.mxu0
      %v1074 = vld [vmem:[%s348] sm:$0x1]
      %v1076 = vlaneseq
      %v1077 = vshrl.u32 %v1076, 7
      %v1078 = vsub.s32 0, %v1077
      %v1079 = vrot.slane %v1074, %v1078
      %v1081 = vadd.f32 %v948, %v1079
      %v1082 = vadd.f32 %v951, %v1079
      %v1083 = vadd.f32 %v956, %v1079
      %v1084 = vadd.f32 %v959, %v1079
      %v1085 = vadd.f32 %v964, %v1079
      %v1086 = vadd.f32 %v967, %v1079
      %v1087 = vadd.f32 %v972, %v1079
      %v1088 = vadd.f32 %v975, %v1079
      %v1089 = vadd.f32 %v980, %v1079
      %v1090 = vadd.f32 %v983, %v1079
      %v1091 = vadd.f32 %v988, %v1079
      %v1092 = vadd.f32 %v991, %v1079
      %v1093 = vadd.f32 %v996, %v1079
      %v1094 = vadd.f32 %v999, %v1079
      %v1095 = vadd.f32 %v1004, %v1079
      %v1096 = vadd.f32 %v1007, %v1079
      %v1097 = vadd.f32 %v1012, %v1079
      %v1098 = vadd.f32 %v1015, %v1079
      %v1099 = vadd.f32 %v1020, %v1079
      %v1100 = vadd.f32 %v1023, %v1079
      %v1101 = vadd.f32 %v1028, %v1079
      %v1102 = vadd.f32 %v1031, %v1079
      %v1103 = vadd.f32 %v1036, %v1079
      %v1104 = vadd.f32 %v1039, %v1079
      %v1105 = vadd.f32 %v1044, %v1079
      %v1106 = vadd.f32 %v1047, %v1079
      %v1107 = vadd.f32 %v1052, %v1079
      %v1108 = vadd.f32 %v1055, %v1079
      %v1109 = vadd.f32 %v1060, %v1079
      %v1110 = vadd.f32 %v1063, %v1079
      %v1111 = vadd.f32 %v1068, %v1079
      %v1112 = vadd.f32 %v1071, %v1079
      %v1113 = vmax.f32 %v1081, 0.0
      %v1114 = vmax.f32 %v1082, 0.0
      %v1115 = vmax.f32 %v1083, 0.0
      %v1116 = vmax.f32 %v1084, 0.0
      %v1117 = vmax.f32 %v1085, 0.0
      %v1118 = vmax.f32 %v1086, 0.0
      %v1119 = vmax.f32 %v1087, 0.0
      %v1120 = vmax.f32 %v1088, 0.0
      %v1121 = vmax.f32 %v1089, 0.0
      %v1122 = vmax.f32 %v1090, 0.0
      %v1123 = vmax.f32 %v1091, 0.0
      %v1124 = vmax.f32 %v1092, 0.0
      %v1125 = vmax.f32 %v1093, 0.0
      %v1126 = vmax.f32 %v1094, 0.0
      %v1127 = vmax.f32 %v1095, 0.0
      %v1128 = vmax.f32 %v1096, 0.0
      %v1129 = vmax.f32 %v1097, 0.0
      %v1130 = vmax.f32 %v1098, 0.0
      %v1131 = vmax.f32 %v1099, 0.0
      %v1132 = vmax.f32 %v1100, 0.0
      %v1133 = vmax.f32 %v1101, 0.0
      %v1134 = vmax.f32 %v1102, 0.0
      %v1135 = vmax.f32 %v1103, 0.0
      %v1136 = vmax.f32 %v1104, 0.0
      %v1137 = vmax.f32 %v1105, 0.0
      %v1138 = vmax.f32 %v1106, 0.0
      %v1139 = vmax.f32 %v1107, 0.0
      %v1140 = vmax.f32 %v1108, 0.0
      %v1141 = vmax.f32 %v1109, 0.0
      %v1142 = vmax.f32 %v1110, 0.0
      %v1143 = vmax.f32 %v1111, 0.0
      %v1144 = vmax.f32 %v1112, 0.0
      %1145 = vst [vmem:[%s356] sm:$0xff] %v1113
      %1146 = vst [vmem:[%s356 + $0x8] sm:$0xff] %v1114
      %1147 = vst [vmem:[%s356 + $0x10] sm:$0xff] %v1115
      %1148 = vst [vmem:[%s356 + $0x18] sm:$0xff] %v1116
      %1149 = vst [vmem:[%s356 + $0x20] sm:$0xff] %v1117
      %1150 = vst [vmem:[%s356 + $0x28] sm:$0xff] %v1118
      %1151 = vst [vmem:[%s356 + $0x30] sm:$0xff] %v1119
      %1152 = vst [vmem:[%s356 + $0x38] sm:$0xff] %v1120
      %1153 = vst [vmem:[%s356 + $0x40] sm:$0xff] %v1121
      %1154 = vst [vmem:[%s356 + $0x48] sm:$0xff] %v1122
      %1155 = vst [vmem:[%s356 + $0x50] sm:$0xff] %v1123
      %1156 = vst [vmem:[%s356 + $0x58] sm:$0xff] %v1124
      %1157 = vst [vmem:[%s356 + $0x60] sm:$0xff] %v1125
      %1158 = vst [vmem:[%s356 + $0x68] sm:$0xff] %v1126
      %1159 = vst [vmem:[%s356 + $0x70] sm:$0xff] %v1127
      %1160 = vst [vmem:[%s356 + $0x78] sm:$0xff] %v1128
      %1161 = vst [vmem:[%s356 + $0x80] sm:$0xff] %v1129
      %1162 = vst [vmem:[%s356 + $0x88] sm:$0xff] %v1130
      %1163 = vst [vmem:[%s356 + $0x90] sm:$0xff] %v1131
      %1164 = vst [vmem:[%s356 + $0x98] sm:$0xff] %v1132
      %1165 = vst [vmem:[%s356 + $0xa0] sm:$0xff] %v1133
      %1166 = vst [vmem:[%s356 + $0xa8] sm:$0xff] %v1134
      %1167 = vst [vmem:[%s356 + $0xb0] sm:$0xff] %v1135
      %1168 = vst [vmem:[%s356 + $0xb8] sm:$0xff] %v1136
      %1169 = vst [vmem:[%s356 + $0xc0] sm:$0xff] %v1137
      %1170 = vst [vmem:[%s356 + $0xc8] sm:$0xff] %v1138
      %1171 = vst [vmem:[%s356 + $0xd0] sm:$0xff] %v1139
      %1172 = vst [vmem:[%s356 + $0xd8] sm:$0xff] %v1140
      %1173 = vst [vmem:[%s356 + $0xe0] sm:$0xff] %v1141
      %1174 = vst [vmem:[%s356 + $0xe8] sm:$0xff] %v1142
      %1175 = vst [vmem:[%s356 + $0xf0] sm:$0xff] %v1143
      %1176 = vst [vmem:[%s356 + $0xf8] sm:$0xff] %v1144
      %1177 = vst [vmem:[%s365] sm:$0xff] %v1081
      %1178 = vst [vmem:[%s365 + $0x8] sm:$0xff] %v1082
      %1179 = vst [vmem:[%s365 + $0x10] sm:$0xff] %v1083
      %1180 = vst [vmem:[%s365 + $0x18] sm:$0xff] %v1084
      %1181 = vst [vmem:[%s365 + $0x20] sm:$0xff] %v1085
      %1182 = vst [vmem:[%s365 + $0x28] sm:$0xff] %v1086
      %1183 = vst [vmem:[%s365 + $0x30] sm:$0xff] %v1087
      %1184 = vst [vmem:[%s365 + $0x38] sm:$0xff] %v1088
      %1185 = vst [vmem:[%s365 + $0x40] sm:$0xff] %v1089
      %1186 = vst [vmem:[%s365 + $0x48] sm:$0xff] %v1090
      %1187 = vst [vmem:[%s365 + $0x50] sm:$0xff] %v1091
      %1188 = vst [vmem:[%s365 + $0x58] sm:$0xff] %v1092
      %1189 = vst [vmem:[%s365 + $0x60] sm:$0xff] %v1093
      %1190 = vst [vmem:[%s365 + $0x68] sm:$0xff] %v1094
      %1191 = vst [vmem:[%s365 + $0x70] sm:$0xff] %v1095
      %1192 = vst [vmem:[%s365 + $0x78] sm:$0xff] %v1096
      %1193 = vst [vmem:[%s365 + $0x80] sm:$0xff] %v1097
      %1194 = vst [vmem:[%s365 + $0x88] sm:$0xff] %v1098
      %1195 = vst [vmem:[%s365 + $0x90] sm:$0xff] %v1099
      %1196 = vst [vmem:[%s365 + $0x98] sm:$0xff] %v1100
      %1197 = vst [vmem:[%s365 + $0xa0] sm:$0xff] %v1101
      %1198 = vst [vmem:[%s365 + $0xa8] sm:$0xff] %v1102
      %1199 = vst [vmem:[%s365 + $0xb0] sm:$0xff] %v1103
      %1200 = vst [vmem:[%s365 + $0xb8] sm:$0xff] %v1104
      %1201 = vst [vmem:[%s365 + $0xc0] sm:$0xff] %v1105
      %1202 = vst [vmem:[%s365 + $0xc8] sm:$0xff] %v1106
      %1203 = vst [vmem:[%s365 + $0xd0] sm:$0xff] %v1107
      %1204 = vst [vmem:[%s365 + $0xd8] sm:$0xff] %v1108
      %1205 = vst [vmem:[%s365 + $0xe0] sm:$0xff] %v1109
      %1206 = vst [vmem:[%s365 + $0xe8] sm:$0xff] %v1110
      %1207 = vst [vmem:[%s365 + $0xf0] sm:$0xff] %v1111
      %1208 = vst [vmem:[%s365 + $0xf8] sm:$0xff] %v1112
      %s1209 = smul.u32 32, %s22
      %p1210 = scmp.lt.s32.totalorder %s1209, 63
      %s1211 = scalar_select %p1210, %s1209, 63
      %p1212 = scmp.lt.s32.totalorder %s23, 0
      %s1213 = scalar_select %p1212, %s23, 0
      %s1214 = sadd.s32 %s1213, %s1211
      %s1215 = smul.addr %s1214, 8
      %s1216 = scalar_lea.vmem %s5, %s1215
      %s1217 = smul.u32 32, %s22
      %p1218 = scmp.lt.s32.totalorder %s1217, 63
      %s1219 = scalar_select %p1218, %s1217, 63
      %p1220 = scmp.lt.s32.totalorder %s23, 0
      %s1221 = scalar_select %p1220, %s23, 0
      %s1222 = sadd.s32 %s1221, %s1219
      %s1223 = smul.addr %s1222, 8
      %s1224 = scalar_lea.vmem %s6, %s1223
      // Predicated region
      $region41: #{bottleneck_forward.5} parent=39 // pred_check
        %p1225 = pneg %p180
      $region42: #{bottleneck_forward.5} parent=39 // pred_check_branch
        %1227 = sbr.rel (%p1225) target = $region44
      $region43: #{bottleneck_forward.5} parent=39 // pred_region
        %s1228 = smul.u32 32, %s22
      $region44: #{bottleneck_forward.5} parent=39 // pred_fallthru
        _
      // Predicated region
      $region45: #{bottleneck_forward.5} parent=39 // pred_check
        %p1229 = pneg %p208
      $region46: #{bottleneck_forward.5} parent=39 // pred_check_branch
        %1231 = sbr.rel (%p1229) target = $region48
      $region47: #{bottleneck_forward.5} parent=39 // pred_region
        %s1232 = smul.u32 32, %s22
      $region48: #{bottleneck_forward.5} parent=39 // pred_fallthru
        _
    $region40: #{bottleneck_forward.5} parent=5 // pred_fallthru
      _
    %p1233 = scmp.le.s32.totalorder 2, %s13
    // Predicated region
    $region49: #{bottleneck_forward.5} parent=5 // pred_check
      %p1234 = pneg %p1233
    $region50: #{bottleneck_forward.5} parent=5 // pred_check_branch
      %1236 = sbr.rel (%p1234) target = $region52
    $region51: #{bottleneck_forward.5} parent=5 // pred_region
      %s1237 = ssub.s32 %s13, 2
      // Predicated region
      $region53: #{bottleneck_forward.5} parent=51 // pred_check
        %p1238 = pneg %p186
      $region54: #{bottleneck_forward.5} parent=51 // pred_check_branch
        %1240 = sbr.rel (%p1238) target = $region56
      $region55: #{bottleneck_forward.5} parent=51 // pred_region
        %s1241 = smul.u32 32, %s24
        %p1242 = scmp.lt.s32.totalorder %s1241, 63
        %s1243 = scalar_select %p1242, %s1241, 63
        %p1244 = scmp.lt.s32.totalorder %s25, 0
        %s1245 = scalar_select %p1244, %s25, 0
        %s1246 = sadd.s32 %s1245, %s1243
        %s1247 = smul.addr %s1246, 8
        %s1248 = scalar_lea.vmem %s5, %s1247
      $region56: #{bottleneck_forward.5} parent=51 // pred_fallthru
        _
      // Predicated region
      $region57: #{bottleneck_forward.5} parent=51 // pred_check
        %p1249 = pneg %p214
      $region58: #{bottleneck_forward.5} parent=51 // pred_check_branch
        %1251 = sbr.rel (%p1249) target = $region60
      $region59: #{bottleneck_forward.5} parent=51 // pred_region
        %s1252 = smul.u32 32, %s24
        %p1253 = scmp.lt.s32.totalorder %s1252, 63
        %s1254 = scalar_select %p1253, %s1252, 63
        %p1255 = scmp.lt.s32.totalorder %s25, 0
        %s1256 = scalar_select %p1255, %s25, 0
        %s1257 = sadd.s32 %s1256, %s1254
        %s1258 = smul.addr %s1257, 8
        %s1259 = scalar_lea.vmem %s6, %s1258
      $region60: #{bottleneck_forward.5} parent=51 // pred_fallthru
        _
    $region52: #{bottleneck_forward.5} parent=5 // pred_fallthru
      _
  $region6: #{bottleneck_forward.5} parent=0 // loop_footer
    %s17 = sadd.s32 1, %s13
  $region7: #{bottleneck_forward.5} parent=0 // loop_footer_branch
    %12 = sbr.rel target = $region3
  $region8: #{bottleneck_forward.5} parent=0 // loop_exit
    _

// kernel: bottleneck_forward.4
$region0: #{bottleneck_forward.4}
  #allocation0 [shape = 'u32[]', space=smem, size = 0x4, offset = 0x4, fixed_abs, tag = 'smem constant byte address 0x4 - core index']
  #allocation1 [shape = 'u32[144,128]{1,0:T(1,128)}', space=vmem, size = 0x12000, scoped, tag = 'internal scratch']
  %s0 = inlined_call_operand.vmem [shape: bf16[2,18,16,384], index: 0, kind: input, shape index: {}]
  %s1 = inlined_call_operand.vmem [shape: bf16[3,384,128], index: 1, kind: input, shape index: {}]
  %s2 = inlined_call_operand.vmem [shape: f32[1,128], index: 2, kind: input, shape index: {}]
  %s3 = inlined_call_operand.vmem [shape: bf16[2,16,16,128], index: 3, kind: output, shape index: {}]
  %s4 = sld [smem:[#allocation0]]
  $region45: #{bottleneck_forward.4} parent=0
    _
  %s6 = ssub.s32 1, %s4
  %s7 = scalar_select 0, %s6, %s4
  loop: start=0, step=1, limit=4
  $region2: #{bottleneck_forward.4} parent=0 // loop_pre_header
    _
  $region3: #{bottleneck_forward.4} parent=0 // loop_header
    %s9 = sphi 0, %s13
    %p10 = scmp.ge.s32.totalorder %s9, 4
    %s16 = sphi 0, %s28
    %s17 = sphi 0, %s24
    %s18 = sphi 0, %s16
    %s19 = sphi 0, %s17
    %s20 = sphi 0, %s18
    %s21 = sphi 0, %s19
    %s31 = sphi 0, %s33
    %s34 = sphi 0, %s31
    %s35 = sphi 0, %s34
    %s51 = sphi 0, %s35
    %s57 = sphi 0, %s59
    %s60 = sphi 0, %s57
    %s61 = sphi 0, %s60
    %s77 = sphi 0, %s61
    %s83 = sphi 0, %s85
    %s86 = sphi 0, %s83
    %s87 = sphi 0, %s86
    %s103 = sphi 0, %s87
    %s111 = sphi 0, %s113
    %s114 = sphi 0, %s111
    %s115 = sphi 0, %s114
    %s131 = sphi 0, %s115
  $region4: #{bottleneck_forward.4} parent=0 // loop_header_branch
    %12 = sbr.rel (%p10) target = $region8
  $region5: #{bottleneck_forward.4} parent=0 // loop_body
    %s14 = ssub.s32 %s9, 1
    %s15 = ssub.s32 %s9, 2
    %s22 = sadd.s32 1, %s17
    %p23 = scmp.ge.s32.totalorder %s22, 1
    %s24 = scalar_select %p23, 0, %s22
    %s25 = sadd.s32 1, %s16
    %s26 = scalar_select %p23, %s25, %s16
    %p27 = scmp.ge.s32.totalorder %s26, 2
    %s28 = scalar_select %p27, 0, %s26
    %s29 = ssub.s32 %s16, %s28
    %p30 = scmp.eq.s32.totalorder %s29, 0
    %s32 = sadd.s32 %s31, 1
    %s33 = scalar_select %p30, %s31, %s32
    %p36 = pneg %p30
    %p37 = scmp.eq.s32.totalorder %s9, 1
    %p38 = por %p36, %p37
    %p39 = scmp.ne.s32.totalorder %s31, %s34
    %p40 = scmp.eq.s32.totalorder %s9, 0
    %p41 = por %p39, %p40
    %p42 = scmp.ne.s32.totalorder %s31, %s34
    %p43 = scmp.eq.s32.totalorder %s14, 1
    %p44 = por %p42, %p43
    %p45 = scmp.ne.s32.totalorder %s34, %s35
    %p46 = scmp.eq.s32.totalorder %s14, 0
    %p47 = por %p45, %p46
    %p48 = scmp.ne.s32.totalorder %s34, %s35
    %p49 = scmp.eq.s32.totalorder %s15, 1
    %p50 = por %p48, %p49
    %p52 = scmp.ne.s32.totalorder %s35, %s51
    %p53 = scmp.eq.s32.totalorder %s15, 0
    %p54 = por %p52, %p53
    %s55 = ssub.s32 %s17, %s24
    %p56 = scmp.eq.s32.totalorder %s55, 0
    %s58 = sadd.s32 %s57, 1
    %s59 = scalar_select %p56, %s57, %s58
    %p62 = pneg %p56
    %p63 = scmp.eq.s32.totalorder %s9, 1
    %p64 = por %p62, %p63
    %p65 = scmp.ne.s32.totalorder %s57, %s60
    %p66 = scmp.eq.s32.totalorder %s9, 0
    %p67 = por %p65, %p66
    %p68 = scmp.ne.s32.totalorder %s57, %s60
    %p69 = scmp.eq.s32.totalorder %s14, 1
    %p70 = por %p68, %p69
    %p71 = scmp.ne.s32.totalorder %s60, %s61
    %p72 = scmp.eq.s32.totalorder %s14, 0
    %p73 = por %p71, %p72
    %p74 = scmp.ne.s32.totalorder %s60, %s61
    %p75 = scmp.eq.s32.totalorder %s15, 1
    %p76 = por %p74, %p75
    %p78 = scmp.ne.s32.totalorder %s61, %s77
    %p79 = scmp.eq.s32.totalorder %s15, 0
    %p80 = por %p78, %p79
    %s81 = ssub.s32 %s17, %s24
    %p82 = scmp.eq.s32.totalorder %s81, 0
    %s84 = sadd.s32 %s83, 1
    %s85 = scalar_select %p82, %s83, %s84
    %p88 = pneg %p82
    %p89 = scmp.eq.s32.totalorder %s9, 1
    %p90 = por %p88, %p89
    %p91 = scmp.ne.s32.totalorder %s83, %s86
    %p92 = scmp.eq.s32.totalorder %s9, 0
    %p93 = por %p91, %p92
    %p94 = scmp.ne.s32.totalorder %s83, %s86
    %p95 = scmp.eq.s32.totalorder %s14, 1
    %p96 = por %p94, %p95
    %p97 = scmp.ne.s32.totalorder %s86, %s87
    %p98 = scmp.eq.s32.totalorder %s14, 0
    %p99 = por %p97, %p98
    %p100 = scmp.ne.s32.totalorder %s86, %s87
    %p101 = scmp.eq.s32.totalorder %s15, 1
    %p102 = por %p100, %p101
    %p104 = scmp.ne.s32.totalorder %s87, %s103
    %p105 = scmp.eq.s32.totalorder %s15, 0
    %p106 = por %p104, %p105
    %s107 = ssub.s32 %s16, %s28
    %s108 = ssub.s32 %s17, %s24
    %s109 = sor.u32 %s107, %s108
    %p110 = scmp.eq.s32.totalorder %s109, 0
    %s112 = sadd.s32 %s111, 1
    %s113 = scalar_select %p110, %s111, %s112
    %p116 = pneg %p110
    %p117 = scmp.eq.s32.totalorder %s9, 1
    %p118 = por %p116, %p117
    %p119 = scmp.ne.s32.totalorder %s111, %s114
    %p120 = scmp.eq.s32.totalorder %s9, 0
    %p121 = por %p119, %p120
    %p122 = scmp.ne.s32.totalorder %s111, %s114
    %p123 = scmp.eq.s32.totalorder %s14, 1
    %p124 = por %p122, %p123
    %p125 = scmp.ne.s32.totalorder %s114, %s115
    %p126 = scmp.eq.s32.totalorder %s14, 0
    %p127 = por %p125, %p126
    %p128 = scmp.ne.s32.totalorder %s114, %s115
    %p129 = scmp.eq.s32.totalorder %s15, 1
    %p130 = por %p128, %p129
    %p132 = scmp.ne.s32.totalorder %s115, %s131
    %p133 = scmp.eq.s32.totalorder %s15, 0
    %p134 = por %p132, %p133
    %p135 = scmp.le.s32.totalorder 1, %s9
    %p136 = scmp.lt.s32.totalorder %s9, 3
    %p137 = pnand %p135, %p136
    %p138 = pneg %p137
    // Predicated region
    $region9: #{bottleneck_forward.4} parent=5 // pred_check
      _
    $region10: #{bottleneck_forward.4} parent=5 // pred_check_branch
      %140 = sbr.rel (%p137) target = $region12
    $region11: #{bottleneck_forward.4} parent=5 // pred_region
      %s141 = ssub.s32 %s9, 1
      // Predicated region
      $region13: #{bottleneck_forward.4} parent=11 // pred_check
        %p142 = pneg %p73
      $region14: #{bottleneck_forward.4} parent=11 // pred_check_branch
        %144 = sbr.rel (%p142) target = $region16
      $region15: #{bottleneck_forward.4} parent=11 // pred_region
        %p145 = scmp.lt.s32.totalorder %s19, 0
        %s146 = scalar_select %p145, %s19, 0
        %s147 = smul.addr %s146, 4
        %s148 = scalar_lea.vmem %s1, %s147
      $region16: #{bottleneck_forward.4} parent=11 // pred_fallthru
        _
      // Predicated region
      $region17: #{bottleneck_forward.4} parent=11 // pred_check
        %p149 = pneg %p99
      $region18: #{bottleneck_forward.4} parent=11 // pred_check_branch
        %151 = sbr.rel (%p149) target = $region20
      $region19: #{bottleneck_forward.4} parent=11 // pred_region
        %p152 = scmp.lt.s32.totalorder %s19, 0
        %s153 = scalar_select %p152, %s19, 0
        %s154 = scalar_lea.vmem %s2, %s153
      $region20: #{bottleneck_forward.4} parent=11 // pred_fallthru
        _
    $region12: #{bottleneck_forward.4} parent=5 // pred_fallthru
      _
    %p155 = scmp.lt.s32.totalorder %s9, 2
    // Predicated region
    $region21: #{bottleneck_forward.4} parent=5 // pred_check
      %p156 = pneg %p155
    $region22: #{bottleneck_forward.4} parent=5 // pred_check_branch
      %158 = sbr.rel (%p156) target = $region24
    $region23: #{bottleneck_forward.4} parent=5 // pred_region
      // Predicated region
      $region25: #{bottleneck_forward.4} parent=23 // pred_check
        %p159 = pneg %p41
      $region26: #{bottleneck_forward.4} parent=23 // pred_check_branch
        %161 = sbr.rel (%p159) target = $region28
      $region27: #{bottleneck_forward.4} parent=23 // pred_region
        %p162 = scmp.lt.s32.totalorder %s16, 1
        %s163 = scalar_select %p162, %s16, 1
        %s164 = smul.addr %s163, 108
        %s165 = smul.addr %s164, 4
        %s166 = scalar_lea.vmem %s0, %s165
      $region28: #{bottleneck_forward.4} parent=23 // pred_fallthru
        _
    $region24: #{bottleneck_forward.4} parent=5 // pred_fallthru
      _
    %p167 = scmp.le.s32.totalorder 1, %s9
    %p168 = scmp.lt.s32.totalorder %s9, 3
    %p169 = pnand %p167, %p168
    %p170 = pneg %p169
    // Predicated region
    $region29: #{bottleneck_forward.4} parent=5 // pred_check
      _
    $region30: #{bottleneck_forward.4} parent=5 // pred_check_branch
      %172 = sbr.rel (%p169) target = $region32
    $region31: #{bottleneck_forward.4} parent=5 // pred_region
      %s173 = ssub.s32 %s9, 1
      %p174 = scmp.lt.s32.totalorder %s18, 1
      %s175 = scalar_select %p174, %s18, 1
      %s176 = smul.addr %s175, 108
      %s177 = smul.addr %s176, 4
      %s178 = scalar_lea.vmem %s0, %s177
      %p179 = pneg %p47
      %p180 = pneg %p44
      %p181 = scmp.lt.s32.totalorder %s19, 0
      %s182 = scalar_select %p181, %s19, 0
      %s183 = smul.addr %s182, 4
      %s184 = scalar_lea.vmem %s1, %s183
      %p185 = pneg %p73
      %p186 = pneg %p70
      %p187 = scmp.lt.s32.totalorder %s19, 0
      %s188 = scalar_select %p187, %s19, 0
      %s189 = scalar_lea.vmem %s2, %s188
      %p190 = pneg %p99
      %p191 = pneg %p96
      %p192 = pneg %p127
      %p193 = pneg %p124
      %p194 = scmp.lt.s32.totalorder %s18, 1
      %s195 = scalar_select %p194, %s18, 1
      %p196 = scmp.lt.s32.totalorder %s19, 0
      %s197 = scalar_select %p196, %s19, 0
      %s198 = smul.addr %s195, 32
      %s199 = sadd.s32 %s197, %s198
      %s200 = smul.addr %s199, 4
      %s201 = scalar_lea.vmem %s3, %s200
      %p202 = scmp.lt.s32.totalorder %s18, 1
      %s203 = scalar_select %p202, %s18, 1
      %s204 = smul.addr %s203, 108
      %s205 = smul.addr %s204, 4
      %s206 = scalar_lea.vmem %s0, %s205
      %p207 = scmp.lt.s32.totalorder %s19, 0
      %s208 = scalar_select %p207, %s19, 0
      %s209 = smul.addr %s208, 4
      %s210 = scalar_lea.vmem %s1, %s209
      %p211 = scmp.lt.s32.totalorder %s19, 0
      %s212 = scalar_select %p211, %s19, 0
      %s213 = scalar_lea.vmem %s2, %s212
      %p214 = scmp.lt.s32.totalorder %s18, 1
      %s215 = scalar_select %p214, %s18, 1
      %p216 = scmp.lt.s32.totalorder %s19, 0
      %s217 = scalar_select %p216, %s19, 0
      %s218 = smul.addr %s215, 32
      %s219 = sadd.s32 %s217, %s218
      %s220 = smul.addr %s219, 4
      %s221 = scalar_lea.vmem %s3, %s220
      %v223 = vld [vmem:[%s206] sm:$0xff]
      %v224 = vld [vmem:[%s206 + $0x8] sm:$0xf]
      %v225 = vld [vmem:[%s206 + $0xc] sm:$0xff]
      %v226 = vld [vmem:[%s206 + $0x14] sm:$0xf]
      %v227 = vld [vmem:[%s206 + $0x18] sm:$0xff]
      %v228 = vld [vmem:[%s206 + $0x20] sm:$0xf]
      %v229 = vld [vmem:[%s206 + $0x24] sm:$0xff]
      %v230 = vld [vmem:[%s206 + $0x2c] sm:$0xf]
      %v231 = vld [vmem:[%s206 + $0x30] sm:$0xff]
      %v232 = vld [vmem:[%s206 + $0x38] sm:$0xf]
      %v233 = vld [vmem:[%s206 + $0x3c] sm:$0xff]
      %v234 = vld [vmem:[%s206 + $0x44] sm:$0xf]
      %v235 = vld [vmem:[%s206 + $0x48] sm:$0xff]
      %v236 = vld [vmem:[%s206 + $0x50] sm:$0xf]
      %v237 = vld [vmem:[%s206 + $0x54] sm:$0xff]
      %v238 = vld [vmem:[%s206 + $0x5c] sm:$0xf]
      %v239 = vld [vmem:[%s206 + $0x60] sm:$0xff]
      %v240 = vld [vmem:[%s206 + $0x68] sm:$0xf]
      %v241 = vld [vmem:[%s206 + $0x6c] sm:$0xff]
      %v242 = vld [vmem:[%s206 + $0x74] sm:$0xf]
      %v243 = vld [vmem:[%s206 + $0x78] sm:$0xff]
      %v244 = vld [vmem:[%s206 + $0x80] sm:$0xf]
      %v245 = vld [vmem:[%s206 + $0x84] sm:$0xff]
      %v246 = vld [vmem:[%s206 + $0x8c] sm:$0xf]
      %v247 = vld [vmem:[%s206 + $0x90] sm:$0xff]
      %v248 = vld [vmem:[%s206 + $0x98] sm:$0xf]
      %v249 = vld [vmem:[%s206 + $0x9c] sm:$0xff]
      %v250 = vld [vmem:[%s206 + $0xa4] sm:$0xf]
      %v251 = vld [vmem:[%s206 + $0xa8] sm:$0xff]
      %v252 = vld [vmem:[%s206 + $0xb0] sm:$0xf]
      %v253 = vld [vmem:[%s206 + $0xb4] sm:$0xff]
      %v254 = vld [vmem:[%s206 + $0xbc] sm:$0xf]
      %v255 = vld [vmem:[%s206 + $0xc0] sm:$0xff]
      %v256 = vld [vmem:[%s206 + $0xc8] sm:$0xf]
      %v257 = vld [vmem:[%s206 + $0xcc] sm:$0xff]
      %v258 = vld [vmem:[%s206 + $0xd4] sm:$0xf]
      %v259 = vld [vmem:[%s206 + $0xd8] sm:$0xff]
      %v260 = vld [vmem:[%s206 + $0xe0] sm:$0xf]
      %v261 = vld [vmem:[%s206 + $0xe4] sm:$0xff]
      %v262 = vld [vmem:[%s206 + $0xec] sm:$0xf]
      %v263 = vld [vmem:[%s206 + $0xf0] sm:$0xff]
      %v264 = vld [vmem:[%s206 + $0xf8] sm:$0xf]
      %v265 = vld [vmem:[%s206 + $0xfc] sm:$0xff]
      %v266 = vld [vmem:[%s206 + $0x104] sm:$0xf]
      %v267 = vld [vmem:[%s206 + $0x108] sm:$0xff]
      %v268 = vld [vmem:[%s206 + $0x110] sm:$0xf]
      %v269 = vld [vmem:[%s206 + $0x114] sm:$0xff]
      %v270 = vld [vmem:[%s206 + $0x11c] sm:$0xf]
      %v271 = vld [vmem:[%s206 + $0x120] sm:$0xff]
      %v272 = vld [vmem:[%s206 + $0x128] sm:$0xf]
      %v273 = vld [vmem:[%s206 + $0x12c] sm:$0xff]
      %v274 = vld [vmem:[%s206 + $0x134] sm:$0xf]
      %v275 = vld [vmem:[%s206 + $0x138] sm:$0xff]
      %v276 = vld [vmem:[%s206 + $0x140] sm:$0xf]
      %v277 = vld [vmem:[%s206 + $0x144] sm:$0xff]
      %v278 = vld [vmem:[%s206 + $0x14c] sm:$0xf]
      %v279 = vld [vmem:[%s206 + $0x150] sm:$0xff]
      %v280 = vld [vmem:[%s206 + $0x158] sm:$0xf]
      %v281 = vld [vmem:[%s206 + $0x15c] sm:$0xff]
      %v282 = vld [vmem:[%s206 + $0x164] sm:$0xf]
      %v283 = vld [vmem:[%s206 + $0x168] sm:$0xff]
      %v284 = vld [vmem:[%s206 + $0x170] sm:$0xf]
      %v285 = vld [vmem:[%s206 + $0x174] sm:$0xff]
      %v286 = vld [vmem:[%s206 + $0x17c] sm:$0xf]
      %v287 = vld [vmem:[%s210] sm:$0xf]
      %v288 = vld [vmem:[%s210 + $0x4] sm:$0xf]
      %v289 = vld [vmem:[%s210 + $0x8] sm:$0xf]
      %v290 = vld [vmem:[%s210 + $0xc] sm:$0xf]
      %v291 = vld [vmem:[%s210 + $0x10] sm:$0xf]
      %v292 = vld [vmem:[%s210 + $0x14] sm:$0xf]
      %v293 = vld [vmem:[%s210 + $0x18] sm:$0xf]
      %v294 = vld [vmem:[%s210 + $0x1c] sm:$0xf]
      %v295 = vld [vmem:[%s210 + $0x20] sm:$0xf]
      %v296 = vld [vmem:[%s210 + $0x24] sm:$0xf]
      %v297 = vld [vmem:[%s210 + $0x28] sm:$0xf]
      %v298 = vld [vmem:[%s210 + $0x2c] sm:$0xf]
      %v299 = vld [vmem:[%s210 + $0x30] sm:$0xf]
      %v300 = vld [vmem:[%s210 + $0x34] sm:$0xf]
      %v301 = vld [vmem:[%s210 + $0x38] sm:$0xf]
      %v302 = vld [vmem:[%s210 + $0x3c] sm:$0xf]
      %v303 = vld [vmem:[%s210 + $0x40] sm:$0xf]
      %v304 = vld [vmem:[%s210 + $0x44] sm:$0xf]
      %v305 = vld [vmem:[%s210 + $0x48] sm:$0xf]
      %v306 = vld [vmem:[%s210 + $0x4c] sm:$0xf]
      %v307 = vld [vmem:[%s210 + $0x50] sm:$0xf]
      %v308 = vld [vmem:[%s210 + $0x54] sm:$0xf]
      %v309 = vld [vmem:[%s210 + $0x58] sm:$0xf]
      %v310 = vld [vmem:[%s210 + $0x5c] sm:$0xf]
      %v311 = vld [vmem:[%s210 + $0x60] sm:$0xf]
      %v312 = vld [vmem:[%s210 + $0x64] sm:$0xf]
      %v313 = vld [vmem:[%s210 + $0x68] sm:$0xf]
      %v314 = vld [vmem:[%s210 + $0x6c] sm:$0xf]
      %v315 = vld [vmem:[%s210 + $0x70] sm:$0xf]
      %v316 = vld [vmem:[%s210 + $0x74] sm:$0xf]
      %v317 = vld [vmem:[%s210 + $0x78] sm:$0xf]
      %v318 = vld [vmem:[%s210 + $0x7c] sm:$0xf]
      %v319 = vld [vmem:[%s210 + $0x80] sm:$0xf]
      %v320 = vld [vmem:[%s210 + $0x84] sm:$0xf]
      %v321 = vld [vmem:[%s210 + $0x88] sm:$0xf]
      %v322 = vld [vmem:[%s210 + $0x8c] sm:$0xf]
      %v323 = vld [vmem:[%s210 + $0x90] sm:$0xf]
      %v324 = vld [vmem:[%s210 + $0x94] sm:$0xf]
      %v325 = vld [vmem:[%s210 + $0x98] sm:$0xf]
      %v326 = vld [vmem:[%s210 + $0x9c] sm:$0xf]
      %v327 = vld [vmem:[%s210 + $0xa0] sm:$0xf]
      %v328 = vld [vmem:[%s210 + $0xa4] sm:$0xf]
      %v329 = vld [vmem:[%s210 + $0xa8] sm:$0xf]
      %v330 = vld [vmem:[%s210 + $0xac] sm:$0xf]
      %v331 = vld [vmem:[%s210 + $0xb0] sm:$0xf]
      %v332 = vld [vmem:[%s210 + $0xb4] sm:$0xf]
      %v333 = vld [vmem:[%s210 + $0xb8] sm:$0xf]
      %v334 = vld [vmem:[%s210 + $0xbc] sm:$0xf]
      %s335 = scalar_lea.vmem %s206, 24
      %v336 = vld [vmem:[%s335] sm:$0xff]
      %v337 = vld [vmem:[%s335 + $0x8] sm:$0xf]
      %v338 = vld [vmem:[%s335 + $0xc] sm:$0xff]
      %v339 = vld [vmem:[%s335 + $0x14] sm:$0xf]
      %v340 = vld [vmem:[%s335 + $0x18] sm:$0xff]
      %v341 = vld [vmem:[%s335 + $0x20] sm:$0xf]
      %v342 = vld [vmem:[%s335 + $0x24] sm:$0xff]
      %v343 = vld [vmem:[%s335 + $0x2c] sm:$0xf]
      %v344 = vld [vmem:[%s335 + $0x30] sm:$0xff]
      %v345 = vld [vmem:[%s335 + $0x38] sm:$0xf]
      %v346 = vld [vmem:[%s335 + $0x3c] sm:$0xff]
      %v347 = vld [vmem:[%s335 + $0x44] sm:$0xf]
      %v348 = vld [vmem:[%s335 + $0x48] sm:$0xff]
      %v349 = vld [vmem:[%s335 + $0x50] sm:$0xf]
      %v350 = vld [vmem:[%s335 + $0x54] sm:$0xff]
      %v351 = vld [vmem:[%s335 + $0x5c] sm:$0xf]
      %v352 = vld [vmem:[%s335 + $0x60] sm:$0xff]
      %v353 = vld [vmem:[%s335 + $0x68] sm:$0xf]
      %v354 = vld [vmem:[%s335 + $0x6c] sm:$0xff]
      %v355 = vld [vmem:[%s335 + $0x74] sm:$0xf]
      %v356 = vld [vmem:[%s335 + $0x78] sm:$0xff]
      %v357 = vld [vmem:[%s335 + $0x80] sm:$0xf]
      %v358 = vld [vmem:[%s335 + $0x84] sm:$0xff]
      %v359 = vld [vmem:[%s335 + $0x8c] sm:$0xf]
      %v360 = vld [vmem:[%s335 + $0x90] sm:$0xff]
      %v361 = vld [vmem:[%s335 + $0x98] sm:$0xf]
      %v362 = vld [vmem:[%s335 + $0x9c] sm:$0xff]
      %v363 = vld [vmem:[%s335 + $0xa4] sm:$0xf]
      %v364 = vld [vmem:[%s335 + $0xa8] sm:$0xff]
      %v365 = vld [vmem:[%s335 + $0xb0] sm:$0xf]
      %v366 = vld [vmem:[%s335 + $0xb4] sm:$0xff]
      %v367 = vld [vmem:[%s335 + $0xbc] sm:$0xf]
      %v368 = vld [vmem:[%s335 + $0xc0] sm:$0xff]
      %v369 = vld [vmem:[%s335 + $0xc8] sm:$0xf]
      %v370 = vld [vmem:[%s335 + $0xcc] sm:$0xff]
      %v371 = vld [vmem:[%s335 + $0xd4] sm:$0xf]
      %v372 = vld [vmem:[%s335 + $0xd8] sm:$0xff]
      %v373 = vld [vmem:[%s335 + $0xe0] sm:$0xf]
      %v374 = vld [vmem:[%s335 + $0xe4] sm:$0xff]
      %v375 = vld [vmem:[%s335 + $0xec] sm:$0xf]
      %v376 = vld [vmem:[%s335 + $0xf0] sm:$0xff]
      %v377 = vld [vmem:[%s335 + $0xf8] sm:$0xf]
      %v378 = vld [vmem:[%s335 + $0xfc] sm:$0xff]
      %v379 = vld [vmem:[%s335 + $0x104] sm:$0xf]
      %v380 = vld [vmem:[%s335 + $0x108] sm:$0xff]
      %v381 = vld [vmem:[%s335 + $0x110] sm:$0xf]
      %v382 = vld [vmem:[%s335 + $0x114] sm:$0xff]
      %v383 = vld [vmem:[%s335 + $0x11c] sm:$0xf]
      %v384 = vld [vmem:[%s335 + $0x120] sm:$0xff]
      %v385 = vld [vmem:[%s335 + $0x128] sm:$0xf]
      %v386 = vld [vmem:[%s335 + $0x12c] sm:$0xff]
      %v387 = vld [vmem:[%s335 + $0x134] sm:$0xf]
      %v388 = vld [vmem:[%s335 + $0x138] sm:$0xff]
      %v389 = vld [vmem:[%s335 + $0x140] sm:$0xf]
      %v390 = vld [vmem:[%s335 + $0x144] sm:$0xff]
      %v391 = vld [vmem:[%s335 + $0x14c] sm:$0xf]
      %v392 = vld [vmem:[%s335 + $0x150] sm:$0xff]
      %v393 = vld [vmem:[%s335 + $0x158] sm:$0xf]
      %v394 = vld [vmem:[%s335 + $0x15c] sm:$0xff]
      %v395 = vld [vmem:[%s335 + $0x164] sm:$0xf]
      %v396 = vld [vmem:[%s335 + $0x168] sm:$0xff]
      %v397 = vld [vmem:[%s335 + $0x170] sm:$0xf]
      %v398 = vld [vmem:[%s335 + $0x174] sm:$0xff]
      %v399 = vld [vmem:[%s335 + $0x17c] sm:$0xf]
      %s400 = scalar_lea.vmem %s210, 192
      %v401 = vld [vmem:[%s400] sm:$0xf]
      %v402 = vld [vmem:[%s400 + $0x4] sm:$0xf]
      %v403 = vld [vmem:[%s400 + $0x8] sm:$0xf]
      %v404 = vld [vmem:[%s400 + $0xc] sm:$0xf]
      %v405 = vld [vmem:[%s400 + $0x10] sm:$0xf]
      %v406 = vld [vmem:[%s400 + $0x14] sm:$0xf]
      %v407 = vld [vmem:[%s400 + $0x18] sm:$0xf]
      %v408 = vld [vmem:[%s400 + $0x1c] sm:$0xf]
      %v409 = vld [vmem:[%s400 + $0x20] sm:$0xf]
      %v410 = vld [vmem:[%s400 + $0x24] sm:$0xf]
      %v411 = vld [vmem:[%s400 + $0x28] sm:$0xf]
      %v412 = vld [vmem:[%s400 + $0x2c] sm:$0xf]
      %v413 = vld [vmem:[%s400 + $0x30] sm:$0xf]
      %v414 = vld [vmem:[%s400 + $0x34] sm:$0xf]
      %v415 = vld [vmem:[%s400 + $0x38] sm:$0xf]
      %v416 = vld [vmem:[%s400 + $0x3c] sm:$0xf]
      %v417 = vld [vmem:[%s400 + $0x40] sm:$0xf]
      %v418 = vld [vmem:[%s400 + $0x44] sm:$0xf]
      %v419 = vld [vmem:[%s400 + $0x48] sm:$0xf]
      %v420 = vld [vmem:[%s400 + $0x4c] sm:$0xf]
      %v421 = vld [vmem:[%s400 + $0x50] sm:$0xf]
      %v422 = vld [vmem:[%s400 + $0x54] sm:$0xf]
      %v423 = vld [vmem:[%s400 + $0x58] sm:$0xf]
      %v424 = vld [vmem:[%s400 + $0x5c] sm:$0xf]
      %v425 = vld [vmem:[%s400 + $0x60] sm:$0xf]
      %v426 = vld [vmem:[%s400 + $0x64] sm:$0xf]
      %v427 = vld [vmem:[%s400 + $0x68] sm:$0xf]
      %v428 = vld [vmem:[%s400 + $0x6c] sm:$0xf]
      %v429 = vld [vmem:[%s400 + $0x70] sm:$0xf]
      %v430 = vld [vmem:[%s400 + $0x74] sm:$0xf]
      %v431 = vld [vmem:[%s400 + $0x78] sm:$0xf]
      %v432 = vld [vmem:[%s400 + $0x7c] sm:$0xf]
      %v433 = vld [vmem:[%s400 + $0x80] sm:$0xf]
      %v434 = vld [vmem:[%s400 + $0x84] sm:$0xf]
      %v435 = vld [vmem:[%s400 + $0x88] sm:$0xf]
      %v436 = vld [vmem:[%s400 + $0x8c] sm:$0xf]
      %v437 = vld [vmem:[%s400 + $0x90] sm:$0xf]
      %v438 = vld [vmem:[%s400 + $0x94] sm:$0xf]
      %v439 = vld [vmem:[%s400 + $0x98] sm:$0xf]
      %v440 = vld [vmem:[%s400 + $0x9c] sm:$0xf]
      %v441 = vld [vmem:[%s400 + $0xa0] sm:$0xf]
      %v442 = vld [vmem:[%s400 + $0xa4] sm:$0xf]
      %v443 = vld [vmem:[%s400 + $0xa8] sm:$0xf]
      %v444 = vld [vmem:[%s400 + $0xac] sm:$0xf]
      %v445 = vld [vmem:[%s400 + $0xb0] sm:$0xf]
      %v446 = vld [vmem:[%s400 + $0xb4] sm:$0xf]
      %v447 = vld [vmem:[%s400 + $0xb8] sm:$0xf]
      %v448 = vld [vmem:[%s400 + $0xbc] sm:$0xf]
      %v513 = vunpack.c.l.b16 %v336
      %v514 = vunpack.c.h.b16 %v336
      %v515 = vunpack.c.l.b16 %v337
      %v516 = vunpack.c.l.b16 %v338
      %v517 = vunpack.c.h.b16 %v338
      %v518 = vunpack.c.l.b16 %v339
      %v519 = vunpack.c.l.b16 %v340
      %v520 = vunpack.c.h.b16 %v340
      %v521 = vunpack.c.l.b16 %v341
      %v522 = vunpack.c.l.b16 %v342
      %v523 = vunpack.c.h.b16 %v342
      %v524 = vunpack.c.l.b16 %v343
      %v525 = vunpack.c.l.b16 %v344
      %v526 = vunpack.c.h.b16 %v344
      %v527 = vunpack.c.l.b16 %v345
      %v528 = vunpack.c.l.b16 %v346
      %v529 = vunpack.c.h.b16 %v346
      %v530 = vunpack.c.l.b16 %v347
      %v531 = vunpack.c.l.b16 %v348
      %v532 = vunpack.c.h.b16 %v348
      %v533 = vunpack.c.l.b16 %v349
      %v534 = vunpack.c.l.b16 %v350
      %v535 = vunpack.c.h.b16 %v350
      %v536 = vunpack.c.l.b16 %v351
      %v537 = vunpack.c.l.b16 %v352
      %v538 = vunpack.c.h.b16 %v352
      %v539 = vunpack.c.l.b16 %v353
      %v540 = vunpack.c.l.b16 %v354
      %v541 = vunpack.c.h.b16 %v354
      %v542 = vunpack.c.l.b16 %v355
      %v543 = vunpack.c.l.b16 %v356
      %v544 = vunpack.c.h.b16 %v356
      %v545 = vunpack.c.l.b16 %v357
      %v546 = vunpack.c.l.b16 %v358
      %v547 = vunpack.c.h.b16 %v358
      %v548 = vunpack.c.l.b16 %v359
      %v549 = vunpack.c.l.b16 %v360
      %v550 = vunpack.c.h.b16 %v360
      %v551 = vunpack.c.l.b16 %v361
      %v552 = vunpack.c.l.b16 %v362
      %v553 = vunpack.c.h.b16 %v362
      %v554 = vunpack.c.l.b16 %v363
      %v555 = vunpack.c.l.b16 %v364
      %v556 = vunpack.c.h.b16 %v364
      %v557 = vunpack.c.l.b16 %v365
      %v558 = vunpack.c.l.b16 %v366
      %v559 = vunpack.c.h.b16 %v366
      %v560 = vunpack.c.l.b16 %v367
      %v561 = vunpack.c.l.b16 %v368
      %v562 = vunpack.c.h.b16 %v368
      %v563 = vunpack.c.l.b16 %v369
      %v564 = vunpack.c.l.b16 %v370
      %v565 = vunpack.c.h.b16 %v370
      %v566 = vunpack.c.l.b16 %v371
      %v567 = vunpack.c.l.b16 %v372
      %v568 = vunpack.c.h.b16 %v372
      %v569 = vunpack.c.l.b16 %v373
      %v570 = vunpack.c.l.b16 %v374
      %v571 = vunpack.c.h.b16 %v374
      %v572 = vunpack.c.l.b16 %v375
      %v573 = vunpack.c.l.b16 %v376
      %v574 = vunpack.c.h.b16 %v376
      %v575 = vunpack.c.l.b16 %v377
      %v576 = vunpack.c.l.b16 %v378
      %v577 = vunpack.c.h.b16 %v378
      %v578 = vunpack.c.l.b16 %v379
      %v579 = vunpack.c.l.b16 %v380
      %v580 = vunpack.c.h.b16 %v380
      %v581 = vunpack.c.l.b16 %v381
      %v582 = vunpack.c.l.b16 %v382
      %v583 = vunpack.c.h.b16 %v382
      %v584 = vunpack.c.l.b16 %v383
      %v585 = vunpack.c.l.b16 %v384
      %v586 = vunpack.c.h.b16 %v384
      %v587 = vunpack.c.l.b16 %v385
      %v588 = vunpack.c.l.b16 %v386
      %v589 = vunpack.c.h.b16 %v386
      %v590 = vunpack.c.l.b16 %v387
      %v591 = vunpack.c.l.b16 %v388
      %v592 = vunpack.c.h.b16 %v388
      %v593 = vunpack.c.l.b16 %v389
      %v594 = vunpack.c.l.b16 %v390
      %v595 = vunpack.c.h.b16 %v390
      %v596 = vunpack.c.l.b16 %v391
      %v597 = vunpack.c.l.b16 %v392
      %v598 = vunpack.c.h.b16 %v392
      %v599 = vunpack.c.l.b16 %v393
      %v600 = vunpack.c.l.b16 %v394
      %v601 = vunpack.c.h.b16 %v394
      %v602 = vunpack.c.l.b16 %v395
      %v603 = vunpack.c.l.b16 %v396
      %v604 = vunpack.c.h.b16 %v396
      %v605 = vunpack.c.l.b16 %v397
      %v606 = vunpack.c.l.b16 %v398
      %v607 = vunpack.c.h.b16 %v398
      %v608 = vunpack.c.l.b16 %v399
      %v609 = vpack.c.b16 %v516, %v513
      %v610 = vpack.c.b16 %v517, %v514
      %v611 = vpack.c.b16 %v518, %v515
      %v612 = vpack.c.b16 %v522, %v519
      %v613 = vpack.c.b16 %v523, %v520
      %v614 = vpack.c.b16 %v524, %v521
      %v615 = vpack.c.b16 %v528, %v525
      %v616 = vpack.c.b16 %v529, %v526
      %v617 = vpack.c.b16 %v530, %v527
      %v618 = vpack.c.b16 %v534, %v531
      %v619 = vpack.c.b16 %v535, %v532
      %v620 = vpack.c.b16 %v536, %v533
      %v621 = vpack.c.b16 %v540, %v537
      %v622 = vpack.c.b16 %v541, %v538
      %v623 = vpack.c.b16 %v542, %v539
      %v624 = vpack.c.b16 %v546, %v543
      %v625 = vpack.c.b16 %v547, %v544
      %v626 = vpack.c.b16 %v548, %v545
      %v627 = vpack.c.b16 %v552, %v549
      %v628 = vpack.c.b16 %v553, %v550
      %v629 = vpack.c.b16 %v554, %v551
      %v630 = vpack.c.b16 %v558, %v555
      %v631 = vpack.c.b16 %v559, %v556
      %v632 = vpack.c.b16 %v560, %v557
      %v633 = vpack.c.b16 %v564, %v561
      %v634 = vpack.c.b16 %v565, %v562
      %v635 = vpack.c.b16 %v566, %v563
      %v636 = vpack.c.b16 %v570, %v567
      %v637 = vpack.c.b16 %v571, %v568
      %v638 = vpack.c.b16 %v572, %v569
      %v639 = vpack.c.b16 %v576, %v573
      %v640 = vpack.c.b16 %v577, %v574
      %v641 = vpack.c.b16 %v578, %v575
      %v642 = vpack.c.b16 %v582, %v579
      %v643 = vpack.c.b16 %v583, %v580
      %v644 = vpack.c.b16 %v584, %v581
      %v645 = vpack.c.b16 %v588, %v585
      %v646 = vpack.c.b16 %v589, %v586
      %v647 = vpack.c.b16 %v590, %v587
      %v648 = vpack.c.b16 %v594, %v591
      %v649 = vpack.c.b16 %v595, %v592
      %v650 = vpack.c.b16 %v596, %v593
      %v651 = vpack.c.b16 %v600, %v597
      %v652 = vpack.c.b16 %v601, %v598
      %v653 = vpack.c.b16 %v602, %v599
      %v654 = vpack.c.b16 %v606, %v603
      %v655 = vpack.c.b16 %v607, %v604
      %v656 = vpack.c.b16 %v608, %v605
      %v753 = vunpack.c.l.b16 %v401
      %v754 = vunpack.c.l.b16 %v402
      %v755 = vunpack.c.l.b16 %v403
      %v756 = vunpack.c.l.b16 %v404
      %v757 = vunpack.c.l.b16 %v405
      %v758 = vunpack.c.l.b16 %v406
      %v759 = vunpack.c.l.b16 %v407
      %v760 = vunpack.c.l.b16 %v408
      %v761 = vunpack.c.l.b16 %v409
      %v762 = vunpack.c.l.b16 %v410
      %v763 = vunpack.c.l.b16 %v411
      %v764 = vunpack.c.l.b16 %v412
      %v765 = vunpack.c.l.b16 %v413
      %v766 = vunpack.c.l.b16 %v414
      %v767 = vunpack.c.l.b16 %v415
      %v768 = vunpack.c.l.b16 %v416
      %v769 = vunpack.c.l.b16 %v417
      %v770 = vunpack.c.l.b16 %v418
      %v771 = vunpack.c.l.b16 %v419
      %v772 = vunpack.c.l.b16 %v420
      %v773 = vunpack.c.l.b16 %v421
      %v774 = vunpack.c.l.b16 %v422
      %v775 = vunpack.c.l.b16 %v423
      %v776 = vunpack.c.l.b16 %v424
      %v777 = vunpack.c.l.b16 %v425
      %v778 = vunpack.c.l.b16 %v426
      %v779 = vunpack.c.l.b16 %v427
      %v780 = vunpack.c.l.b16 %v428
      %v781 = vunpack.c.l.b16 %v429
      %v782 = vunpack.c.l.b16 %v430
      %v783 = vunpack.c.l.b16 %v431
      %v784 = vunpack.c.l.b16 %v432
      %v785 = vunpack.c.l.b16 %v433
      %v786 = vunpack.c.l.b16 %v434
      %v787 = vunpack.c.l.b16 %v435
      %v788 = vunpack.c.l.b16 %v436
      %v789 = vunpack.c.l.b16 %v437
      %v790 = vunpack.c.l.b16 %v438
      %v791 = vunpack.c.l.b16 %v439
      %v792 = vunpack.c.l.b16 %v440
      %v793 = vunpack.c.l.b16 %v441
      %v794 = vunpack.c.l.b16 %v442
      %v795 = vunpack.c.l.b16 %v443
      %v796 = vunpack.c.l.b16 %v444
      %v797 = vunpack.c.l.b16 %v445
      %v798 = vunpack.c.l.b16 %v446
      %v799 = vunpack.c.l.b16 %v447
      %v800 = vunpack.c.l.b16 %v448
      %v801 = vpack.c.b16 %v754, %v753
      %v802 = vpack.c.b16 %v756, %v755
      %v803 = vpack.c.b16 %v758, %v757
      %v804 = vpack.c.b16 %v760, %v759
      %v805 = vpack.c.b16 %v762, %v761
      %v806 = vpack.c.b16 %v764, %v763
      %v807 = vpack.c.b16 %v766, %v765
      %v808 = vpack.c.b16 %v768, %v767
      %v809 = vpack.c.b16 %v770, %v769
      %v810 = vpack.c.b16 %v772, %v771
      %v811 = vpack.c.b16 %v774, %v773
      %v812 = vpack.c.b16 %v776, %v775
      %v813 = vpack.c.b16 %v778, %v777
      %v814 = vpack.c.b16 %v780, %v779
      %v815 = vpack.c.b16 %v782, %v781
      %v816 = vpack.c.b16 %v784, %v783
      %v817 = vpack.c.b16 %v786, %v785
      %v818 = vpack.c.b16 %v788, %v787
      %v819 = vpack.c.b16 %v790, %v789
      %v820 = vpack.c.b16 %v792, %v791
      %v821 = vpack.c.b16 %v794, %v793
      %v822 = vpack.c.b16 %v796, %v795
      %v823 = vpack.c.b16 %v798, %v797
      %v824 = vpack.c.b16 %v800, %v799
      %849 = vmatprep.subr.bf16.mxu0 0
      %850 = vmatpush1.bf16.msra.mxu0 %v801
      %851 = vmatprep.subr.bf16.mxu0 0
      %852 = vmatpush1.bf16.msra.mxu0 %v802
      %853 = vmatprep.subr.bf16.mxu0 0
      %854 = vmatpush1.bf16.msra.mxu0 %v803
      %855 = vmatprep.subr.bf16.mxu0 0
      %856 = vmatpush1.bf16.msra.mxu0 %v804
      %857 = vmatprep.subr.bf16.mxu0 0
      %858 = vmatpush1.bf16.msra.mxu0 %v805
      %859 = vmatprep.subr.bf16.mxu0 0
      %860 = vmatpush1.bf16.msra.mxu0 %v806
      %861 = vmatprep.subr.bf16.mxu0 0
      %862 = vmatpush1.bf16.msra.mxu0 %v807
      %863 = vmatprep.subr.bf16.mxu0 0
      %864 = vmatpush1.bf16.msra.mxu0 %v808
      %865 = vmatprep.subr.bf16.mxu0 0
      %866 = vmatpush1.bf16.msra.mxu0 %v809
      %867 = vmatprep.subr.bf16.mxu0 0
      %868 = vmatpush1.bf16.msra.mxu0 %v810
      %869 = vmatprep.subr.bf16.mxu0 0
      %870 = vmatpush1.bf16.msra.mxu0 %v811
      %871 = vmatprep.subr.bf16.mxu0 0
      %872 = vmatpush1.bf16.msra.mxu0 %v812
      %873 = vmatprep.subr.bf16.mxu0 0
      %874 = vmatpush1.bf16.msra.mxu0 %v813
      %875 = vmatprep.subr.bf16.mxu0 0
      %876 = vmatpush1.bf16.msra.mxu0 %v814
      %877 = vmatprep.subr.bf16.mxu0 0
      %878 = vmatpush1.bf16.msra.mxu0 %v815
      %879 = vmatprep.subr.bf16.mxu0 0
      %880 = vmatpush1.bf16.msra.mxu0 %v816
      %881 = vmatprep.mubr.bf16.mxu0 %v610
      %882 = vmatmul.mubr.bf16.gmra.mrb[0].mxu0 %v609
      %v883 = vpop.f32.mrb[0].mxu0
      %v884 = vadd.f32 0.0, %v883
      %v885 = vpop.f32.mrb[0].mxu0
      %v886 = vpop.f32.mrb[0].mxu0
      %v887 = vadd.f32 0.0, %v886
      %v888 = vpop.f32.mrb[0].mxu0
      %889 = vmatprep.mubr.bf16.mxu0 %v613
      %890 = vmatmul.mubr.bf16.gmra.mrb[0].mxu0 %v612
      %v891 = vpop.f32.mrb[0].mxu0
      %v892 = vadd.f32 0.0, %v891
      %v893 = vpop.f32.mrb[0].mxu0
      %v894 = vpop.f32.mrb[0].mxu0
      %v895 = vadd.f32 0.0, %v894
      %v896 = vpop.f32.mrb[0].mxu0
      %897 = vmatprep.mubr.bf16.mxu0 %v616
      %898 = vmatmul.mubr.bf16.gmra.mrb[0].mxu0 %v615
      %v899 = vpop.f32.mrb[0].mxu0
      %v900 = vadd.f32 0.0, %v899
      %v901 = vpop.f32.mrb[0].mxu0
      %v902 = vpop.f32.mrb[0].mxu0
      %v903 = vadd.f32 0.0, %v902
      %v904 = vpop.f32.mrb[0].mxu0
      %905 = vmatprep.mubr.bf16.mxu0 %v619
      %906 = vmatmul.mubr.bf16.gmra.mrb[0].mxu0 %v618
      %v907 = vpop.f32.mrb[0].mxu0
      %v908 = vadd.f32 0.0, %v907
      %v909 = vpop.f32.mrb[0].mxu0
      %v910 = vpop.f32.mrb[0].mxu0
      %v911 = vadd.f32 0.0, %v910
      %v912 = vpop.f32.mrb[0].mxu0
      %913 = vmatprep.mubr.bf16.mxu0 %v622
      %914 = vmatmul.mubr.bf16.gmra.mrb[0].mxu0 %v621
      %v915 = vpop.f32.mrb[0].mxu0
      %v916 = vadd.f32 0.0, %v915
      %v917 = vpop.f32.mrb[0].mxu0
      %v918 = vpop.f32.mrb[0].mxu0
      %v919 = vadd.f32 0.0, %v918
      %v920 = vpop.f32.mrb[0].mxu0
      %921 = vmatprep.mubr.bf16.mxu0 %v625
      %922 = vmatmul.mubr.bf16.gmra.mrb[0].mxu0 %v624
      %v923 = vpop.f32.mrb[0].mxu0
      %v924 = vadd.f32 0.0, %v923
      %v925 = vpop.f32.mrb[0].mxu0
      %v926 = vpop.f32.mrb[0].mxu0
      %v927 = vadd.f32 0.0, %v926
      %v928 = vpop.f32.mrb[0].mxu0
      %929 = vmatprep.mubr.bf16.mxu0 %v628
      %930 = vmatmul.mubr.bf16.gmra.mrb[0].mxu0 %v627
      %v931 = vpop.f32.mrb[0].mxu0
      %v932 = vadd.f32 0.0, %v931
      %v933 = vpop.f32.mrb[0].mxu0
      %v934 = vpop.f32.mrb[0].mxu0
      %v935 = vadd.f32 0.0, %v934
      %v936 = vpop.f32.mrb[0].mxu0
      %937 = vmatprep.mubr.bf16.mxu0 %v631
      %938 = vmatmul.mubr.bf16.gmra.mrb[0].mxu0 %v630
      %v939 = vpop.f32.mrb[0].mxu0
      %v940 = vadd.f32 0.0, %v939
      %v941 = vpop.f32.mrb[0].mxu0
      %v942 = vpop.f32.mrb[0].mxu0
      %v943 = vadd.f32 0.0, %v942
      %v944 = vpop.f32.mrb[0].mxu0
      %945 = vmatprep.mubr.bf16.mxu0 %v634
      %946 = vmatmul.mubr.bf16.gmra.mrb[0].mxu0 %v633
      %v947 = vpop.f32.mrb[0].mxu0
      %v948 = vadd.f32 0.0, %v947
      %v949 = vpop.f32.mrb[0].mxu0
      %v950 = vpop.f32.mrb[0].mxu0
      %v951 = vadd.f32 0.0, %v950
      %v952 = vpop.f32.mrb[0].mxu0
      %953 = vmatprep.mubr.bf16.mxu0 %v637
      %954 = vmatmul.mubr.bf16.gmra.mrb[0].mxu0 %v636
      %v955 = vpop.f32.mrb[0].mxu0
      %v956 = vadd.f32 0.0, %v955
      %v957 = vpop.f32.mrb[0].mxu0
      %v958 = vpop.f32.mrb[0].mxu0
      %v959 = vadd.f32 0.0, %v958
      %v960 = vpop.f32.mrb[0].mxu0
      %961 = vmatprep.mubr.bf16.mxu0 %v640
      %962 = vmatmul.mubr.bf16.gmra.mrb[0].mxu0 %v639
      %v963 = vpop.f32.mrb[0].mxu0
      %v964 = vadd.f32 0.0, %v963
      %v965 = vpop.f32.mrb[0].mxu0
      %v966 = vpop.f32.mrb[0].mxu0
      %v967 = vadd.f32 0.0, %v966
      %v968 = vpop.f32.mrb[0].mxu0
      %969 = vmatprep.mubr.bf16.mxu0 %v643
      %970 = vmatmul.mubr.bf16.gmra.mrb[0].mxu0 %v642
      %v971 = vpop.f32.mrb[0].mxu0
      %v972 = vadd.f32 0.0, %v971
      %v973 = vpop.f32.mrb[0].mxu0
      %v974 = vpop.f32.mrb[0].mxu0
      %v975 = vadd.f32 0.0, %v974
      %v976 = vpop.f32.mrb[0].mxu0
      %977 = vmatprep.mubr.bf16.mxu0 %v646
      %978 = vmatmul.mubr.bf16.gmra.mrb[0].mxu0 %v645
      %v979 = vpop.f32.mrb[0].mxu0
      %v980 = vadd.f32 0.0, %v979
      %v981 = vpop.f32.mrb[0].mxu0
      %v982 = vpop.f32.mrb[0].mxu0
      %v983 = vadd.f32 0.0, %v982
      %v984 = vpop.f32.mrb[0].mxu0
      %985 = vmatprep.mubr.bf16.mxu0 %v649
      %986 = vmatmul.mubr.bf16.gmra.mrb[0].mxu0 %v648
      %v987 = vpop.f32.mrb[0].mxu0
      %v988 = vadd.f32 0.0, %v987
      %v989 = vpop.f32.mrb[0].mxu0
      %v990 = vpop.f32.mrb[0].mxu0
      %v991 = vadd.f32 0.0, %v990
      %v992 = vpop.f32.mrb[0].mxu0
      %993 = vmatprep.mubr.bf16.mxu0 %v652
      %994 = vmatmul.mubr.bf16.gmra.mrb[0].mxu0 %v651
      %v995 = vpop.f32.mrb[0].mxu0
      %v996 = vadd.f32 0.0, %v995
      %v997 = vpop.f32.mrb[0].mxu0
      %v998 = vpop.f32.mrb[0].mxu0
      %v999 = vadd.f32 0.0, %v998
      %v1000 = vpop.f32.mrb[0].mxu0
      %1001 = vmatprep.mubr.bf16.mxu0 %v655
      %1002 = vmatmul.mubr.bf16.gmra.mrb[0].mxu0 %v654
      %v1003 = vpop.f32.mrb[0].mxu0
      %v1004 = vadd.f32 0.0, %v1003
      %v1005 = vpop.f32.mrb[0].mxu0
      %v1006 = vpop.f32.mrb[0].mxu0
      %v1007 = vadd.f32 0.0, %v1006
      %v1008 = vpop.f32.mrb[0].mxu0
      %1009 = vdwg.mxu0
      %1010 = vmatprep.subr.bf16.mxu0 0
      %1011 = vmatpush1.bf16.msra.mxu0 %v817
      %1012 = vmatprep.subr.bf16.mxu0 0
      %1013 = vmatpush1.bf16.msra.mxu0 %v818
      %1014 = vmatprep.subr.bf16.mxu0 0
      %1015 = vmatpush1.bf16.msra.mxu0 %v819
      %1016 = vmatprep.subr.bf16.mxu0 0
      %1017 = vmatpush1.bf16.msra.mxu0 %v820
      %1018 = vmatprep.subr.bf16.mxu0 0
      %1019 = vmatpush1.bf16.msra.mxu0 %v821
      %1020 = vmatprep.subr.bf16.mxu0 0
      %1021 = vmatpush1.bf16.msra.mxu0 %v822
      %1022 = vmatprep.subr.bf16.mxu0 0
      %1023 = vmatpush1.bf16.msra.mxu0 %v823
      %1024 = vmatprep.subr.bf16.mxu0 0
      %1025 = vmatpush1.bf16.msra.mxu0 %v824
      %1026 = vmatprep.subr.bf16.mxu0 0
      %1027 = vmatpush1.bf16.msra.mxu0 0
      %1028 = vmatprep.subr.bf16.mxu0 0
      %1029 = vmatpush1.bf16.msra.mxu0 0
      %1030 = vmatprep.subr.bf16.mxu0 0
      %1031 = vmatpush1.bf16.msra.mxu0 0
      %1032 = vmatprep.subr.bf16.mxu0 0
      %1033 = vmatpush1.bf16.msra.mxu0 0
      %1034 = vmatprep.subr.bf16.mxu0 0
      %1035 = vmatpush1.bf16.msra.mxu0 0
      %1036 = vmatprep.subr.bf16.mxu0 0
      %1037 = vmatpush1.bf16.msra.mxu0 0
      %1038 = vmatprep.subr.bf16.mxu0 0
      %1039 = vmatpush1.bf16.msra.mxu0 0
      %1040 = vmatprep.subr.bf16.mxu0 0
      %1041 = vmatpush1.bf16.msra.mxu0 0
      %1042 = vmatprep.mubr.bf16.mxu0 0
      %1043 = vmatmul.mubr.bf16.gmra.mrb[0].mxu0 %v611
      %v1044 = vpop.f32.mrb[0].mxu0
      %v1045 = vadd.f32 %v884, %v1044
      %v1046 = vpop.f32.mrb[0].mxu0
      %v1047 = vpop.f32.mrb[0].mxu0
      %v1048 = vadd.f32 %v887, %v1047
      %v1049 = vpop.f32.mrb[0].mxu0
      %1050 = vmatprep.mubr.bf16.mxu0 0
      %1051 = vmatmul.mubr.bf16.gmra.mrb[0].mxu0 %v614
      %v1052 = vpop.f32.mrb[0].mxu0
      %v1053 = vadd.f32 %v892, %v1052
      %v1054 = vpop.f32.mrb[0].mxu0
      %v1055 = vpop.f32.mrb[0].mxu0
      %v1056 = vadd.f32 %v895, %v1055
      %v1057 = vpop.f32.mrb[0].mxu0
      %1058 = vmatprep.mubr.bf16.mxu0 0
      %1059 = vmatmul.mubr.bf16.gmra.mrb[0].mxu0 %v617
      %v1060 = vpop.f32.mrb[0].mxu0
      %v1061 = vadd.f32 %v900, %v1060
      %v1062 = vpop.f32.mrb[0].mxu0
      %v1063 = vpop.f32.mrb[0].mxu0
      %v1064 = vadd.f32 %v903, %v1063
      %v1065 = vpop.f32.mrb[0].mxu0
      %1066 = vmatprep.mubr.bf16.mxu0 0
      %1067 = vmatmul.mubr.bf16.gmra.mrb[0].mxu0 %v620
      %v1068 = vpop.f32.mrb[0].mxu0
      %v1069 = vadd.f32 %v908, %v1068
      %v1070 = vpop.f32.mrb[0].mxu0
      %v1071 = vpop.f32.mrb[0].mxu0
      %v1072 = vadd.f32 %v911, %v1071
      %v1073 = vpop.f32.mrb[0].mxu0
      %1074 = vmatprep.mubr.bf16.mxu0 0
      %1075 = vmatmul.mubr.bf16.gmra.mrb[0].mxu0 %v623
      %v1076 = vpop.f32.mrb[0].mxu0
      %v1077 = vadd.f32 %v916, %v1076
      %v1078 = vpop.f32.mrb[0].mxu0
      %v1079 = vpop.f32.mrb[0].mxu0
      %v1080 = vadd.f32 %v919, %v1079
      %v1081 = vpop.f32.mrb[0].mxu0
      %1082 = vmatprep.mubr.bf16.mxu0 0
      %1083 = vmatmul.mubr.bf16.gmra.mrb[0].mxu0 %v626
      %v1084 = vpop.f32.mrb[0].mxu0
      %v1085 = vadd.f32 %v924, %v1084
      %v1086 = vpop.f32.mrb[0].mxu0
      %v1087 = vpop.f32.mrb[0].mxu0
      %v1088 = vadd.f32 %v927, %v1087
      %v1089 = vpop.f32.mrb[0].mxu0
      %1090 = vmatprep.mubr.bf16.mxu0 0
      %1091 = vmatmul.mubr.bf16.gmra.mrb[0].mxu0 %v629
      %v1092 = vpop.f32.mrb[0].mxu0
      %v1093 = vadd.f32 %v932, %v1092
      %v1094 = vpop.f32.mrb[0].mxu0
      %v1095 = vpop.f32.mrb[0].mxu0
      %v1096 = vadd.f32 %v935, %v1095
      %v1097 = vpop.f32.mrb[0].mxu0
      %1098 = vmatprep.mubr.bf16.mxu0 0
      %1099 = vmatmul.mubr.bf16.gmra.mrb[0].mxu0 %v632
      %v1100 = vpop.f32.mrb[0].mxu0
      %v1101 = vadd.f32 %v940, %v1100
      %v1102 = vpop.f32.mrb[0].mxu0
      %v1103 = vpop.f32.mrb[0].mxu0
      %v1104 = vadd.f32 %v943, %v1103
      %v1105 = vpop.f32.mrb[0].mxu0
      %1106 = vmatprep.mubr.bf16.mxu0 0
      %1107 = vmatmul.mubr.bf16.gmra.mrb[0].mxu0 %v635
      %v1108 = vpop.f32.mrb[0].mxu0
      %v1109 = vadd.f32 %v948, %v1108
      %v1110 = vpop.f32.mrb[0].mxu0
      %v1111 = vpop.f32.mrb[0].mxu0
      %v1112 = vadd.f32 %v951, %v1111
      %v1113 = vpop.f32.mrb[0].mxu0
      %1114 = vmatprep.mubr.bf16.mxu0 0
      %1115 = vmatmul.mubr.bf16.gmra.mrb[0].mxu0 %v638
      %v1116 = vpop.f32.mrb[0].mxu0
      %v1117 = vadd.f32 %v956, %v1116
      %v1118 = vpop.f32.mrb[0].mxu0
      %v1119 = vpop.f32.mrb[0].mxu0
      %v1120 = vadd.f32 %v959, %v1119
      %v1121 = vpop.f32.mrb[0].mxu0
      %1122 = vmatprep.mubr.bf16.mxu0 0
      %1123 = vmatmul.mubr.bf16.gmra.mrb[0].mxu0 %v641
      %v1124 = vpop.f32.mrb[0].mxu0
      %v1125 = vadd.f32 %v964, %v1124
      %v1126 = vpop.f32.mrb[0].mxu0
      %v1127 = vpop.f32.mrb[0].mxu0
      %v1128 = vadd.f32 %v967, %v1127
      %v1129 = vpop.f32.mrb[0].mxu0
      %1130 = vmatprep.mubr.bf16.mxu0 0
      %1131 = vmatmul.mubr.bf16.gmra.mrb[0].mxu0 %v644
      %v1132 = vpop.f32.mrb[0].mxu0
      %v1133 = vadd.f32 %v972, %v1132
      %v1134 = vpop.f32.mrb[0].mxu0
      %v1135 = vpop.f32.mrb[0].mxu0
      %v1136 = vadd.f32 %v975, %v1135
      %v1137 = vpop.f32.mrb[0].mxu0
      %1138 = vmatprep.mubr.bf16.mxu0 0
      %1139 = vmatmul.mubr.bf16.gmra.mrb[0].mxu0 %v647
      %v1140 = vpop.f32.mrb[0].mxu0
      %v1141 = vadd.f32 %v980, %v1140
      %v1142 = vpop.f32.mrb[0].mxu0
      %v1143 = vpop.f32.mrb[0].mxu0
      %v1144 = vadd.f32 %v983, %v1143
      %v1145 = vpop.f32.mrb[0].mxu0
      %1146 = vmatprep.mubr.bf16.mxu0 0
      %1147 = vmatmul.mubr.bf16.gmra.mrb[0].mxu0 %v650
      %v1148 = vpop.f32.mrb[0].mxu0
      %v1149 = vadd.f32 %v988, %v1148
      %v1150 = vpop.f32.mrb[0].mxu0
      %v1151 = vpop.f32.mrb[0].mxu0
      %v1152 = vadd.f32 %v991, %v1151
      %v1153 = vpop.f32.mrb[0].mxu0
      %1154 = vmatprep.mubr.bf16.mxu0 0
      %1155 = vmatmul.mubr.bf16.gmra.mrb[0].mxu0 %v653
      %v1156 = vpop.f32.mrb[0].mxu0
      %v1157 = vadd.f32 %v996, %v1156
      %v1158 = vpop.f32.mrb[0].mxu0
      %v1159 = vpop.f32.mrb[0].mxu0
      %v1160 = vadd.f32 %v999, %v1159
      %v1161 = vpop.f32.mrb[0].mxu0
      %1162 = vmatprep.mubr.bf16.mxu0 0
      %1163 = vmatmul.mubr.bf16.gmra.mrb[0].mxu0 %v656
      %v1164 = vpop.f32.mrb[0].mxu0
      %v1165 = vadd.f32 %v1004, %v1164
      %v1166 = vpop.f32.mrb[0].mxu0
      %v1167 = vpop.f32.mrb[0].mxu0
      %v1168 = vadd.f32 %v1007, %v1167
      %v1169 = vpop.f32.mrb[0].mxu0
      %1170 = vdwg.mxu0
      %v1235 = vunpack.c.l.b16 %v223
      %v1236 = vunpack.c.h.b16 %v223
      %v1237 = vunpack.c.l.b16 %v224
      %v1238 = vunpack.c.l.b16 %v225
      %v1239 = vunpack.c.h.b16 %v225
      %v1240 = vunpack.c.l.b16 %v226
      %v1241 = vunpack.c.l.b16 %v227
      %v1242 = vunpack.c.h.b16 %v227
      %v1243 = vunpack.c.l.b16 %v228
      %v1244 = vunpack.c.l.b16 %v229
      %v1245 = vunpack.c.h.b16 %v229
      %v1246 = vunpack.c.l.b16 %v230
      %v1247 = vunpack.c.l.b16 %v231
      %v1248 = vunpack.c.h.b16 %v231
      %v1249 = vunpack.c.l.b16 %v232
      %v1250 = vunpack.c.l.b16 %v233
      %v1251 = vunpack.c.h.b16 %v233
      %v1252 = vunpack.c.l.b16 %v234
      %v1253 = vunpack.c.l.b16 %v235
      %v1254 = vunpack.c.h.b16 %v235
      %v1255 = vunpack.c.l.b16 %v236
      %v1256 = vunpack.c.l.b16 %v237
      %v1257 = vunpack.c.h.b16 %v237
      %v1258 = vunpack.c.l.b16 %v238
      %v1259 = vunpack.c.l.b16 %v239
      %v1260 = vunpack.c.h.b16 %v239
      %v1261 = vunpack.c.l.b16 %v240
      %v1262 = vunpack.c.l.b16 %v241
      %v1263 = vunpack.c.h.b16 %v241
      %v1264 = vunpack.c.l.b16 %v242
      %v1265 = vunpack.c.l.b16 %v243
      %v1266 = vunpack.c.h.b16 %v243
      %v1267 = vunpack.c.l.b16 %v244
      %v1268 = vunpack.c.l.b16 %v245
      %v1269 = vunpack.c.h.b16 %v245
      %v1270 = vunpack.c.l.b16 %v246
      %v1271 = vunpack.c.l.b16 %v247
      %v1272 = vunpack.c.h.b16 %v247
      %v1273 = vunpack.c.l.b16 %v248
      %v1274 = vunpack.c.l.b16 %v249
      %v1275 = vunpack.c.h.b16 %v249
      %v1276 = vunpack.c.l.b16 %v250
      %v1277 = vunpack.c.l.b16 %v251
      %v1278 = vunpack.c.h.b16 %v251
      %v1279 = vunpack.c.l.b16 %v252
      %v1280 = vunpack.c.l.b16 %v253
      %v1281 = vunpack.c.h.b16 %v253
      %v1282 = vunpack.c.l.b16 %v254
      %v1283 = vunpack.c.l.b16 %v255
      %v1284 = vunpack.c.h.b16 %v255
      %v1285 = vunpack.c.l.b16 %v256
      %v1286 = vunpack.c.l.b16 %v257
      %v1287 = vunpack.c.h.b16 %v257
      %v1288 = vunpack.c.l.b16 %v258
      %v1289 = vunpack.c.l.b16 %v259
      %v1290 = vunpack.c.h.b16 %v259
      %v1291 = vunpack.c.l.b16 %v260
      %v1292 = vunpack.c.l.b16 %v261
      %v1293 = vunpack.c.h.b16 %v261
      %v1294 = vunpack.c.l.b16 %v262
      %v1295 = vunpack.c.l.b16 %v263
      %v1296 = vunpack.c.h.b16 %v263
      %v1297 = vunpack.c.l.b16 %v264
      %v1298 = vunpack.c.l.b16 %v265
      %v1299 = vunpack.c.h.b16 %v265
      %v1300 = vunpack.c.l.b16 %v266
      %v1301 = vunpack.c.l.b16 %v267
      %v1302 = vunpack.c.h.b16 %v267
      %v1303 = vunpack.c.l.b16 %v268
      %v1304 = vunpack.c.l.b16 %v269
      %v1305 = vunpack.c.h.b16 %v269
      %v1306 = vunpack.c.l.b16 %v270
      %v1307 = vunpack.c.l.b16 %v271
      %v1308 = vunpack.c.h.b16 %v271
      %v1309 = vunpack.c.l.b16 %v272
      %v1310 = vunpack.c.l.b16 %v273
      %v1311 = vunpack.c.h.b16 %v273
      %v1312 = vunpack.c.l.b16 %v274
      %v1313 = vunpack.c.l.b16 %v275
      %v1314 = vunpack.c.h.b16 %v275
      %v1315 = vunpack.c.l.b16 %v276
      %v1316 = vunpack.c.l.b16 %v277
      %v1317 = vunpack.c.h.b16 %v277
      %v1318 = vunpack.c.l.b16 %v278
      %v1319 = vunpack.c.l.b16 %v279
      %v1320 = vunpack.c.h.b16 %v279
      %v1321 = vunpack.c.l.b16 %v280
      %v1322 = vunpack.c.l.b16 %v281
      %v1323 = vunpack.c.h.b16 %v281
      %v1324 = vunpack.c.l.b16 %v282
      %v1325 = vunpack.c.l.b16 %v283
      %v1326 = vunpack.c.h.b16 %v283
      %v1327 = vunpack.c.l.b16 %v284
      %v1328 = vunpack.c.l.b16 %v285
      %v1329 = vunpack.c.h.b16 %v285
      %v1330 = vunpack.c.l.b16 %v286
      %v1331 = vpack.c.b16 %v1238, %v1235
      %v1332 = vpack.c.b16 %v1239, %v1236
      %v1333 = vpack.c.b16 %v1240, %v1237
      %v1334 = vpack.c.b16 %v1244, %v1241
      %v1335 = vpack.c.b16 %v1245, %v1242
      %v1336 = vpack.c.b16 %v1246, %v1243
      %v1337 = vpack.c.b16 %v1250, %v1247
      %v1338 = vpack.c.b16 %v1251, %v1248
      %v1339 = vpack.c.b16 %v1252, %v1249
      %v1340 = vpack.c.b16 %v1256, %v1253
      %v1341 = vpack.c.b16 %v1257, %v1254
      %v1342 = vpack.c.b16 %v1258, %v1255
      %v1343 = vpack.c.b16 %v1262, %v1259
      %v1344 = vpack.c.b16 %v1263, %v1260
      %v1345 = vpack.c.b16 %v1264, %v1261
      %v1346 = vpack.c.b16 %v1268, %v1265
      %v1347 = vpack.c.b16 %v1269, %v1266
      %v1348 = vpack.c.b16 %v1270, %v1267
      %v1349 = vpack.c.b16 %v1274, %v1271
      %v1350 = vpack.c.b16 %v1275, %v1272
      %v1351 = vpack.c.b16 %v1276, %v1273
      %v1352 = vpack.c.b16 %v1280, %v1277
      %v1353 = vpack.c.b16 %v1281, %v1278
      %v1354 = vpack.c.b16 %v1282, %v1279
      %v1355 = vpack.c.b16 %v1286, %v1283
      %v1356 = vpack.c.b16 %v1287, %v1284
      %v1357 = vpack.c.b16 %v1288, %v1285
      %v1358 = vpack.c.b16 %v1292, %v1289
      %v1359 = vpack.c.b16 %v1293, %v1290
      %v1360 = vpack.c.b16 %v1294, %v1291
      %v1361 = vpack.c.b16 %v1298, %v1295
      %v1362 = vpack.c.b16 %v1299, %v1296
      %v1363 = vpack.c.b16 %v1300, %v1297
      %v1364 = vpack.c.b16 %v1304, %v1301
      %v1365 = vpack.c.b16 %v1305, %v1302
      %v1366 = vpack.c.b16 %v1306, %v1303
      %v1367 = vpack.c.b16 %v1310, %v1307
      %v1368 = vpack.c.b16 %v1311, %v1308
      %v1369 = vpack.c.b16 %v1312, %v1309
      %v1370 = vpack.c.b16 %v1316, %v1313
      %v1371 = vpack.c.b16 %v1317, %v1314
      %v1372 = vpack.c.b16 %v1318, %v1315
      %v1373 = vpack.c.b16 %v1322, %v1319
      %v1374 = vpack.c.b16 %v1323, %v1320
      %v1375 = vpack.c.b16 %v1324, %v1321
      %v1376 = vpack.c.b16 %v1328, %v1325
      %v1377 = vpack.c.b16 %v1329, %v1326
      %v1378 = vpack.c.b16 %v1330, %v1327
      %v1475 = vunpack.c.l.b16 %v287
      %v1476 = vunpack.c.l.b16 %v288
      %v1477 = vunpack.c.l.b16 %v289
      %v1478 = vunpack.c.l.b16 %v290
      %v1479 = vunpack.c.l.b16 %v291
      %v1480 = vunpack.c.l.b16 %v292
      %v1481 = vunpack.c.l.b16 %v293
      %v1482 = vunpack.c.l.b16 %v294
      %v1483 = vunpack.c.l.b16 %v295
      %v1484 = vunpack.c.l.b16 %v296
      %v1485 = vunpack.c.l.b16 %v297
      %v1486 = vunpack.c.l.b16 %v298
      %v1487 = vunpack.c.l.b16 %v299
      %v1488 = vunpack.c.l.b16 %v300
      %v1489 = vunpack.c.l.b16 %v301
      %v1490 = vunpack.c.l.b16 %v302
      %v1491 = vunpack.c.l.b16 %v303
      %v1492 = vunpack.c.l.b16 %v304
      %v1493 = vunpack.c.l.b16 %v305
      %v1494 = vunpack.c.l.b16 %v306
      %v1495 = vunpack.c.l.b16 %v307
      %v1496 = vunpack.c.l.b16 %v308
      %v1497 = vunpack.c.l.b16 %v309
      %v1498 = vunpack.c.l.b16 %v310
      %v1499 = vunpack.c.l.b16 %v311
      %v1500 = vunpack.c.l.b16 %v312
      %v1501 = vunpack.c.l.b16 %v313
      %v1502 = vunpack.c.l.b16 %v314
      %v1503 = vunpack.c.l.b16 %v315
      %v1504 = vunpack.c.l.b16 %v316
      %v1505 = vunpack.c.l.b16 %v317
      %v1506 = vunpack.c.l.b16 %v318
      %v1507 = vunpack.c.l.b16 %v319
      %v1508 = vunpack.c.l.b16 %v320
      %v1509 = vunpack.c.l.b16 %v321
      %v1510 = vunpack.c.l.b16 %v322
      %v1511 = vunpack.c.l.b16 %v323
      %v1512 = vunpack.c.l.b16 %v324
      %v1513 = vunpack.c.l.b16 %v325
      %v1514 = vunpack.c.l.b16 %v326
      %v1515 = vunpack.c.l.b16 %v327
      %v1516 = vunpack.c.l.b16 %v328
      %v1517 = vunpack.c.l.b16 %v329
      %v1518 = vunpack.c.l.b16 %v330
      %v1519 = vunpack.c.l.b16 %v331
      %v1520 = vunpack.c.l.b16 %v332
      %v1521 = vunpack.c.l.b16 %v333
      %v1522 = vunpack.c.l.b16 %v334
      %v1523 = vpack.c.b16 %v1476, %v1475
      %v1524 = vpack.c.b16 %v1478, %v1477
      %v1525 = vpack.c.b16 %v1480, %v1479
      %v1526 = vpack.c.b16 %v1482, %v1481
      %v1527 = vpack.c.b16 %v1484, %v1483
      %v1528 = vpack.c.b16 %v1486, %v1485
      %v1529 = vpack.c.b16 %v1488, %v1487
      %v1530 = vpack.c.b16 %v1490, %v1489
      %v1531 = vpack.c.b16 %v1492, %v1491
      %v1532 = vpack.c.b16 %v1494, %v1493
      %v1533 = vpack.c.b16 %v1496, %v1495
      %v1534 = vpack.c.b16 %v1498, %v1497
      %v1535 = vpack.c.b16 %v1500, %v1499
      %v1536 = vpack.c.b16 %v1502, %v1501
      %v1537 = vpack.c.b16 %v1504, %v1503
      %v1538 = vpack.c.b16 %v1506, %v1505
      %v1539 = vpack.c.b16 %v1508, %v1507
      %v1540 = vpack.c.b16 %v1510, %v1509
      %v1541 = vpack.c.b16 %v1512, %v1511
      %v1542 = vpack.c.b16 %v1514, %v1513
      %v1543 = vpack.c.b16 %v1516, %v1515
      %v1544 = vpack.c.b16 %v1518, %v1517
      %v1545 = vpack.c.b16 %v1520, %v1519
      %v1546 = vpack.c.b16 %v1522, %v1521
      %1571 = vmatprep.subr.bf16.mxu0 0
      %1572 = vmatpush1.bf16.msra.mxu0 %v1523
      %1573 = vmatprep.subr.bf16.mxu0 0
      %1574 = vmatpush1.bf16.msra.mxu0 %v1524
      %1575 = vmatprep.subr.bf16.mxu0 0
      %1576 = vmatpush1.bf16.msra.mxu0 %v1525
      %1577 = vmatprep.subr.bf16.mxu0 0
      %1578 = vmatpush1.bf16.msra.mxu0 %v1526
      %1579 = vmatprep.subr.bf16.mxu0 0
      %1580 = vmatpush1.bf16.msra.mxu0 %v1527
      %1581 = vmatprep.subr.bf16.mxu0 0
      %1582 = vmatpush1.bf16.msra.mxu0 %v1528
      %1583 = vmatprep.subr.bf16.mxu0 0
      %1584 = vmatpush1.bf16.msra.mxu0 %v1529
      %1585 = vmatprep.subr.bf16.mxu0 0
      %1586 = vmatpush1.bf16.msra.mxu0 %v1530
      %1587 = vmatprep.subr.bf16.mxu0 0
      %1588 = vmatpush1.bf16.msra.mxu0 %v1531
      %1589 = vmatprep.subr.bf16.mxu0 0
      %1590 = vmatpush1.bf16.msra.mxu0 %v1532
      %1591 = vmatprep.subr.bf16.mxu0 0
      %1592 = vmatpush1.bf16.msra.mxu0 %v1533
      %1593 = vmatprep.subr.bf16.mxu0 0
      %1594 = vmatpush1.bf16.msra.mxu0 %v1534
      %1595 = vmatprep.subr.bf16.mxu0 0
      %1596 = vmatpush1.bf16.msra.mxu0 %v1535
      %1597 = vmatprep.subr.bf16.mxu0 0
      %1598 = vmatpush1.bf16.msra.mxu0 %v1536
      %1599 = vmatprep.subr.bf16.mxu0 0
      %1600 = vmatpush1.bf16.msra.mxu0 %v1537
      %1601 = vmatprep.subr.bf16.mxu0 0
      %1602 = vmatpush1.bf16.msra.mxu0 %v1538
      %1603 = vmatprep.mubr.bf16.mxu0 %v1332
      %1604 = vmatmul.mubr.bf16.gmra.mrb[0].mxu0 %v1331
      %v1605 = vpop.f32.mrb[0].mxu0
      %v1606 = vadd.f32 %v1045, %v1605
      %v1607 = vpop.f32.mrb[0].mxu0
      %v1608 = vpop.f32.mrb[0].mxu0
      %v1609 = vadd.f32 %v1048, %v1608
      %v1610 = vpop.f32.mrb[0].mxu0
      %1611 = vmatprep.mubr.bf16.mxu0 %v1335
      %1612 = vmatmul.mubr.bf16.gmra.mrb[0].mxu0 %v1334
      %v1613 = vpop.f32.mrb[0].mxu0
      %v1614 = vadd.f32 %v1053, %v1613
      %v1615 = vpop.f32.mrb[0].mxu0
      %v1616 = vpop.f32.mrb[0].mxu0
      %v1617 = vadd.f32 %v1056, %v1616
      %v1618 = vpop.f32.mrb[0].mxu0
      %1619 = vmatprep.mubr.bf16.mxu0 %v1338
      %1620 = vmatmul.mubr.bf16.gmra.mrb[0].mxu0 %v1337
      %v1621 = vpop.f32.mrb[0].mxu0
      %v1622 = vadd.f32 %v1061, %v1621
      %v1623 = vpop.f32.mrb[0].mxu0
      %v1624 = vpop.f32.mrb[0].mxu0
      %v1625 = vadd.f32 %v1064, %v1624
      %v1626 = vpop.f32.mrb[0].mxu0
      %1627 = vmatprep.mubr.bf16.mxu0 %v1341
      %1628 = vmatmul.mubr.bf16.gmra.mrb[0].mxu0 %v1340
      %v1629 = vpop.f32.mrb[0].mxu0
      %v1630 = vadd.f32 %v1069, %v1629
      %v1631 = vpop.f32.mrb[0].mxu0
      %v1632 = vpop.f32.mrb[0].mxu0
      %v1633 = vadd.f32 %v1072, %v1632
      %v1634 = vpop.f32.mrb[0].mxu0
      %1635 = vmatprep.mubr.bf16.mxu0 %v1344
      %1636 = vmatmul.mubr.bf16.gmra.mrb[0].mxu0 %v1343
      %v1637 = vpop.f32.mrb[0].mxu0
      %v1638 = vadd.f32 %v1077, %v1637
      %v1639 = vpop.f32.mrb[0].mxu0
      %v1640 = vpop.f32.mrb[0].mxu0
      %v1641 = vadd.f32 %v1080, %v1640
      %v1642 = vpop.f32.mrb[0].mxu0
      %1643 = vmatprep.mubr.bf16.mxu0 %v1347
      %1644 = vmatmul.mubr.bf16.gmra.mrb[0].mxu0 %v1346
      %v1645 = vpop.f32.mrb[0].mxu0
      %v1646 = vadd.f32 %v1085, %v1645
      %v1647 = vpop.f32.mrb[0].mxu0
      %v1648 = vpop.f32.mrb[0].mxu0
      %v1649 = vadd.f32 %v1088, %v1648
      %v1650 = vpop.f32.mrb[0].mxu0
      %1651 = vmatprep.mubr.bf16.mxu0 %v1350
      %1652 = vmatmul.mubr.bf16.gmra.mrb[0].mxu0 %v1349
      %v1653 = vpop.f32.mrb[0].mxu0
      %v1654 = vadd.f32 %v1093, %v1653
      %v1655 = vpop.f32.mrb[0].mxu0
      %v1656 = vpop.f32.mrb[0].mxu0
      %v1657 = vadd.f32 %v1096, %v1656
      %v1658 = vpop.f32.mrb[0].mxu0
      %1659 = vmatprep.mubr.bf16.mxu0 %v1353
      %1660 = vmatmul.mubr.bf16.gmra.mrb[0].mxu0 %v1352
      %v1661 = vpop.f32.mrb[0].mxu0
      %v1662 = vadd.f32 %v1101, %v1661
      %v1663 = vpop.f32.mrb[0].mxu0
      %v1664 = vpop.f32.mrb[0].mxu0
      %v1665 = vadd.f32 %v1104, %v1664
      %v1666 = vpop.f32.mrb[0].mxu0
      %1667 = vmatprep.mubr.bf16.mxu0 %v1356
      %1668 = vmatmul.mubr.bf16.gmra.mrb[0].mxu0 %v1355
      %v1669 = vpop.f32.mrb[0].mxu0
      %v1670 = vadd.f32 %v1109, %v1669
      %v1671 = vpop.f32.mrb[0].mxu0
      %v1672 = vpop.f32.mrb[0].mxu0
      %v1673 = vadd.f32 %v1112, %v1672
      %v1674 = vpop.f32.mrb[0].mxu0
      %1675 = vmatprep.mubr.bf16.mxu0 %v1359
      %1676 = vmatmul.mubr.bf16.gmra.mrb[0].mxu0 %v1358
      %v1677 = vpop.f32.mrb[0].mxu0
      %v1678 = vadd.f32 %v1117, %v1677
      %v1679 = vpop.f32.mrb[0].mxu0
      %v1680 = vpop.f32.mrb[0].mxu0
      %v1681 = vadd.f32 %v1120, %v1680
      %v1682 = vpop.f32.mrb[0].mxu0
      %1683 = vmatprep.mubr.bf16.mxu0 %v1362
      %1684 = vmatmul.mubr.bf16.gmra.mrb[0].mxu0 %v1361
      %v1685 = vpop.f32.mrb[0].mxu0
      %v1686 = vadd.f32 %v1125, %v1685
      %v1687 = vpop.f32.mrb[0].mxu0
      %v1688 = vpop.f32.mrb[0].mxu0
      %v1689 = vadd.f32 %v1128, %v1688
      %v1690 = vpop.f32.mrb[0].mxu0
      %1691 = vmatprep.mubr.bf16.mxu0 %v1365
      %1692 = vmatmul.mubr.bf16.gmra.mrb[0].mxu0 %v1364
      %v1693 = vpop.f32.mrb[0].mxu0
      %v1694 = vadd.f32 %v1133, %v1693
      %v1695 = vpop.f32.mrb[0].mxu0
      %v1696 = vpop.f32.mrb[0].mxu0
      %v1697 = vadd.f32 %v1136, %v1696
      %v1698 = vpop.f32.mrb[0].mxu0
      %1699 = vmatprep.mubr.bf16.mxu0 %v1368
      %1700 = vmatmul.mubr.bf16.gmra.mrb[0].mxu0 %v1367
      %v1701 = vpop.f32.mrb[0].mxu0
      %v1702 = vadd.f32 %v1141, %v1701
      %v1703 = vpop.f32.mrb[0].mxu0
      %v1704 = vpop.f32.mrb[0].mxu0
      %v1705 = vadd.f32 %v1144, %v1704
      %v1706 = vpop.f32.mrb[0].mxu0
      %1707 = vmatprep.mubr.bf16.mxu0 %v1371
      %1708 = vmatmul.mubr.bf16.gmra.mrb[0].mxu0 %v1370
      %v1709 = vpop.f32.mrb[0].mxu0
      %v1710 = vadd.f32 %v1149, %v1709
      %v1711 = vpop.f32.mrb[0].mxu0
      %v1712 = vpop.f32.mrb[0].mxu0
      %v1713 = vadd.f32 %v1152, %v1712
      %v1714 = vpop.f32.mrb[0].mxu0
      %1715 = vmatprep.mubr.bf16.mxu0 %v1374
      %1716 = vmatmul.mubr.bf16.gmra.mrb[0].mxu0 %v1373
      %v1717 = vpop.f32.mrb[0].mxu0
      %v1718 = vadd.f32 %v1157, %v1717
      %v1719 = vpop.f32.mrb[0].mxu0
      %v1720 = vpop.f32.mrb[0].mxu0
      %v1721 = vadd.f32 %v1160, %v1720
      %v1722 = vpop.f32.mrb[0].mxu0
      %1723 = vmatprep.mubr.bf16.mxu0 %v1377
      %1724 = vmatmul.mubr.bf16.gmra.mrb[0].mxu0 %v1376
      %v1725 = vpop.f32.mrb[0].mxu0
      %v1726 = vadd.f32 %v1165, %v1725
      %v1727 = vpop.f32.mrb[0].mxu0
      %v1728 = vpop.f32.mrb[0].mxu0
      %v1729 = vadd.f32 %v1168, %v1728
      %v1730 = vpop.f32.mrb[0].mxu0
      %1731 = vdwg.mxu0
      %1732 = vmatprep.subr.bf16.mxu0 0
      %1733 = vmatpush1.bf16.msra.mxu0 %v1539
      %1734 = vmatprep.subr.bf16.mxu0 0
      %1735 = vmatpush1.bf16.msra.mxu0 %v1540
      %1736 = vmatprep.subr.bf16.mxu0 0
      %1737 = vmatpush1.bf16.msra.mxu0 %v1541
      %1738 = vmatprep.subr.bf16.mxu0 0
      %1739 = vmatpush1.bf16.msra.mxu0 %v1542
      %1740 = vmatprep.subr.bf16.mxu0 0
      %1741 = vmatpush1.bf16.msra.mxu0 %v1543
      %1742 = vmatprep.subr.bf16.mxu0 0
      %1743 = vmatpush1.bf16.msra.mxu0 %v1544
      %1744 = vmatprep.subr.bf16.mxu0 0
      %1745 = vmatpush1.bf16.msra.mxu0 %v1545
      %1746 = vmatprep.subr.bf16.mxu0 0
      %1747 = vmatpush1.bf16.msra.mxu0 %v1546
      %1748 = vmatprep.subr.bf16.mxu0 0
      %1749 = vmatpush1.bf16.msra.mxu0 0
      %1750 = vmatprep.subr.bf16.mxu0 0
      %1751 = vmatpush1.bf16.msra.mxu0 0
      %1752 = vmatprep.subr.bf16.mxu0 0
      %1753 = vmatpush1.bf16.msra.mxu0 0
      %1754 = vmatprep.subr.bf16.mxu0 0
      %1755 = vmatpush1.bf16.msra.mxu0 0
      %1756 = vmatprep.subr.bf16.mxu0 0
      %1757 = vmatpush1.bf16.msra.mxu0 0
      %1758 = vmatprep.subr.bf16.mxu0 0
      %1759 = vmatpush1.bf16.msra.mxu0 0
      %1760 = vmatprep.subr.bf16.mxu0 0
      %1761 = vmatpush1.bf16.msra.mxu0 0
      %1762 = vmatprep.subr.bf16.mxu0 0
      %1763 = vmatpush1.bf16.msra.mxu0 0
      %1764 = vmatprep.mubr.bf16.mxu0 0
      %1765 = vmatmul.mubr.bf16.gmra.mrb[0].mxu0 %v1333
      %v1766 = vpop.f32.mrb[0].mxu0
      %v1767 = vadd.f32 %v1606, %v1766
      %v1768 = vpop.f32.mrb[0].mxu0
      %v1769 = vpop.f32.mrb[0].mxu0
      %v1770 = vadd.f32 %v1609, %v1769
      %v1771 = vpop.f32.mrb[0].mxu0
      %1772 = vmatprep.mubr.bf16.mxu0 0
      %1773 = vmatmul.mubr.bf16.gmra.mrb[0].mxu0 %v1336
      %v1774 = vpop.f32.mrb[0].mxu0
      %v1775 = vadd.f32 %v1614, %v1774
      %v1776 = vpop.f32.mrb[0].mxu0
      %v1777 = vpop.f32.mrb[0].mxu0
      %v1778 = vadd.f32 %v1617, %v1777
      %v1779 = vpop.f32.mrb[0].mxu0
      %1780 = vmatprep.mubr.bf16.mxu0 0
      %1781 = vmatmul.mubr.bf16.gmra.mrb[0].mxu0 %v1339
      %v1782 = vpop.f32.mrb[0].mxu0
      %v1783 = vadd.f32 %v1622, %v1782
      %v1784 = vpop.f32.mrb[0].mxu0
      %v1785 = vpop.f32.mrb[0].mxu0
      %v1786 = vadd.f32 %v1625, %v1785
      %v1787 = vpop.f32.mrb[0].mxu0
      %1788 = vmatprep.mubr.bf16.mxu0 0
      %1789 = vmatmul.mubr.bf16.gmra.mrb[0].mxu0 %v1342
      %v1790 = vpop.f32.mrb[0].mxu0
      %v1791 = vadd.f32 %v1630, %v1790
      %v1792 = vpop.f32.mrb[0].mxu0
      %v1793 = vpop.f32.mrb[0].mxu0
      %v1794 = vadd.f32 %v1633, %v1793
      %v1795 = vpop.f32.mrb[0].mxu0
      %1796 = vmatprep.mubr.bf16.mxu0 0
      %1797 = vmatmul.mubr.bf16.gmra.mrb[0].mxu0 %v1345
      %v1798 = vpop.f32.mrb[0].mxu0
      %v1799 = vadd.f32 %v1638, %v1798
      %v1800 = vpop.f32.mrb[0].mxu0
      %v1801 = vpop.f32.mrb[0].mxu0
      %v1802 = vadd.f32 %v1641, %v1801
      %v1803 = vpop.f32.mrb[0].mxu0
      %1804 = vmatprep.mubr.bf16.mxu0 0
      %1805 = vmatmul.mubr.bf16.gmra.mrb[0].mxu0 %v1348
      %v1806 = vpop.f32.mrb[0].mxu0
      %v1807 = vadd.f32 %v1646, %v1806
      %v1808 = vpop.f32.mrb[0].mxu0
      %v1809 = vpop.f32.mrb[0].mxu0
      %v1810 = vadd.f32 %v1649, %v1809
      %v1811 = vpop.f32.mrb[0].mxu0
      %1812 = vmatprep.mubr.bf16.mxu0 0
      %1813 = vmatmul.mubr.bf16.gmra.mrb[0].mxu0 %v1351
      %v1814 = vpop.f32.mrb[0].mxu0
      %v1815 = vadd.f32 %v1654, %v1814
      %v1816 = vpop.f32.mrb[0].mxu0
      %v1817 = vpop.f32.mrb[0].mxu0
      %v1818 = vadd.f32 %v1657, %v1817
      %v1819 = vpop.f32.mrb[0].mxu0
      %1820 = vmatprep.mubr.bf16.mxu0 0
      %1821 = vmatmul.mubr.bf16.gmra.mrb[0].mxu0 %v1354
      %v1822 = vpop.f32.mrb[0].mxu0
      %v1823 = vadd.f32 %v1662, %v1822
      %v1824 = vpop.f32.mrb[0].mxu0
      %v1825 = vpop.f32.mrb[0].mxu0
      %v1826 = vadd.f32 %v1665, %v1825
      %v1827 = vpop.f32.mrb[0].mxu0
      %1828 = vmatprep.mubr.bf16.mxu0 0
      %1829 = vmatmul.mubr.bf16.gmra.mrb[0].mxu0 %v1357
      %v1830 = vpop.f32.mrb[0].mxu0
      %v1831 = vadd.f32 %v1670, %v1830
      %v1832 = vpop.f32.mrb[0].mxu0
      %v1833 = vpop.f32.mrb[0].mxu0
      %v1834 = vadd.f32 %v1673, %v1833
      %v1835 = vpop.f32.mrb[0].mxu0
      %1836 = vmatprep.mubr.bf16.mxu0 0
      %1837 = vmatmul.mubr.bf16.gmra.mrb[0].mxu0 %v1360
      %v1838 = vpop.f32.mrb[0].mxu0
      %v1839 = vadd.f32 %v1678, %v1838
      %v1840 = vpop.f32.mrb[0].mxu0
      %v1841 = vpop.f32.mrb[0].mxu0
      %v1842 = vadd.f32 %v1681, %v1841
      %v1843 = vpop.f32.mrb[0].mxu0
      %1844 = vmatprep.mubr.bf16.mxu0 0
      %1845 = vmatmul.mubr.bf16.gmra.mrb[0].mxu0 %v1363
      %v1846 = vpop.f32.mrb[0].mxu0
      %v1847 = vadd.f32 %v1686, %v1846
      %v1848 = vpop.f32.mrb[0].mxu0
      %v1849 = vpop.f32.mrb[0].mxu0
      %v1850 = vadd.f32 %v1689, %v1849
      %v1851 = vpop.f32.mrb[0].mxu0
      %1852 = vmatprep.mubr.bf16.mxu0 0
      %1853 = vmatmul.mubr.bf16.gmra.mrb[0].mxu0 %v1366
      %v1854 = vpop.f32.mrb[0].mxu0
      %v1855 = vadd.f32 %v1694, %v1854
      %v1856 = vpop.f32.mrb[0].mxu0
      %v1857 = vpop.f32.mrb[0].mxu0
      %v1858 = vadd.f32 %v1697, %v1857
      %v1859 = vpop.f32.mrb[0].mxu0
      %1860 = vmatprep.mubr.bf16.mxu0 0
      %1861 = vmatmul.mubr.bf16.gmra.mrb[0].mxu0 %v1369
      %v1862 = vpop.f32.mrb[0].mxu0
      %v1863 = vadd.f32 %v1702, %v1862
      %v1864 = vpop.f32.mrb[0].mxu0
      %v1865 = vpop.f32.mrb[0].mxu0
      %v1866 = vadd.f32 %v1705, %v1865
      %v1867 = vpop.f32.mrb[0].mxu0
      %1868 = vmatprep.mubr.bf16.mxu0 0
      %1869 = vmatmul.mubr.bf16.gmra.mrb[0].mxu0 %v1372
      %v1870 = vpop.f32.mrb[0].mxu0
      %v1871 = vadd.f32 %v1710, %v1870
      %v1872 = vpop.f32.mrb[0].mxu0
      %v1873 = vpop.f32.mrb[0].mxu0
      %v1874 = vadd.f32 %v1713, %v1873
      %v1875 = vpop.f32.mrb[0].mxu0
      %1876 = vmatprep.mubr.bf16.mxu0 0
      %1877 = vmatmul.mubr.bf16.gmra.mrb[0].mxu0 %v1375
      %v1878 = vpop.f32.mrb[0].mxu0
      %v1879 = vadd.f32 %v1718, %v1878
      %v1880 = vpop.f32.mrb[0].mxu0
      %v1881 = vpop.f32.mrb[0].mxu0
      %v1882 = vadd.f32 %v1721, %v1881
      %v1883 = vpop.f32.mrb[0].mxu0
      %1884 = vmatprep.mubr.bf16.mxu0 0
      %1885 = vmatmul.mubr.bf16.gmra.mrb[0].mxu0 %v1378
      %v1886 = vpop.f32.mrb[0].mxu0
      %v1887 = vadd.f32 %v1726, %v1886
      %v1888 = vpop.f32.mrb[0].mxu0
      %v1889 = vpop.f32.mrb[0].mxu0
      %v1890 = vadd.f32 %v1729, %v1889
      %v1891 = vpop.f32.mrb[0].mxu0
      %1892 = vdwg.mxu0
      %s1893 = scalar_lea.vmem %s206, 48
      %v1894 = vld [vmem:[%s1893] sm:$0xff]
      %v1895 = vld [vmem:[%s1893 + $0x8] sm:$0xf]
      %v1896 = vld [vmem:[%s1893 + $0xc] sm:$0xff]
      %v1897 = vld [vmem:[%s1893 + $0x14] sm:$0xf]
      %v1898 = vld [vmem:[%s1893 + $0x18] sm:$0xff]
      %v1899 = vld [vmem:[%s1893 + $0x20] sm:$0xf]
      %v1900 = vld [vmem:[%s1893 + $0x24] sm:$0xff]
      %v1901 = vld [vmem:[%s1893 + $0x2c] sm:$0xf]
      %v1902 = vld [vmem:[%s1893 + $0x30] sm:$0xff]
      %v1903 = vld [vmem:[%s1893 + $0x38] sm:$0xf]
      %v1904 = vld [vmem:[%s1893 + $0x3c] sm:$0xff]
      %v1905 = vld [vmem:[%s1893 + $0x44] sm:$0xf]
      %v1906 = vld [vmem:[%s1893 + $0x48] sm:$0xff]
      %v1907 = vld [vmem:[%s1893 + $0x50] sm:$0xf]
      %v1908 = vld [vmem:[%s1893 + $0x54] sm:$0xff]
      %v1909 = vld [vmem:[%s1893 + $0x5c] sm:$0xf]
      %v1910 = vld [vmem:[%s1893 + $0x60] sm:$0xff]
      %v1911 = vld [vmem:[%s1893 + $0x68] sm:$0xf]
      %v1912 = vld [vmem:[%s1893 + $0x6c] sm:$0xff]
      %v1913 = vld [vmem:[%s1893 + $0x74] sm:$0xf]
      %v1914 = vld [vmem:[%s1893 + $0x78] sm:$0xff]
      %v1915 = vld [vmem:[%s1893 + $0x80] sm:$0xf]
      %v1916 = vld [vmem:[%s1893 + $0x84] sm:$0xff]
      %v1917 = vld [vmem:[%s1893 + $0x8c] sm:$0xf]
      %v1918 = vld [vmem:[%s1893 + $0x90] sm:$0xff]
      %v1919 = vld [vmem:[%s1893 + $0x98] sm:$0xf]
      %v1920 = vld [vmem:[%s1893 + $0x9c] sm:$0xff]
      %v1921 = vld [vmem:[%s1893 + $0xa4] sm:$0xf]
      %v1922 = vld [vmem:[%s1893 + $0xa8] sm:$0xff]
      %v1923 = vld [vmem:[%s1893 + $0xb0] sm:$0xf]
      %v1924 = vld [vmem:[%s1893 + $0xb4] sm:$0xff]
      %v1925 = vld [vmem:[%s1893 + $0xbc] sm:$0xf]
      %v1926 = vld [vmem:[%s1893 + $0xc0] sm:$0xff]
      %v1927 = vld [vmem:[%s1893 + $0xc8] sm:$0xf]
      %v1928 = vld [vmem:[%s1893 + $0xcc] sm:$0xff]
      %v1929 = vld [vmem:[%s1893 + $0xd4] sm:$0xf]
      %v1930 = vld [vmem:[%s1893 + $0xd8] sm:$0xff]
      %v1931 = vld [vmem:[%s1893 + $0xe0] sm:$0xf]
      %v1932 = vld [vmem:[%s1893 + $0xe4] sm:$0xff]
      %v1933 = vld [vmem:[%s1893 + $0xec] sm:$0xf]
      %v1934 = vld [vmem:[%s1893 + $0xf0] sm:$0xff]
      %v1935 = vld [vmem:[%s1893 + $0xf8] sm:$0xf]
      %v1936 = vld [vmem:[%s1893 + $0xfc] sm:$0xff]
      %v1937 = vld [vmem:[%s1893 + $0x104] sm:$0xf]
      %v1938 = vld [vmem:[%s1893 + $0x108] sm:$0xff]
      %v1939 = vld [vmem:[%s1893 + $0x110] sm:$0xf]
      %v1940 = vld [vmem:[%s1893 + $0x114] sm:$0xff]
      %v1941 = vld [vmem:[%s1893 + $0x11c] sm:$0xf]
      %v1942 = vld [vmem:[%s1893 + $0x120] sm:$0xff]
      %v1943 = vld [vmem:[%s1893 + $0x128] sm:$0xf]
      %v1944 = vld [vmem:[%s1893 + $0x12c] sm:$0xff]
      %v1945 = vld [vmem:[%s1893 + $0x134] sm:$0xf]
      %v1946 = vld [vmem:[%s1893 + $0x138] sm:$0xff]
      %v1947 = vld [vmem:[%s1893 + $0x140] sm:$0xf]
      %v1948 = vld [vmem:[%s1893 + $0x144] sm:$0xff]
      %v1949 = vld [vmem:[%s1893 + $0x14c] sm:$0xf]
      %v1950 = vld [vmem:[%s1893 + $0x150] sm:$0xff]
      %v1951 = vld [vmem:[%s1893 + $0x158] sm:$0xf]
      %v1952 = vld [vmem:[%s1893 + $0x15c] sm:$0xff]
      %v1953 = vld [vmem:[%s1893 + $0x164] sm:$0xf]
      %v1954 = vld [vmem:[%s1893 + $0x168] sm:$0xff]
      %v1955 = vld [vmem:[%s1893 + $0x170] sm:$0xf]
      %v1956 = vld [vmem:[%s1893 + $0x174] sm:$0xff]
      %v1957 = vld [vmem:[%s1893 + $0x17c] sm:$0xf]
      %s1958 = scalar_lea.vmem %s210, 384
      %v1959 = vld [vmem:[%s1958] sm:$0xf]
      %v1960 = vld [vmem:[%s1958 + $0x4] sm:$0xf]
      %v1961 = vld [vmem:[%s1958 + $0x8] sm:$0xf]
      %v1962 = vld [vmem:[%s1958 + $0xc] sm:$0xf]
      %v1963 = vld [vmem:[%s1958 + $0x10] sm:$0xf]
      %v1964 = vld [vmem:[%s1958 + $0x14] sm:$0xf]
      %v1965 = vld [vmem:[%s1958 + $0x18] sm:$0xf]
      %v1966 = vld [vmem:[%s1958 + $0x1c] sm:$0xf]
      %v1967 = vld [vmem:[%s1958 + $0x20] sm:$0xf]
      %v1968 = vld [vmem:[%s1958 + $0x24] sm:$0xf]
      %v1969 = vld [vmem:[%s1958 + $0x28] sm:$0xf]
      %v1970 = vld [vmem:[%s1958 + $0x2c] sm:$0xf]
      %v1971 = vld [vmem:[%s1958 + $0x30] sm:$0xf]
      %v1972 = vld [vmem:[%s1958 + $0x34] sm:$0xf]
      %v1973 = vld [vmem:[%s1958 + $0x38] sm:$0xf]
      %v1974 = vld [vmem:[%s1958 + $0x3c] sm:$0xf]
      %v1975 = vld [vmem:[%s1958 + $0x40] sm:$0xf]
      %v1976 = vld [vmem:[%s1958 + $0x44] sm:$0xf]
      %v1977 = vld [vmem:[%s1958 + $0x48] sm:$0xf]
      %v1978 = vld [vmem:[%s1958 + $0x4c] sm:$0xf]
      %v1979 = vld [vmem:[%s1958 + $0x50] sm:$0xf]
      %v1980 = vld [vmem:[%s1958 + $0x54] sm:$0xf]
      %v1981 = vld [vmem:[%s1958 + $0x58] sm:$0xf]
      %v1982 = vld [vmem:[%s1958 + $0x5c] sm:$0xf]
      %v1983 = vld [vmem:[%s1958 + $0x60] sm:$0xf]
      %v1984 = vld [vmem:[%s1958 + $0x64] sm:$0xf]
      %v1985 = vld [vmem:[%s1958 + $0x68] sm:$0xf]
      %v1986 = vld [vmem:[%s1958 + $0x6c] sm:$0xf]
      %v1987 = vld [vmem:[%s1958 + $0x70] sm:$0xf]
      %v1988 = vld [vmem:[%s1958 + $0x74] sm:$0xf]
      %v1989 = vld [vmem:[%s1958 + $0x78] sm:$0xf]
      %v1990 = vld [vmem:[%s1958 + $0x7c] sm:$0xf]
      %v1991 = vld [vmem:[%s1958 + $0x80] sm:$0xf]
      %v1992 = vld [vmem:[%s1958 + $0x84] sm:$0xf]
      %v1993 = vld [vmem:[%s1958 + $0x88] sm:$0xf]
      %v1994 = vld [vmem:[%s1958 + $0x8c] sm:$0xf]
      %v1995 = vld [vmem:[%s1958 + $0x90] sm:$0xf]
      %v1996 = vld [vmem:[%s1958 + $0x94] sm:$0xf]
      %v1997 = vld [vmem:[%s1958 + $0x98] sm:$0xf]
      %v1998 = vld [vmem:[%s1958 + $0x9c] sm:$0xf]
      %v1999 = vld [vmem:[%s1958 + $0xa0] sm:$0xf]
      %v2000 = vld [vmem:[%s1958 + $0xa4] sm:$0xf]
      %v2001 = vld [vmem:[%s1958 + $0xa8] sm:$0xf]
      %v2002 = vld [vmem:[%s1958 + $0xac] sm:$0xf]
      %v2003 = vld [vmem:[%s1958 + $0xb0] sm:$0xf]
      %v2004 = vld [vmem:[%s1958 + $0xb4] sm:$0xf]
      %v2005 = vld [vmem:[%s1958 + $0xb8] sm:$0xf]
      %v2006 = vld [vmem:[%s1958 + $0xbc] sm:$0xf]
      %v2071 = vunpack.c.l.b16 %v1894
      %v2072 = vunpack.c.h.b16 %v1894
      %v2073 = vunpack.c.l.b16 %v1895
      %v2074 = vunpack.c.l.b16 %v1896
      %v2075 = vunpack.c.h.b16 %v1896
      %v2076 = vunpack.c.l.b16 %v1897
      %v2077 = vunpack.c.l.b16 %v1898
      %v2078 = vunpack.c.h.b16 %v1898
      %v2079 = vunpack.c.l.b16 %v1899
      %v2080 = vunpack.c.l.b16 %v1900
      %v2081 = vunpack.c.h.b16 %v1900
      %v2082 = vunpack.c.l.b16 %v1901
      %v2083 = vunpack.c.l.b16 %v1902
      %v2084 = vunpack.c.h.b16 %v1902
      %v2085 = vunpack.c.l.b16 %v1903
      %v2086 = vunpack.c.l.b16 %v1904
      %v2087 = vunpack.c.h.b16 %v1904
      %v2088 = vunpack.c.l.b16 %v1905
      %v2089 = vunpack.c.l.b16 %v1906
      %v2090 = vunpack.c.h.b16 %v1906
      %v2091 = vunpack.c.l.b16 %v1907
      %v2092 = vunpack.c.l.b16 %v1908
      %v2093 = vunpack.c.h.b16 %v1908
      %v2094 = vunpack.c.l.b16 %v1909
      %v2095 = vunpack.c.l.b16 %v1910
      %v2096 = vunpack.c.h.b16 %v1910
      %v2097 = vunpack.c.l.b16 %v1911
      %v2098 = vunpack.c.l.b16 %v1912
      %v2099 = vunpack.c.h.b16 %v1912
      %v2100 = vunpack.c.l.b16 %v1913
      %v2101 = vunpack.c.l.b16 %v1914
      %v2102 = vunpack.c.h.b16 %v1914
      %v2103 = vunpack.c.l.b16 %v1915
      %v2104 = vunpack.c.l.b16 %v1916
      %v2105 = vunpack.c.h.b16 %v1916
      %v2106 = vunpack.c.l.b16 %v1917
      %v2107 = vunpack.c.l.b16 %v1918
      %v2108 = vunpack.c.h.b16 %v1918
      %v2109 = vunpack.c.l.b16 %v1919
      %v2110 = vunpack.c.l.b16 %v1920
      %v2111 = vunpack.c.h.b16 %v1920
      %v2112 = vunpack.c.l.b16 %v1921
      %v2113 = vunpack.c.l.b16 %v1922
      %v2114 = vunpack.c.h.b16 %v1922
      %v2115 = vunpack.c.l.b16 %v1923
      %v2116 = vunpack.c.l.b16 %v1924
      %v2117 = vunpack.c.h.b16 %v1924
      %v2118 = vunpack.c.l.b16 %v1925
      %v2119 = vunpack.c.l.b16 %v1926
      %v2120 = vunpack.c.h.b16 %v1926
      %v2121 = vunpack.c.l.b16 %v1927
      %v2122 = vunpack.c.l.b16 %v1928
      %v2123 = vunpack.c.h.b16 %v1928
      %v2124 = vunpack.c.l.b16 %v1929
      %v2125 = vunpack.c.l.b16 %v1930
      %v2126 = vunpack.c.h.b16 %v1930
      %v2127 = vunpack.c.l.b16 %v1931
      %v2128 = vunpack.c.l.b16 %v1932
      %v2129 = vunpack.c.h.b16 %v1932
      %v2130 = vunpack.c.l.b16 %v1933
      %v2131 = vunpack.c.l.b16 %v1934
      %v2132 = vunpack.c.h.b16 %v1934
      %v2133 = vunpack.c.l.b16 %v1935
      %v2134 = vunpack.c.l.b16 %v1936
      %v2135 = vunpack.c.h.b16 %v1936
      %v2136 = vunpack.c.l.b16 %v1937
      %v2137 = vunpack.c.l.b16 %v1938
      %v2138 = vunpack.c.h.b16 %v1938
      %v2139 = vunpack.c.l.b16 %v1939
      %v2140 = vunpack.c.l.b16 %v1940
      %v2141 = vunpack.c.h.b16 %v1940
      %v2142 = vunpack.c.l.b16 %v1941
      %v2143 = vunpack.c.l.b16 %v1942
      %v2144 = vunpack.c.h.b16 %v1942
      %v2145 = vunpack.c.l.b16 %v1943
      %v2146 = vunpack.c.l.b16 %v1944
      %v2147 = vunpack.c.h.b16 %v1944
      %v2148 = vunpack.c.l.b16 %v1945
      %v2149 = vunpack.c.l.b16 %v1946
      %v2150 = vunpack.c.h.b16 %v1946
      %v2151 = vunpack.c.l.b16 %v1947
      %v2152 = vunpack.c.l.b16 %v1948
      %v2153 = vunpack.c.h.b16 %v1948
      %v2154 = vunpack.c.l.b16 %v1949
      %v2155 = vunpack.c.l.b16 %v1950
      %v2156 = vunpack.c.h.b16 %v1950
      %v2157 = vunpack.c.l.b16 %v1951
      %v2158 = vunpack.c.l.b16 %v1952
      %v2159 = vunpack.c.h.b16 %v1952
      %v2160 = vunpack.c.l.b16 %v1953
      %v2161 = vunpack.c.l.b16 %v1954
      %v2162 = vunpack.c.h.b16 %v1954
      %v2163 = vunpack.c.l.b16 %v1955
      %v2164 = vunpack.c.l.b16 %v1956
      %v2165 = vunpack.c.h.b16 %v1956
      %v2166 = vunpack.c.l.b16 %v1957
      %v2167 = vpack.c.b16 %v2074, %v2071
      %v2168 = vpack.c.b16 %v2075, %v2072
      %v2169 = vpack.c.b16 %v2076, %v2073
      %v2170 = vpack.c.b16 %v2080, %v2077
      %v2171 = vpack.c.b16 %v2081, %v2078
      %v2172 = vpack.c.b16 %v2082, %v2079
      %v2173 = vpack.c.b16 %v2086, %v2083
      %v2174 = vpack.c.b16 %v2087, %v2084
      %v2175 = vpack.c.b16 %v2088, %v2085
      %v2176 = vpack.c.b16 %v2092, %v2089
      %v2177 = vpack.c.b16 %v2093, %v2090
      %v2178 = vpack.c.b16 %v2094, %v2091
      %v2179 = vpack.c.b16 %v2098, %v2095
      %v2180 = vpack.c.b16 %v2099, %v2096
      %v2181 = vpack.c.b16 %v2100, %v2097
      %v2182 = vpack.c.b16 %v2104, %v2101
      %v2183 = vpack.c.b16 %v2105, %v2102
      %v2184 = vpack.c.b16 %v2106, %v2103
      %v2185 = vpack.c.b16 %v2110, %v2107
      %v2186 = vpack.c.b16 %v2111, %v2108
      %v2187 = vpack.c.b16 %v2112, %v2109
      %v2188 = vpack.c.b16 %v2116, %v2113
      %v2189 = vpack.c.b16 %v2117, %v2114
      %v2190 = vpack.c.b16 %v2118, %v2115
      %v2191 = vpack.c.b16 %v2122, %v2119
      %v2192 = vpack.c.b16 %v2123, %v2120
      %v2193 = vpack.c.b16 %v2124, %v2121
      %v2194 = vpack.c.b16 %v2128, %v2125
      %v2195 = vpack.c.b16 %v2129, %v2126
      %v2196 = vpack.c.b16 %v2130, %v2127
      %v2197 = vpack.c.b16 %v2134, %v2131
      %v2198 = vpack.c.b16 %v2135, %v2132
      %v2199 = vpack.c.b16 %v2136, %v2133
      %v2200 = vpack.c.b16 %v2140, %v2137
      %v2201 = vpack.c.b16 %v2141, %v2138
      %v2202 = vpack.c.b16 %v2142, %v2139
      %v2203 = vpack.c.b16 %v2146, %v2143
      %v2204 = vpack.c.b16 %v2147, %v2144
      %v2205 = vpack.c.b16 %v2148, %v2145
      %v2206 = vpack.c.b16 %v2152, %v2149
      %v2207 = vpack.c.b16 %v2153, %v2150
      %v2208 = vpack.c.b16 %v2154, %v2151
      %v2209 = vpack.c.b16 %v2158, %v2155
      %v2210 = vpack.c.b16 %v2159, %v2156
      %v2211 = vpack.c.b16 %v2160, %v2157
      %v2212 = vpack.c.b16 %v2164, %v2161
      %v2213 = vpack.c.b16 %v2165, %v2162
      %v2214 = vpack.c.b16 %v2166, %v2163
      %v2311 = vunpack.c.l.b16 %v1959
      %v2312 = vunpack.c.l.b16 %v1960
      %v2313 = vunpack.c.l.b16 %v1961
      %v2314 = vunpack.c.l.b16 %v1962
      %v2315 = vunpack.c.l.b16 %v1963
      %v2316 = vunpack.c.l.b16 %v1964
      %v2317 = vunpack.c.l.b16 %v1965
      %v2318 = vunpack.c.l.b16 %v1966
      %v2319 = vunpack.c.l.b16 %v1967
      %v2320 = vunpack.c.l.b16 %v1968
      %v2321 = vunpack.c.l.b16 %v1969
      %v2322 = vunpack.c.l.b16 %v1970
      %v2323 = vunpack.c.l.b16 %v1971
      %v2324 = vunpack.c.l.b16 %v1972
      %v2325 = vunpack.c.l.b16 %v1973
      %v2326 = vunpack.c.l.b16 %v1974
      %v2327 = vunpack.c.l.b16 %v1975
      %v2328 = vunpack.c.l.b16 %v1976
      %v2329 = vunpack.c.l.b16 %v1977
      %v2330 = vunpack.c.l.b16 %v1978
      %v2331 = vunpack.c.l.b16 %v1979
      %v2332 = vunpack.c.l.b16 %v1980
      %v2333 = vunpack.c.l.b16 %v1981
      %v2334 = vunpack.c.l.b16 %v1982
      %v2335 = vunpack.c.l.b16 %v1983
      %v2336 = vunpack.c.l.b16 %v1984
      %v2337 = vunpack.c.l.b16 %v1985
      %v2338 = vunpack.c.l.b16 %v1986
      %v2339 = vunpack.c.l.b16 %v1987
      %v2340 = vunpack.c.l.b16 %v1988
      %v2341 = vunpack.c.l.b16 %v1989
      %v2342 = vunpack.c.l.b16 %v1990
      %v2343 = vunpack.c.l.b16 %v1991
      %v2344 = vunpack.c.l.b16 %v1992
      %v2345 = vunpack.c.l.b16 %v1993
      %v2346 = vunpack.c.l.b16 %v1994
      %v2347 = vunpack.c.l.b16 %v1995
      %v2348 = vunpack.c.l.b16 %v1996
      %v2349 = vunpack.c.l.b16 %v1997
      %v2350 = vunpack.c.l.b16 %v1998
      %v2351 = vunpack.c.l.b16 %v1999
      %v2352 = vunpack.c.l.b16 %v2000
      %v2353 = vunpack.c.l.b16 %v2001
      %v2354 = vunpack.c.l.b16 %v2002
      %v2355 = vunpack.c.l.b16 %v2003
      %v2356 = vunpack.c.l.b16 %v2004
      %v2357 = vunpack.c.l.b16 %v2005
      %v2358 = vunpack.c.l.b16 %v2006
      %v2359 = vpack.c.b16 %v2312, %v2311
      %v2360 = vpack.c.b16 %v2314, %v2313
      %v2361 = vpack.c.b16 %v2316, %v2315
      %v2362 = vpack.c.b16 %v2318, %v2317
      %v2363 = vpack.c.b16 %v2320, %v2319
      %v2364 = vpack.c.b16 %v2322, %v2321
      %v2365 = vpack.c.b16 %v2324, %v2323
      %v2366 = vpack.c.b16 %v2326, %v2325
      %v2367 = vpack.c.b16 %v2328, %v2327
      %v2368 = vpack.c.b16 %v2330, %v2329
      %v2369 = vpack.c.b16 %v2332, %v2331
      %v2370 = vpack.c.b16 %v2334, %v2333
      %v2371 = vpack.c.b16 %v2336, %v2335
      %v2372 = vpack.c.b16 %v2338, %v2337
      %v2373 = vpack.c.b16 %v2340, %v2339
      %v2374 = vpack.c.b16 %v2342, %v2341
      %v2375 = vpack.c.b16 %v2344, %v2343
      %v2376 = vpack.c.b16 %v2346, %v2345
      %v2377 = vpack.c.b16 %v2348, %v2347
      %v2378 = vpack.c.b16 %v2350, %v2349
      %v2379 = vpack.c.b16 %v2352, %v2351
      %v2380 = vpack.c.b16 %v2354, %v2353
      %v2381 = vpack.c.b16 %v2356, %v2355
      %v2382 = vpack.c.b16 %v2358, %v2357
      %2407 = vmatprep.subr.bf16.mxu0 0
      %2408 = vmatpush1.bf16.msra.mxu0 %v2359
      %2409 = vmatprep.subr.bf16.mxu0 0
      %2410 = vmatpush1.bf16.msra.mxu0 %v2360
      %2411 = vmatprep.subr.bf16.mxu0 0
      %2412 = vmatpush1.bf16.msra.mxu0 %v2361
      %2413 = vmatprep.subr.bf16.mxu0 0
      %2414 = vmatpush1.bf16.msra.mxu0 %v2362
      %2415 = vmatprep.subr.bf16.mxu0 0
      %2416 = vmatpush1.bf16.msra.mxu0 %v2363
      %2417 = vmatprep.subr.bf16.mxu0 0
      %2418 = vmatpush1.bf16.msra.mxu0 %v2364
      %2419 = vmatprep.subr.bf16.mxu0 0
      %2420 = vmatpush1.bf16.msra.mxu0 %v2365
      %2421 = vmatprep.subr.bf16.mxu0 0
      %2422 = vmatpush1.bf16.msra.mxu0 %v2366
      %2423 = vmatprep.subr.bf16.mxu0 0
      %2424 = vmatpush1.bf16.msra.mxu0 %v2367
      %2425 = vmatprep.subr.bf16.mxu0 0
      %2426 = vmatpush1.bf16.msra.mxu0 %v2368
      %2427 = vmatprep.subr.bf16.mxu0 0
      %2428 = vmatpush1.bf16.msra.mxu0 %v2369
      %2429 = vmatprep.subr.bf16.mxu0 0
      %2430 = vmatpush1.bf16.msra.mxu0 %v2370
      %2431 = vmatprep.subr.bf16.mxu0 0
      %2432 = vmatpush1.bf16.msra.mxu0 %v2371
      %2433 = vmatprep.subr.bf16.mxu0 0
      %2434 = vmatpush1.bf16.msra.mxu0 %v2372
      %2435 = vmatprep.subr.bf16.mxu0 0
      %2436 = vmatpush1.bf16.msra.mxu0 %v2373
      %2437 = vmatprep.subr.bf16.mxu0 0
      %2438 = vmatpush1.bf16.msra.mxu0 %v2374
      %2439 = vmatprep.mubr.bf16.mxu0 %v2168
      %2440 = vmatmul.mubr.bf16.gmra.mrb[0].mxu0 %v2167
      %v2441 = vpop.f32.mrb[0].mxu0
      %v2442 = vadd.f32 0.0, %v2441
      %v2443 = vpop.f32.mrb[0].mxu0
      %v2444 = vpop.f32.mrb[0].mxu0
      %v2445 = vadd.f32 0.0, %v2444
      %v2446 = vpop.f32.mrb[0].mxu0
      %2447 = vmatprep.mubr.bf16.mxu0 %v2171
      %2448 = vmatmul.mubr.bf16.gmra.mrb[0].mxu0 %v2170
      %v2449 = vpop.f32.mrb[0].mxu0
      %v2450 = vadd.f32 0.0, %v2449
      %v2451 = vpop.f32.mrb[0].mxu0
      %v2452 = vpop.f32.mrb[0].mxu0
      %v2453 = vadd.f32 0.0, %v2452
      %v2454 = vpop.f32.mrb[0].mxu0
      %2455 = vmatprep.mubr.bf16.mxu0 %v2174
      %2456 = vmatmul.mubr.bf16.gmra.mrb[0].mxu0 %v2173
      %v2457 = vpop.f32.mrb[0].mxu0
      %v2458 = vadd.f32 0.0, %v2457
      %v2459 = vpop.f32.mrb[0].mxu0
      %v2460 = vpop.f32.mrb[0].mxu0
      %v2461 = vadd.f32 0.0, %v2460
      %v2462 = vpop.f32.mrb[0].mxu0
      %2463 = vmatprep.mubr.bf16.mxu0 %v2177
      %2464 = vmatmul.mubr.bf16.gmra.mrb[0].mxu0 %v2176
      %v2465 = vpop.f32.mrb[0].mxu0
      %v2466 = vadd.f32 0.0, %v2465
      %v2467 = vpop.f32.mrb[0].mxu0
      %v2468 = vpop.f32.mrb[0].mxu0
      %v2469 = vadd.f32 0.0, %v2468
      %v2470 = vpop.f32.mrb[0].mxu0
      %2471 = vmatprep.mubr.bf16.mxu0 %v2180
      %2472 = vmatmul.mubr.bf16.gmra.mrb[0].mxu0 %v2179
      %v2473 = vpop.f32.mrb[0].mxu0
      %v2474 = vadd.f32 0.0, %v2473
      %v2475 = vpop.f32.mrb[0].mxu0
      %v2476 = vpop.f32.mrb[0].mxu0
      %v2477 = vadd.f32 0.0, %v2476
      %v2478 = vpop.f32.mrb[0].mxu0
      %2479 = vmatprep.mubr.bf16.mxu0 %v2183
      %2480 = vmatmul.mubr.bf16.gmra.mrb[0].mxu0 %v2182
      %v2481 = vpop.f32.mrb[0].mxu0
      %v2482 = vadd.f32 0.0, %v2481
      %v2483 = vpop.f32.mrb[0].mxu0
      %v2484 = vpop.f32.mrb[0].mxu0
      %v2485 = vadd.f32 0.0, %v2484
      %v2486 = vpop.f32.mrb[0].mxu0
      %2487 = vmatprep.mubr.bf16.mxu0 %v2186
      %2488 = vmatmul.mubr.bf16.gmra.mrb[0].mxu0 %v2185
      %v2489 = vpop.f32.mrb[0].mxu0
      %v2490 = vadd.f32 0.0, %v2489
      %v2491 = vpop.f32.mrb[0].mxu0
      %v2492 = vpop.f32.mrb[0].mxu0
      %v2493 = vadd.f32 0.0, %v2492
      %v2494 = vpop.f32.mrb[0].mxu0
      %2495 = vmatprep.mubr.bf16.mxu0 %v2189
      %2496 = vmatmul.mubr.bf16.gmra.mrb[0].mxu0 %v2188
      %v2497 = vpop.f32.mrb[0].mxu0
      %v2498 = vadd.f32 0.0, %v2497
      %v2499 = vpop.f32.mrb[0].mxu0
      %v2500 = vpop.f32.mrb[0].mxu0
      %v2501 = vadd.f32 0.0, %v2500
      %v2502 = vpop.f32.mrb[0].mxu0
      %2503 = vmatprep.mubr.bf16.mxu0 %v2192
      %2504 = vmatmul.mubr.bf16.gmra.mrb[0].mxu0 %v2191
      %v2505 = vpop.f32.mrb[0].mxu0
      %v2506 = vadd.f32 0.0, %v2505
      %v2507 = vpop.f32.mrb[0].mxu0
      %v2508 = vpop.f32.mrb[0].mxu0
      %v2509 = vadd.f32 0.0, %v2508
      %v2510 = vpop.f32.mrb[0].mxu0
      %2511 = vmatprep.mubr.bf16.mxu0 %v2195
      %2512 = vmatmul.mubr.bf16.gmra.mrb[0].mxu0 %v2194
      %v2513 = vpop.f32.mrb[0].mxu0
      %v2514 = vadd.f32 0.0, %v2513
      %v2515 = vpop.f32.mrb[0].mxu0
      %v2516 = vpop.f32.mrb[0].mxu0
      %v2517 = vadd.f32 0.0, %v2516
      %v2518 = vpop.f32.mrb[0].mxu0
      %2519 = vmatprep.mubr.bf16.mxu0 %v2198
      %2520 = vmatmul.mubr.bf16.gmra.mrb[0].mxu0 %v2197
      %v2521 = vpop.f32.mrb[0].mxu0
      %v2522 = vadd.f32 0.0, %v2521
      %v2523 = vpop.f32.mrb[0].mxu0
      %v2524 = vpop.f32.mrb[0].mxu0
      %v2525 = vadd.f32 0.0, %v2524
      %v2526 = vpop.f32.mrb[0].mxu0
      %2527 = vmatprep.mubr.bf16.mxu0 %v2201
      %2528 = vmatmul.mubr.bf16.gmra.mrb[0].mxu0 %v2200
      %v2529 = vpop.f32.mrb[0].mxu0
      %v2530 = vadd.f32 0.0, %v2529
      %v2531 = vpop.f32.mrb[0].mxu0
      %v2532 = vpop.f32.mrb[0].mxu0
      %v2533 = vadd.f32 0.0, %v2532
      %v2534 = vpop.f32.mrb[0].mxu0
      %2535 = vmatprep.mubr.bf16.mxu0 %v2204
      %2536 = vmatmul.mubr.bf16.gmra.mrb[0].mxu0 %v2203
      %v2537 = vpop.f32.mrb[0].mxu0
      %v2538 = vadd.f32 0.0, %v2537
      %v2539 = vpop.f32.mrb[0].mxu0
      %v2540 = vpop.f32.mrb[0].mxu0
      %v2541 = vadd.f32 0.0, %v2540
      %v2542 = vpop.f32.mrb[0].mxu0
      %2543 = vmatprep.mubr.bf16.mxu0 %v2207
      %2544 = vmatmul.mubr.bf16.gmra.mrb[0].mxu0 %v2206
      %v2545 = vpop.f32.mrb[0].mxu0
      %v2546 = vadd.f32 0.0, %v2545
      %v2547 = vpop.f32.mrb[0].mxu0
      %v2548 = vpop.f32.mrb[0].mxu0
      %v2549 = vadd.f32 0.0, %v2548
      %v2550 = vpop.f32.mrb[0].mxu0
      %2551 = vmatprep.mubr.bf16.mxu0 %v2210
      %2552 = vmatmul.mubr.bf16.gmra.mrb[0].mxu0 %v2209
      %v2553 = vpop.f32.mrb[0].mxu0
      %v2554 = vadd.f32 0.0, %v2553
      %v2555 = vpop.f32.mrb[0].mxu0
      %v2556 = vpop.f32.mrb[0].mxu0
      %v2557 = vadd.f32 0.0, %v2556
      %v2558 = vpop.f32.mrb[0].mxu0
      %2559 = vmatprep.mubr.bf16.mxu0 %v2213
      %2560 = vmatmul.mubr.bf16.gmra.mrb[0].mxu0 %v2212
      %v2561 = vpop.f32.mrb[0].mxu0
      %v2562 = vadd.f32 0.0, %v2561
      %v2563 = vpop.f32.mrb[0].mxu0
      %v2564 = vpop.f32.mrb[0].mxu0
      %v2565 = vadd.f32 0.0, %v2564
      %v2566 = vpop.f32.mrb[0].mxu0
      %2567 = vdwg.mxu0
      %2568 = vmatprep.subr.bf16.mxu0 0
      %2569 = vmatpush1.bf16.msra.mxu0 %v2375
      %2570 = vmatprep.subr.bf16.mxu0 0
      %2571 = vmatpush1.bf16.msra.mxu0 %v2376
      %2572 = vmatprep.subr.bf16.mxu0 0
      %2573 = vmatpush1.bf16.msra.mxu0 %v2377
      %2574 = vmatprep.subr.bf16.mxu0 0
      %2575 = vmatpush1.bf16.msra.mxu0 %v2378
      %2576 = vmatprep.subr.bf16.mxu0 0
      %2577 = vmatpush1.bf16.msra.mxu0 %v2379
      %2578 = vmatprep.subr.bf16.mxu0 0
      %2579 = vmatpush1.bf16.msra.mxu0 %v2380
      %2580 = vmatprep.subr.bf16.mxu0 0
      %2581 = vmatpush1.bf16.msra.mxu0 %v2381
      %2582 = vmatprep.subr.bf16.mxu0 0
      %2583 = vmatpush1.bf16.msra.mxu0 %v2382
      %2584 = vmatprep.subr.bf16.mxu0 0
      %2585 = vmatpush1.bf16.msra.mxu0 0
      %2586 = vmatprep.subr.bf16.mxu0 0
      %2587 = vmatpush1.bf16.msra.mxu0 0
      %2588 = vmatprep.subr.bf16.mxu0 0
      %2589 = vmatpush1.bf16.msra.mxu0 0
      %2590 = vmatprep.subr.bf16.mxu0 0
      %2591 = vmatpush1.bf16.msra.mxu0 0
      %2592 = vmatprep.subr.bf16.mxu0 0
      %2593 = vmatpush1.bf16.msra.mxu0 0
      %2594 = vmatprep.subr.bf16.mxu0 0
      %2595 = vmatpush1.bf16.msra.mxu0 0
      %2596 = vmatprep.subr.bf16.mxu0 0
      %2597 = vmatpush1.bf16.msra.mxu0 0
      %2598 = vmatprep.subr.bf16.mxu0 0
      %2599 = vmatpush1.bf16.msra.mxu0 0
      %2600 = vmatprep.mubr.bf16.mxu0 0
      %2601 = vmatmul.mubr.bf16.gmra.mrb[0].mxu0 %v2169
      %v2602 = vpop.f32.mrb[0].mxu0
      %v2603 = vadd.f32 %v2442, %v2602
      %v2604 = vpop.f32.mrb[0].mxu0
      %v2605 = vpop.f32.mrb[0].mxu0
      %v2606 = vadd.f32 %v2445, %v2605
      %v2607 = vpop.f32.mrb[0].mxu0
      %2608 = vmatprep.mubr.bf16.mxu0 0
      %2609 = vmatmul.mubr.bf16.gmra.mrb[0].mxu0 %v2172
      %v2610 = vpop.f32.mrb[0].mxu0
      %v2611 = vadd.f32 %v2450, %v2610
      %v2612 = vpop.f32.mrb[0].mxu0
      %v2613 = vpop.f32.mrb[0].mxu0
      %v2614 = vadd.f32 %v2453, %v2613
      %v2615 = vpop.f32.mrb[0].mxu0
      %2616 = vmatprep.mubr.bf16.mxu0 0
      %2617 = vmatmul.mubr.bf16.gmra.mrb[0].mxu0 %v2175
      %v2618 = vpop.f32.mrb[0].mxu0
      %v2619 = vadd.f32 %v2458, %v2618
      %v2620 = vpop.f32.mrb[0].mxu0
      %v2621 = vpop.f32.mrb[0].mxu0
      %v2622 = vadd.f32 %v2461, %v2621
      %v2623 = vpop.f32.mrb[0].mxu0
      %2624 = vmatprep.mubr.bf16.mxu0 0
      %2625 = vmatmul.mubr.bf16.gmra.mrb[0].mxu0 %v2178
      %v2626 = vpop.f32.mrb[0].mxu0
      %v2627 = vadd.f32 %v2466, %v2626
      %v2628 = vpop.f32.mrb[0].mxu0
      %v2629 = vpop.f32.mrb[0].mxu0
      %v2630 = vadd.f32 %v2469, %v2629
      %v2631 = vpop.f32.mrb[0].mxu0
      %2632 = vmatprep.mubr.bf16.mxu0 0
      %2633 = vmatmul.mubr.bf16.gmra.mrb[0].mxu0 %v2181
      %v2634 = vpop.f32.mrb[0].mxu0
      %v2635 = vadd.f32 %v2474, %v2634
      %v2636 = vpop.f32.mrb[0].mxu0
      %v2637 = vpop.f32.mrb[0].mxu0
      %v2638 = vadd.f32 %v2477, %v2637
      %v2639 = vpop.f32.mrb[0].mxu0
      %2640 = vmatprep.mubr.bf16.mxu0 0
      %2641 = vmatmul.mubr.bf16.gmra.mrb[0].mxu0 %v2184
      %v2642 = vpop.f32.mrb[0].mxu0
      %v2643 = vadd.f32 %v2482, %v2642
      %v2644 = vpop.f32.mrb[0].mxu0
      %v2645 = vpop.f32.mrb[0].mxu0
      %v2646 = vadd.f32 %v2485, %v2645
      %v2647 = vpop.f32.mrb[0].mxu0
      %2648 = vmatprep.mubr.bf16.mxu0 0
      %2649 = vmatmul.mubr.bf16.gmra.mrb[0].mxu0 %v2187
      %v2650 = vpop.f32.mrb[0].mxu0
      %v2651 = vadd.f32 %v2490, %v2650
      %v2652 = vpop.f32.mrb[0].mxu0
      %v2653 = vpop.f32.mrb[0].mxu0
      %v2654 = vadd.f32 %v2493, %v2653
      %v2655 = vpop.f32.mrb[0].mxu0
      %2656 = vmatprep.mubr.bf16.mxu0 0
      %2657 = vmatmul.mubr.bf16.gmra.mrb[0].mxu0 %v2190
      %v2658 = vpop.f32.mrb[0].mxu0
      %v2659 = vadd.f32 %v2498, %v2658
      %v2660 = vpop.f32.mrb[0].mxu0
      %v2661 = vpop.f32.mrb[0].mxu0
      %v2662 = vadd.f32 %v2501, %v2661
      %v2663 = vpop.f32.mrb[0].mxu0
      %2664 = vmatprep.mubr.bf16.mxu0 0
      %2665 = vmatmul.mubr.bf16.gmra.mrb[0].mxu0 %v2193
      %v2666 = vpop.f32.mrb[0].mxu0
      %v2667 = vadd.f32 %v2506, %v2666
      %v2668 = vpop.f32.mrb[0].mxu0
      %v2669 = vpop.f32.mrb[0].mxu0
      %v2670 = vadd.f32 %v2509, %v2669
      %v2671 = vpop.f32.mrb[0].mxu0
      %2672 = vmatprep.mubr.bf16.mxu0 0
      %2673 = vmatmul.mubr.bf16.gmra.mrb[0].mxu0 %v2196
      %v2674 = vpop.f32.mrb[0].mxu0
      %v2675 = vadd.f32 %v2514, %v2674
      %v2676 = vpop.f32.mrb[0].mxu0
      %v2677 = vpop.f32.mrb[0].mxu0
      %v2678 = vadd.f32 %v2517, %v2677
      %v2679 = vpop.f32.mrb[0].mxu0
      %2680 = vmatprep.mubr.bf16.mxu0 0
      %2681 = vmatmul.mubr.bf16.gmra.mrb[0].mxu0 %v2199
      %v2682 = vpop.f32.mrb[0].mxu0
      %v2683 = vadd.f32 %v2522, %v2682
      %v2684 = vpop.f32.mrb[0].mxu0
      %v2685 = vpop.f32.mrb[0].mxu0
      %v2686 = vadd.f32 %v2525, %v2685
      %v2687 = vpop.f32.mrb[0].mxu0
      %2688 = vmatprep.mubr.bf16.mxu0 0
      %2689 = vmatmul.mubr.bf16.gmra.mrb[0].mxu0 %v2202
      %v2690 = vpop.f32.mrb[0].mxu0
      %v2691 = vadd.f32 %v2530, %v2690
      %v2692 = vpop.f32.mrb[0].mxu0
      %v2693 = vpop.f32.mrb[0].mxu0
      %v2694 = vadd.f32 %v2533, %v2693
      %v2695 = vpop.f32.mrb[0].mxu0
      %2696 = vmatprep.mubr.bf16.mxu0 0
      %2697 = vmatmul.mubr.bf16.gmra.mrb[0].mxu0 %v2205
      %v2698 = vpop.f32.mrb[0].mxu0
      %v2699 = vadd.f32 %v2538, %v2698
      %v2700 = vpop.f32.mrb[0].mxu0
      %v2701 = vpop.f32.mrb[0].mxu0
      %v2702 = vadd.f32 %v2541, %v2701
      %v2703 = vpop.f32.mrb[0].mxu0
      %2704 = vmatprep.mubr.bf16.mxu0 0
      %2705 = vmatmul.mubr.bf16.gmra.mrb[0].mxu0 %v2208
      %v2706 = vpop.f32.mrb[0].mxu0
      %v2707 = vadd.f32 %v2546, %v2706
      %v2708 = vpop.f32.mrb[0].mxu0
      %v2709 = vpop.f32.mrb[0].mxu0
      %v2710 = vadd.f32 %v2549, %v2709
      %v2711 = vpop.f32.mrb[0].mxu0
      %2712 = vmatprep.mubr.bf16.mxu0 0
      %2713 = vmatmul.mubr.bf16.gmra.mrb[0].mxu0 %v2211
      %v2714 = vpop.f32.mrb[0].mxu0
      %v2715 = vadd.f32 %v2554, %v2714
      %v2716 = vpop.f32.mrb[0].mxu0
      %v2717 = vpop.f32.mrb[0].mxu0
      %v2718 = vadd.f32 %v2557, %v2717
      %v2719 = vpop.f32.mrb[0].mxu0
      %2720 = vmatprep.mubr.bf16.mxu0 0
      %2721 = vmatmul.mubr.bf16.gmra.mrb[0].mxu0 %v2214
      %v2722 = vpop.f32.mrb[0].mxu0
      %v2723 = vadd.f32 %v2562, %v2722
      %v2724 = vpop.f32.mrb[0].mxu0
      %v2725 = vpop.f32.mrb[0].mxu0
      %v2726 = vadd.f32 %v2565, %v2725
      %v2727 = vpop.f32.mrb[0].mxu0
      %2728 = vdwg.mxu0
      %v2729 = vadd.f32 %v1767, %v2603
      %v2730 = vadd.f32 %v1770, %v2606
      %v2731 = vadd.f32 %v1775, %v2611
      %v2732 = vadd.f32 %v1778, %v2614
      %v2733 = vadd.f32 %v1783, %v2619
      %v2734 = vadd.f32 %v1786, %v2622
      %v2735 = vadd.f32 %v1791, %v2627
      %v2736 = vadd.f32 %v1794, %v2630
      %v2737 = vadd.f32 %v1799, %v2635
      %v2738 = vadd.f32 %v1802, %v2638
      %v2739 = vadd.f32 %v1807, %v2643
      %v2740 = vadd.f32 %v1810, %v2646
      %v2741 = vadd.f32 %v1815, %v2651
      %v2742 = vadd.f32 %v1818, %v2654
      %v2743 = vadd.f32 %v1823, %v2659
      %v2744 = vadd.f32 %v1826, %v2662
      %v2745 = vadd.f32 %v1831, %v2667
      %v2746 = vadd.f32 %v1834, %v2670
      %v2747 = vadd.f32 %v1839, %v2675
      %v2748 = vadd.f32 %v1842, %v2678
      %v2749 = vadd.f32 %v1847, %v2683
      %v2750 = vadd.f32 %v1850, %v2686
      %v2751 = vadd.f32 %v1855, %v2691
      %v2752 = vadd.f32 %v1858, %v2694
      %v2753 = vadd.f32 %v1863, %v2699
      %v2754 = vadd.f32 %v1866, %v2702
      %v2755 = vadd.f32 %v1871, %v2707
      %v2756 = vadd.f32 %v1874, %v2710
      %v2757 = vadd.f32 %v1879, %v2715
      %v2758 = vadd.f32 %v1882, %v2718
      %v2759 = vadd.f32 %v1887, %v2723
      %v2760 = vadd.f32 %v1890, %v2726
      %v2761 = vld [vmem:[%s213] sm:$0x1]
      %v2763 = vlaneseq
      %v2764 = vshrl.u32 %v2763, 7
      %v2765 = vsub.s32 0, %v2764
      %v2766 = vrot.slane %v2761, %v2765
      %v2768 = vadd.f32 %v2729, %v2766
      %v2769 = vadd.f32 %v2730, %v2766
      %v2770 = vadd.f32 %v2731, %v2766
      %v2771 = vadd.f32 %v2732, %v2766
      %v2772 = vadd.f32 %v2733, %v2766
      %v2773 = vadd.f32 %v2734, %v2766
      %v2774 = vadd.f32 %v2735, %v2766
      %v2775 = vadd.f32 %v2736, %v2766
      %v2776 = vadd.f32 %v2737, %v2766
      %v2777 = vadd.f32 %v2738, %v2766
      %v2778 = vadd.f32 %v2739, %v2766
      %v2779 = vadd.f32 %v2740, %v2766
      %v2780 = vadd.f32 %v2741, %v2766
      %v2781 = vadd.f32 %v2742, %v2766
      %v2782 = vadd.f32 %v2743, %v2766
      %v2783 = vadd.f32 %v2744, %v2766
      %v2784 = vadd.f32 %v2745, %v2766
      %v2785 = vadd.f32 %v2746, %v2766
      %v2786 = vadd.f32 %v2747, %v2766
      %v2787 = vadd.f32 %v2748, %v2766
      %v2788 = vadd.f32 %v2749, %v2766
      %v2789 = vadd.f32 %v2750, %v2766
      %v2790 = vadd.f32 %v2751, %v2766
      %v2791 = vadd.f32 %v2752, %v2766
      %v2792 = vadd.f32 %v2753, %v2766
      %v2793 = vadd.f32 %v2754, %v2766
      %v2794 = vadd.f32 %v2755, %v2766
      %v2795 = vadd.f32 %v2756, %v2766
      %v2796 = vadd.f32 %v2757, %v2766
      %v2797 = vadd.f32 %v2758, %v2766
      %v2798 = vadd.f32 %v2759, %v2766
      %v2799 = vadd.f32 %v2760, %v2766
      %v2800 = vmax.f32 %v2768, 0.0
      %v2801 = vmax.f32 %v2769, 0.0
      %v2802 = vmax.f32 %v2770, 0.0
      %v2803 = vmax.f32 %v2771, 0.0
      %v2804 = vmax.f32 %v2772, 0.0
      %v2805 = vmax.f32 %v2773, 0.0
      %v2806 = vmax.f32 %v2774, 0.0
      %v2807 = vmax.f32 %v2775, 0.0
      %v2808 = vmax.f32 %v2776, 0.0
      %v2809 = vmax.f32 %v2777, 0.0
      %v2810 = vmax.f32 %v2778, 0.0
      %v2811 = vmax.f32 %v2779, 0.0
      %v2812 = vmax.f32 %v2780, 0.0
      %v2813 = vmax.f32 %v2781, 0.0
      %v2814 = vmax.f32 %v2782, 0.0
      %v2815 = vmax.f32 %v2783, 0.0
      %v2816 = vmax.f32 %v2784, 0.0
      %v2817 = vmax.f32 %v2785, 0.0
      %v2818 = vmax.f32 %v2786, 0.0
      %v2819 = vmax.f32 %v2787, 0.0
      %v2820 = vmax.f32 %v2788, 0.0
      %v2821 = vmax.f32 %v2789, 0.0
      %v2822 = vmax.f32 %v2790, 0.0
      %v2823 = vmax.f32 %v2791, 0.0
      %v2824 = vmax.f32 %v2792, 0.0
      %v2825 = vmax.f32 %v2793, 0.0
      %v2826 = vmax.f32 %v2794, 0.0
      %v2827 = vmax.f32 %v2795, 0.0
      %v2828 = vmax.f32 %v2796, 0.0
      %v2829 = vmax.f32 %v2797, 0.0
      %v2830 = vmax.f32 %v2798, 0.0
      %v2831 = vmax.f32 %v2799, 0.0
      %v2832 = vpack.c.bf16 %v2801, %v2800
      %v2833 = vpack.c.bf16 %v2803, %v2802
      %v2834 = vpack.c.bf16 %v2805, %v2804
      %v2835 = vpack.c.bf16 %v2807, %v2806
      %v2836 = vpack.c.bf16 %v2809, %v2808
      %v2837 = vpack.c.bf16 %v2811, %v2810
      %v2838 = vpack.c.bf16 %v2813, %v2812
      %v2839 = vpack.c.bf16 %v2815, %v2814
      %v2840 = vpack.c.bf16 %v2817, %v2816
      %v2841 = vpack.c.bf16 %v2819, %v2818
      %v2842 = vpack.c.bf16 %v2821, %v2820
      %v2843 = vpack.c.bf16 %v2823, %v2822
      %v2844 = vpack.c.bf16 %v2825, %v2824
      %v2845 = vpack.c.bf16 %v2827, %v2826
      %v2846 = vpack.c.bf16 %v2829, %v2828
      %v2847 = vpack.c.bf16 %v2831, %v2830
      %v2864 = vunpack.c.l.b16 %v2832
      %v2865 = vunpack.c.h.b16 %v2832
      %v2866 = vunpack.c.l.b16 %v2833
      %v2867 = vunpack.c.h.b16 %v2833
      %v2868 = vunpack.c.l.b16 %v2834
      %v2869 = vunpack.c.h.b16 %v2834
      %v2870 = vunpack.c.l.b16 %v2835
      %v2871 = vunpack.c.h.b16 %v2835
      %v2872 = vunpack.c.l.b16 %v2836
      %v2873 = vunpack.c.h.b16 %v2836
      %v2874 = vunpack.c.l.b16 %v2837
      %v2875 = vunpack.c.h.b16 %v2837
      %v2876 = vunpack.c.l.b16 %v2838
      %v2877 = vunpack.c.h.b16 %v2838
      %v2878 = vunpack.c.l.b16 %v2839
      %v2879 = vunpack.c.h.b16 %v2839
      %v2880 = vunpack.c.l.b16 %v2840
      %v2881 = vunpack.c.h.b16 %v2840
      %v2882 = vunpack.c.l.b16 %v2841
      %v2883 = vunpack.c.h.b16 %v2841
      %v2884 = vunpack.c.l.b16 %v2842
      %v2885 = vunpack.c.h.b16 %v2842
      %v2886 = vunpack.c.l.b16 %v2843
      %v2887 = vunpack.c.h.b16 %v2843
      %v2888 = vunpack.c.l.b16 %v2844
      %v2889 = vunpack.c.h.b16 %v2844
      %v2890 = vunpack.c.l.b16 %v2845
      %v2891 = vunpack.c.h.b16 %v2845
      %v2892 = vunpack.c.l.b16 %v2846
      %v2893 = vunpack.c.h.b16 %v2846
      %v2894 = vunpack.c.l.b16 %v2847
      %v2895 = vunpack.c.h.b16 %v2847
      %v2896 = vpack.c.b16 %v2864, %v2864
      %v2897 = vpack.c.b16 %v2865, %v2865
      %v2898 = vpack.c.b16 %v2866, %v2866
      %v2899 = vpack.c.b16 %v2867, %v2867
      %v2900 = vpack.c.b16 %v2868, %v2868
      %v2901 = vpack.c.b16 %v2869, %v2869
      %v2902 = vpack.c.b16 %v2870, %v2870
      %v2903 = vpack.c.b16 %v2871, %v2871
      %v2904 = vpack.c.b16 %v2872, %v2872
      %v2905 = vpack.c.b16 %v2873, %v2873
      %v2906 = vpack.c.b16 %v2874, %v2874
      %v2907 = vpack.c.b16 %v2875, %v2875
      %v2908 = vpack.c.b16 %v2876, %v2876
      %v2909 = vpack.c.b16 %v2877, %v2877
      %v2910 = vpack.c.b16 %v2878, %v2878
      %v2911 = vpack.c.b16 %v2879, %v2879
      %v2912 = vpack.c.b16 %v2880, %v2880
      %v2913 = vpack.c.b16 %v2881, %v2881
      %v2914 = vpack.c.b16 %v2882, %v2882
      %v2915 = vpack.c.b16 %v2883, %v2883
      %v2916 = vpack.c.b16 %v2884, %v2884
      %v2917 = vpack.c.b16 %v2885, %v2885
      %v2918 = vpack.c.b16 %v2886, %v2886
      %v2919 = vpack.c.b16 %v2887, %v2887
      %v2920 = vpack.c.b16 %v2888, %v2888
      %v2921 = vpack.c.b16 %v2889, %v2889
      %v2922 = vpack.c.b16 %v2890, %v2890
      %v2923 = vpack.c.b16 %v2891, %v2891
      %v2924 = vpack.c.b16 %v2892, %v2892
      %v2925 = vpack.c.b16 %v2893, %v2893
      %v2926 = vpack.c.b16 %v2894, %v2894
      %v2927 = vpack.c.b16 %v2895, %v2895
      %2960 = vst [vmem:[%s221] sm:$0xf] %v2896
      %2961 = vst [vmem:[%s221 + $0x4] sm:$0xf] %v2897
      %2962 = vst [vmem:[%s221 + $0x8] sm:$0xf] %v2898
      %2963 = vst [vmem:[%s221 + $0xc] sm:$0xf] %v2899
      %2964 = vst [vmem:[%s221 + $0x10] sm:$0xf] %v2900
      %2965 = vst [vmem:[%s221 + $0x14] sm:$0xf] %v2901
      %2966 = vst [vmem:[%s221 + $0x18] sm:$0xf] %v2902
      %2967 = vst [vmem:[%s221 + $0x1c] sm:$0xf] %v2903
      %2968 = vst [vmem:[%s221 + $0x20] sm:$0xf] %v2904
      %2969 = vst [vmem:[%s221 + $0x24] sm:$0xf] %v2905
      %2970 = vst [vmem:[%s221 + $0x28] sm:$0xf] %v2906
      %2971 = vst [vmem:[%s221 + $0x2c] sm:$0xf] %v2907
      %2972 = vst [vmem:[%s221 + $0x30] sm:$0xf] %v2908
      %2973 = vst [vmem:[%s221 + $0x34] sm:$0xf] %v2909
      %2974 = vst [vmem:[%s221 + $0x38] sm:$0xf] %v2910
      %2975 = vst [vmem:[%s221 + $0x3c] sm:$0xf] %v2911
      %2976 = vst [vmem:[%s221 + $0x40] sm:$0xf] %v2912
      %2977 = vst [vmem:[%s221 + $0x44] sm:$0xf] %v2913
      %2978 = vst [vmem:[%s221 + $0x48] sm:$0xf] %v2914
      %2979 = vst [vmem:[%s221 + $0x4c] sm:$0xf] %v2915
      %2980 = vst [vmem:[%s221 + $0x50] sm:$0xf] %v2916
      %2981 = vst [vmem:[%s221 + $0x54] sm:$0xf] %v2917
      %2982 = vst [vmem:[%s221 + $0x58] sm:$0xf] %v2918
      %2983 = vst [vmem:[%s221 + $0x5c] sm:$0xf] %v2919
      %2984 = vst [vmem:[%s221 + $0x60] sm:$0xf] %v2920
      %2985 = vst [vmem:[%s221 + $0x64] sm:$0xf] %v2921
      %2986 = vst [vmem:[%s221 + $0x68] sm:$0xf] %v2922
      %2987 = vst [vmem:[%s221 + $0x6c] sm:$0xf] %v2923
      %2988 = vst [vmem:[%s221 + $0x70] sm:$0xf] %v2924
      %2989 = vst [vmem:[%s221 + $0x74] sm:$0xf] %v2925
      %2990 = vst [vmem:[%s221 + $0x78] sm:$0xf] %v2926
      %2991 = vst [vmem:[%s221 + $0x7c] sm:$0xf] %v2927
      %p2992 = scmp.lt.s32.totalorder %s18, 1
      %s2993 = scalar_select %p2992, %s18, 1
      %p2994 = scmp.lt.s32.totalorder %s19, 0
      %s2995 = scalar_select %p2994, %s19, 0
      %s2996 = smul.addr %s2993, 32
      %s2997 = sadd.s32 %s2995, %s2996
      %s2998 = smul.addr %s2997, 4
      %s2999 = scalar_lea.vmem %s3, %s2998
      // Predicated region
      $region33: #{bottleneck_forward.4} parent=31 // pred_check
        %p3000 = pneg %p124
      $region34: #{bottleneck_forward.4} parent=31 // pred_check_branch
        %3002 = sbr.rel (%p3000) target = $region36
      $region35: #{bottleneck_forward.4} parent=31 // pred_region
        _
      $region36: #{bottleneck_forward.4} parent=31 // pred_fallthru
        _
    $region32: #{bottleneck_forward.4} parent=5 // pred_fallthru
      _
    %p3003 = scmp.le.s32.totalorder 2, %s9
    // Predicated region
    $region37: #{bottleneck_forward.4} parent=5 // pred_check
      %p3004 = pneg %p3003
    $region38: #{bottleneck_forward.4} parent=5 // pred_check_branch
      %3006 = sbr.rel (%p3004) target = $region40
    $region39: #{bottleneck_forward.4} parent=5 // pred_region
      %s3007 = ssub.s32 %s9, 2
      // Predicated region
      $region41: #{bottleneck_forward.4} parent=39 // pred_check
        %p3008 = pneg %p130
      $region42: #{bottleneck_forward.4} parent=39 // pred_check_branch
        %3010 = sbr.rel (%p3008) target = $region44
      $region43: #{bottleneck_forward.4} parent=39 // pred_region
        %p3011 = scmp.lt.s32.totalorder %s20, 1
        %s3012 = scalar_select %p3011, %s20, 1
        %p3013 = scmp.lt.s32.totalorder %s21, 0
        %s3014 = scalar_select %p3013, %s21, 0
        %s3015 = smul.addr %s3012, 32
        %s3016 = sadd.s32 %s3014, %s3015
        %s3017 = smul.addr %s3016, 4
        %s3018 = scalar_lea.vmem %s3, %s3017
      $region44: #{bottleneck_forward.4} parent=39 // pred_fallthru
        _
    $region40: #{bottleneck_forward.4} parent=5 // pred_fallthru
      _
  $region6: #{bottleneck_forward.4} parent=0 // loop_footer
    %s13 = sadd.s32 1, %s9
  $region7: #{bottleneck_forward.4} parent=0 // loop_footer_branch
    %8 = sbr.rel target = $region3
  $region8: #{bottleneck_forward.4} parent=0 // loop_exit
    _

</llo_original>
